<compile_context>
chip_gen: v7x
topology: tpu7x:2x2x1
jax: 0.10.0
libtpu: 0.0.40
codegen_flags: <defaults>
</compile_context>

<pallas_src>
import functools
import math

import jax
import jax.numpy as jnp
import numpy as np
from jax.experimental import pallas as pl
from jax.experimental.pallas import tpu as pltpu

MM_DTYPE = jnp.bfloat16   # MXU operand dtype; accumulation stays f32
BN_EPS = 1e-5


def _round_up(x, m):
    return (x + m - 1) // m * m


# --------------------------------------------------------------------------
# In-kernel building blocks
# --------------------------------------------------------------------------
def _conv_im2col(act, w_ref, shift, col_ref, *, K, dil, pad, relu, c, L, n_batch):
    """Conv1d ('same') + folded BN as one im2col MXU matmul on packed batches.

    act     : (c, n_batch*L) value; lane axis = n_batch segments of length L
    w_ref   : (c_out, K*c) bf16, BN scale folded in; column k*c + ch <-> w[o,ch,k]
    shift   : (c_out, 1) f32 folded conv-bias + BN shift
    col_ref : shared bf16 VMEM scratch, at least (K*c, n_batch*L)
    """
    N = n_batch * L
    if act.dtype != MM_DTYPE:
        act = act.astype(MM_DTYPE)          # cast once per layer, not per tap
    R = K * c
    for k in range(K):
        d = k * dil - pad                    # source shift of this tap
        r0 = k * c
        lw = min(max(-d, 0), L)              # per-batch left halo width
        rw = min(max(d, 0), L)               # per-batch right halo width
        if lw + rw >= L:                     # tap fully outside the sequence
            col_ref[r0:r0 + c, 0:N] = jnp.zeros((c, N), MM_DTYPE)
            continue
        # One packed copy across all batch segments (may drag neighbouring
        # batch data into the halo stripes; those stripes are zeroed below).
        dl0, dl1 = max(0, -d), N - max(0, d)
        col_ref[r0:r0 + c, dl0:dl1] = act[:, dl0 + d:dl1 + d]
        for b in range(n_batch):
            if lw > 0:
                col_ref[r0:r0 + c, b * L:b * L + lw] = jnp.zeros((c, lw), MM_DTYPE)
            if rw > 0:
                col_ref[r0:r0 + c, (b + 1) * L - rw:(b + 1) * L] = (
                    jnp.zeros((c, rw), MM_DTYPE))
    y = jnp.dot(w_ref[...], col_ref[0:R, 0:N],
                preferred_element_type=jnp.float32)
    y = y + shift                            # f32 epilogue (scale already in W)
    if relu:
        y = jnp.maximum(y, 0.0)
    return y                                 # (c_out, N) f32


def _maxpool5(y, sel_ref):
    """MaxPool1d(5,5) on a packed (C, N) value, each batch segment % 5 == 0.

    max over 5 shifted lane slices, then exact one-hot downsample matmul with
    a host-precomputed bf16 selector (pool windows never cross batch segments
    because every segment length is a multiple of 5).
    """
    N = y.shape[1]
    W = N - 4
    m = y[:, 0:W]
    for k in range(1, 5):
        m = jnp.maximum(m, y[:, k:k + W])
    out = jnp.dot(m.astype(MM_DTYPE), sel_ref[...],
                  preferred_element_type=jnp.float32)
    return out.astype(MM_DTYPE)              # exact (one-hot selection of bf16)


# --------------------------------------------------------------------------
# Fused whole-network kernel (one grid step = B_TILE batch elements)
# --------------------------------------------------------------------------
def convnet_kernel(x_ref, *refs, cfgs, shift_offs):
    n = len(cfgs)
    w_refs = refs[:n]
    shift_ref = refs[n]
    sel_a_ref = refs[n + 1]
    sel_b_ref = refs[n + 2]
    o_ref = refs[n + 3]
    col_ref = refs[n + 4]

    def conv(i, act):
        cfg = cfgs[i]
        o0 = shift_offs[i]
        shift = shift_ref[o0:o0 + cfg["c_out"], :]
        return _conv_im2col(act, w_refs[i], shift, col_ref,
                            K=cfg["K"], dil=cfg["dil"], pad=cfg["pad"],
                            relu=cfg["relu"], c=cfg["c"], L=cfg["L"],
                            n_batch=cfg["n_batch"])

    x = x_ref[...]                            # (8, B_TILE*L) bf16, packed

    # conv_features[bit]: Conv(4->nf,k11,p5)+BN, MaxPool5, ReLU (commute)
    h = _maxpool5(conv(0, x), sel_a_ref)

    # Residual block 1: project(h) + layer(h); no ReLU after the add.
    proj = conv(1, h)
    h = _maxpool5(conv(4, conv(3, conv(2, h))) + proj, sel_b_ref)

    # Residual block 2 (projection conv has dilation=2)
    proj = conv(5, h)
    out = conv(8, conv(7, conv(6, h))) + proj

    o_ref[...] = out.astype(o_ref.dtype)      # lane-dense (c_out, B_TILE*L_f)


# --------------------------------------------------------------------------
# Wrapper
# --------------------------------------------------------------------------
def _default_b_tile(B, L_f):
    divs = [d for d in range(1, B + 1) if B % d == 0]
    cands = [d for d in divs if B // d >= 2] or divs   # keep >=2 grid steps (v7x)
    for d in cands:                                    # smallest lane-dense tile
        if d * L_f >= 128:
            return d
    return cands[-1]                                   # else pack as much as possible


def _padded_tile_bytes(shape, dtype):
    shape = tuple(int(s) for s in shape)
    if len(shape) == 1:
        shape = (1,) + shape
    lead = int(np.prod(shape[:-2], dtype=np.int64)) if len(shape) > 2 else 1
    return lead * _round_up(shape[-2], 8) * _round_up(shape[-1], 128) * \
        jnp.dtype(dtype).itemsize


def convnet_forward(params, x, bit=0, b_tile=None):
    B, c0, L = x.shape
    assert L % 25 == 0, "two MaxPool1d(5,5) stages require L % 25 == 0"
    L1, L2 = L // 5, L // 25
    if b_tile is None:
        b_tile = _default_b_tile(B, L2)
    assert B % b_tile == 0
    G = B // b_tile

    layers = [
        params["features"][bit],
        params["res1"]["proj"], params["res1"]["c1"],
        params["res1"]["c2"], params["res1"]["c3"],
        params["res2"]["proj"], params["res2"]["c1"],
        params["res2"]["c2"], params["res2"]["c3"],
    ]
    Ls = [L, L1, L1, L1, L1, L2, L2, L2, L2]

    # Pack the input: zero-pad channels 4->8, cast bf16, batch-pack the lanes.
    c_pad = layers[0]["c_in_pad"]
    N0 = b_tile * L
    xk = jnp.pad(x, ((0, 0), (0, c_pad - c0), (0, 0))).astype(MM_DTYPE)
    xk = xk.reshape(G, b_tile, c_pad, L).transpose(0, 2, 1, 3).reshape(G, c_pad, N0)

    cfgs, shift_offs, shift_rows = [], [], []
    args = [xk]
    in_specs = [pl.BlockSpec((None, c_pad, N0), lambda g: (g, 0, 0))]
    off = 0
    for ly, Li in zip(layers, Ls):
        assert 2 * ly["pad"] == ly["dil"] * (ly["K"] - 1), "'same' padding expected"
        cfgs.append(dict(K=ly["K"], dil=ly["dil"], pad=ly["pad"], relu=ly["relu"],
                         c=ly["c_in_pad"], L=Li, n_batch=b_tile, c_out=ly["c_out"]))
        args.append(ly["w2"])
        in_specs.append(pl.BlockSpec(ly["w2"].shape, lambda g: (0, 0)))
        shift_offs.append(off)
        shift_rows.append(ly["shift"])
        off += ly["c_out"]

    shift_all = jnp.concatenate(shift_rows, axis=0)        # (sum_c_out, 1) f32
    args.append(shift_all)
    in_specs.append(pl.BlockSpec(shift_all.shape, lambda g: (0, 0)))

    # Host-precomputed one-hot pool selectors (bf16), constant index maps.
    def make_sel(n):
        w_ = n - 4
        return (jnp.arange(w_)[:, None] == 5 * jnp.arange(n // 5)[None, :]
                ).astype(MM_DTYPE)
    sel_a, sel_b = make_sel(b_tile * L), make_sel(b_tile * L1)
    args += [sel_a, sel_b]
    in_specs += [pl.BlockSpec(sel_a.shape, lambda g: (0, 0)),
                 pl.BlockSpec(sel_b.shape, lambda g: (0, 0))]

    c_out_f = layers[-1]["c_out"]
    N_f = b_tile * L2
    rows_max = _round_up(max(c["K"] * c["c"] for c in cfgs), 8)
    cols_max = _round_up(max(c["n_batch"] * c["L"] for c in cfgs), 128)

    # VMEM budget (double-buffered x / out blocks + resident params + scratch),
    # doubled for headroom and capped under v7x's 64 MiB physical VMEM.
    est = (2 * _padded_tile_bytes((c_pad, N0), MM_DTYPE)
           + 2 * _padded_tile_bytes((c_out_f, N_f), x.dtype)
           + sum(_padded_tile_bytes(a.shape, a.dtype) for a in args[1:])
           + _padded_tile_bytes((rows_max, cols_max), MM_DTYPE)
           + 4 * _padded_tile_bytes((max(c["c_out"] for c in cfgs), N0), jnp.float32))
    vmem_limit = int(min(max(2 * est, 32 * 2**20), 56 * 2**20))

    kernel = functools.partial(convnet_kernel, cfgs=tuple(cfgs),
                               shift_offs=tuple(shift_offs))
    out = pl.pallas_call(
        kernel,
        out_shape=jax.ShapeDtypeStruct((G, c_out_f, N_f), x.dtype),
        grid=(G,),
        in_specs=in_specs,
        out_specs=pl.BlockSpec((None, c_out_f, N_f), lambda g: (g, 0, 0)),
        scratch_shapes=[pltpu.VMEM((rows_max, cols_max), MM_DTYPE)],
        compiler_params=pltpu.CompilerParams(
            dimension_semantics=("parallel",),     # batch tiles shard across TCs
            vmem_limit_bytes=vmem_limit,
        ),
    )(*args)

    # Un-pack the lane-dense output back to (B, C, L_f).
    return out.reshape(G, c_out_f, b_tile, L2).transpose(0, 2, 1, 3) \
              .reshape(B, c_out_f, L2)


# --------------------------------------------------------------------------
# Parameter construction (deterministic, PyTorch-like, BN folded into W/shift)
# --------------------------------------------------------------------------
def make_conv_bn_params(key, c_in, c_out, k, *, pad, dil=1, relu=True, bias=True):
    k1, k2, k3, k4, k5, k6 = jax.random.split(key, 6)
    bound = 1.0 / math.sqrt(c_in * k)
    w = jax.random.uniform(k1, (c_out, c_in, k), jnp.float32, -bound, bound)
    b = (jax.random.uniform(k2, (c_out,), jnp.float32, -bound, bound)
         if bias else jnp.zeros((c_out,), jnp.float32))
    gamma = jax.random.uniform(k3, (c_out,), jnp.float32, 0.5, 1.5)
    beta = jax.random.uniform(k4, (c_out,), jnp.float32, -0.5, 0.5)
    mean = jax.random.uniform(k5, (c_out,), jnp.float32, -0.1, 0.1)
    var = jax.random.uniform(k6, (c_out,), jnp.float32, 0.5, 1.5)
    s = gamma / jnp.sqrt(var + BN_EPS)

    w_s = w * s[:, None, None]                        # fold BN scale into W
    shift = (b - mean) * s + beta

    c_in_pad = _round_up(c_in, 8)                     # 8-aligned channel rows
    w_p = jnp.pad(w_s, ((0, 0), (0, c_in_pad - c_in), (0, 0)))
    w2 = jnp.transpose(w_p, (0, 2, 1)).reshape(c_out, k * c_in_pad).astype(MM_DTYPE)
    return {
        "w2": w2,                                     # (C_out, K*C_in_pad) bf16
        "w_ref": w_s,                                 # scaled f32 OIK, for reference
        "shift": shift.reshape(c_out, 1),
        "K": k, "dil": dil, "pad": pad, "relu": relu,
        "c_in": c_in, "c_in_pad": c_in_pad, "c_out": c_out,
    }


def init_convnet_params(key, n_filters, n_genomes):
    nf = n_filters
    keys = jax.random.split(key, n_genomes + 8)
    return {
        "features": [make_conv_bn_params(keys[g], 4, nf, 11, pad=5)
                     for g in range(n_genomes)],
        "res1": {
            "c1": make_conv_bn_params(keys[n_genomes + 0], nf, nf, 3, pad=1),
            "c2": make_conv_bn_params(keys[n_genomes + 1], nf, nf, 7, pad=3),
            "c3": make_conv_bn_params(keys[n_genomes + 2], nf, 4 * nf, 3, pad=1),
            "proj": make_conv_bn_params(keys[n_genomes + 3], nf, 4 * nf, 9,
                                        pad=4, relu=False, bias=False),
        },
        "res2": {
            "c1": make_conv_bn_params(keys[n_genomes + 4], 4 * nf, 2 * nf, 3, pad=1),
            "c2": make_conv_bn_params(keys[n_genomes + 5], 2 * nf, 2 * nf, 7, pad=3),
            "c3": make_conv_bn_params(keys[n_genomes + 6], 2 * nf, 4 * nf, 3, pad=1),
            "proj": make_conv_bn_params(keys[n_genomes + 7], 4 * nf, 4 * nf, 5,
                                        pad=4, dil=2, relu=False, bias=False),
        },
    }


# --------------------------------------------------------------------------
# Pure-JAX reference (precision-matched: bf16 operands, f32 accumulation)
# --------------------------------------------------------------------------
def ref_conv_bn(x, p):
    y = jax.lax.conv_general_dilated(
        x.astype(MM_DTYPE), p["w_ref"].astype(MM_DTYPE),
        window_strides=(1,), padding=[(p["pad"], p["pad"])],
        rhs_dilation=(p["dil"],), dimension_numbers=("NCH", "OIH", "NCH"),
        preferred_element_type=jnp.float32)
    y = y + p["shift"][None]
    if p["relu"]:
        y = jnp.maximum(y, 0.0)
    return y


def ref_maxpool5(x):
    B, C, L = x.shape
    return x.reshape(B, C, L // 5, 5).max(axis=-1)


def ref_forward(params, x, bit=0):
    f = params["features"][bit]
    h = ref_maxpool5(ref_conv_bn(x, f))
    r = params["res1"]
    proj = ref_conv_bn(h, r["proj"])
    h = ref_maxpool5(
        ref_conv_bn(ref_conv_bn(ref_conv_bn(h, r["c1"]), r["c2"]), r["c3"]) + proj)
    r = params["res2"]
    proj = ref_conv_bn(h, r["proj"])
    return ref_conv_bn(ref_conv_bn(ref_conv_bn(h, r["c1"]), r["c2"]), r["c3"]) + proj


# --------------------------------------------------------------------------
if __name__ == "__main__":
    n_filters, n_genomes = 8, 2
    B, L = 8, 100          # L divisible by 25; default B_TILE=4 -> grid of 2

    key = jax.random.PRNGKey(0)
    k_x, k_p = jax.random.split(key)
    x = jax.random.normal(k_x, (B, 4, L), dtype=jnp.float32)
    params = init_convnet_params(k_p, n_filters, n_genomes)

    out = jax.block_until_ready(convnet_forward(params, x, bit=0))
    assert out.shape == (B, 4 * n_filters, L // 25), out.shape

    ref = jax.block_until_ready(ref_forward(params, x, bit=0))
    np.testing.assert_allclose(np.asarray(out), np.asarray(ref),
                               rtol=2e-2, atol=2e-2)

    print("KERNEL_OK")
</pallas_src>

<mosaic_0001>
module attributes {stable_mosaic.version = 11 : i64} {
  func.func @convnet_kernel(%arg0: i32, %arg1: memref<1x8x400xbf16, #tpu.memory_space<vmem>>, %arg2: memref<8x88xbf16, #tpu.memory_space<vmem>>, %arg3: memref<32x72xbf16, #tpu.memory_space<vmem>>, %arg4: memref<8x24xbf16, #tpu.memory_space<vmem>>, %arg5: memref<8x56xbf16, #tpu.memory_space<vmem>>, %arg6: memref<32x24xbf16, #tpu.memory_space<vmem>>, %arg7: memref<32x160xbf16, #tpu.memory_space<vmem>>, %arg8: memref<16x96xbf16, #tpu.memory_space<vmem>>, %arg9: memref<16x112xbf16, #tpu.memory_space<vmem>>, %arg10: memref<32x48xbf16, #tpu.memory_space<vmem>>, %arg11: memref<184x1xf32, #tpu.memory_space<vmem>>, %arg12: memref<396x80xbf16, #tpu.memory_space<vmem>>, %arg13: memref<76x16xbf16, #tpu.memory_space<vmem>>, %arg14: memref<1x32x16xf32, #tpu.memory_space<vmem>>, %arg15: memref<160x512xbf16, #tpu.memory_space<vmem>>) attributes {dimension_semantics = [#tpu.dimension_semantics<parallel>], iteration_bounds = array<i64: 2>, scalar_prefetch = 0 : i64, scratch_operands = 1 : i64, tpu.core_type = #tpu.core_type<tc>, window_params = [{transform_indices = @transform_0, window_bounds = array<i64: 1, 8, 400>}, {pipeline_mode = #tpu.pipeline_mode<synchronous>, transform_indices = @transform_1, window_bounds = array<i64: 8, 88>}, {pipeline_mode = #tpu.pipeline_mode<synchronous>, transform_indices = @transform_2, window_bounds = array<i64: 32, 72>}, {pipeline_mode = #tpu.pipeline_mode<synchronous>, transform_indices = @transform_3, window_bounds = array<i64: 8, 24>}, {pipeline_mode = #tpu.pipeline_mode<synchronous>, transform_indices = @transform_4, window_bounds = array<i64: 8, 56>}, {pipeline_mode = #tpu.pipeline_mode<synchronous>, transform_indices = @transform_5, window_bounds = array<i64: 32, 24>}, {pipeline_mode = #tpu.pipeline_mode<synchronous>, transform_indices = @transform_6, window_bounds = array<i64: 32, 160>}, {pipeline_mode = #tpu.pipeline_mode<synchronous>, transform_indices = @transform_7, window_bounds = array<i64: 16, 96>}, {pipeline_mode = #tpu.pipeline_mode<synchronous>, transform_indices = @transform_8, window_bounds = array<i64: 16, 112>}, {pipeline_mode = #tpu.pipeline_mode<synchronous>, transform_indices = @transform_9, window_bounds = array<i64: 32, 48>}, {pipeline_mode = #tpu.pipeline_mode<synchronous>, transform_indices = @transform_10, window_bounds = array<i64: 184, 1>}, {pipeline_mode = #tpu.pipeline_mode<synchronous>, transform_indices = @transform_11, window_bounds = array<i64: 396, 80>}, {pipeline_mode = #tpu.pipeline_mode<synchronous>, transform_indices = @transform_12, window_bounds = array<i64: 76, 16>}, {transform_indices = @transform_13, window_bounds = array<i64: 1, 32, 16>}]} {
    %c0 = arith.constant 0 : index
    %c0_0 = arith.constant 0 : index
    %c0_1 = arith.constant 0 : index
    %0 = vector.load %arg1[%c0, %c0_0, %c0_1] : memref<1x8x400xbf16, #tpu.memory_space<vmem>>, vector<1x8x400xbf16>
    %1 = vector.shape_cast %0 : vector<1x8x400xbf16> to vector<8x400xbf16>
    %c0_2 = arith.constant 0 : index
    %c0_3 = arith.constant 0 : index
    %2 = vector.load %arg11[%c0_2, %c0_3] : memref<184x1xf32, #tpu.memory_space<vmem>>, vector<8x1xf32>
    %3 = vector.extract_strided_slice %1 {offsets = [0, 0], sizes = [8, 395], strides = [1, 1]} : vector<8x400xbf16> to vector<8x395xbf16>
    %c0_4 = arith.constant 0 : index
    %c5 = arith.constant 5 : index
    %4 = vector.load %arg15[%c0_4, %c5] : memref<160x512xbf16, #tpu.memory_space<vmem>>, vector<8x395xbf16>
    tpu.vector_store %arg15[%c0_4, %c5], %3 {strides = array<i32>} : memref<160x512xbf16, #tpu.memory_space<vmem>>, vector<8x395xbf16>,
    %cst = arith.constant 0.000000e+00 : bf16
    %5 = vector.broadcast %cst : bf16 to vector<8x5xbf16>
    %c0_5 = arith.constant 0 : index
    %c0_6 = arith.constant 0 : index
    %6 = vector.load %arg15[%c0_5, %c0_6] : memref<160x512xbf16, #tpu.memory_space<vmem>>, vector<8x5xbf16>
    tpu.vector_store %arg15[%c0_5, %c0_6], %5 {strides = array<i32>} : memref<160x512xbf16, #tpu.memory_space<vmem>>, vector<8x5xbf16>,
    %cst_7 = arith.constant 0.000000e+00 : bf16
    %7 = vector.broadcast %cst_7 : bf16 to vector<8x5xbf16>
    %c0_8 = arith.constant 0 : index
    %c100 = arith.constant 100 : index
    %8 = vector.load %arg15[%c0_8, %c100] : memref<160x512xbf16, #tpu.memory_space<vmem>>, vector<8x5xbf16>
    tpu.vector_store %arg15[%c0_8, %c100], %7 {strides = array<i32>} : memref<160x512xbf16, #tpu.memory_space<vmem>>, vector<8x5xbf16>,
    %cst_9 = arith.constant 0.000000e+00 : bf16
    %9 = vector.broadcast %cst_9 : bf16 to vector<8x5xbf16>
    %c0_10 = arith.constant 0 : index
    %c200 = arith.constant 200 : index
    %10 = vector.load %arg15[%c0_10, %c200] : memref<160x512xbf16, #tpu.memory_space<vmem>>, vector<8x5xbf16>
    tpu.vector_store %arg15[%c0_10, %c200], %9 {strides = array<i32>} : memref<160x512xbf16, #tpu.memory_space<vmem>>, vector<8x5xbf16>,
    %cst_11 = arith.constant 0.000000e+00 : bf16
    %11 = vector.broadcast %cst_11 : bf16 to vector<8x5xbf16>
    %c0_12 = arith.constant 0 : index
    %c300 = arith.constant 300 : index
    %12 = vector.load %arg15[%c0_12, %c300] : memref<160x512xbf16, #tpu.memory_space<vmem>>, vector<8x5xbf16>
    tpu.vector_store %arg15[%c0_12, %c300], %11 {strides = array<i32>} : memref<160x512xbf16, #tpu.memory_space<vmem>>, vector<8x5xbf16>,
    %13 = vector.extract_strided_slice %1 {offsets = [0, 0], sizes = [8, 396], strides = [1, 1]} : vector<8x400xbf16> to vector<8x396xbf16>
    %c8 = arith.constant 8 : index
    %c4 = arith.constant 4 : index
    %14 = vector.load %arg15[%c8, %c4] : memref<160x512xbf16, #tpu.memory_space<vmem>>, vector<8x396xbf16>
    tpu.vector_store %arg15[%c8, %c4], %13 {strides = array<i32>} : memref<160x512xbf16, #tpu.memory_space<vmem>>, vector<8x396xbf16>,
    %cst_13 = arith.constant 0.000000e+00 : bf16
    %15 = vector.broadcast %cst_13 : bf16 to vector<8x4xbf16>
    %c8_14 = arith.constant 8 : index
    %c0_15 = arith.constant 0 : index
    %16 = vector.load %arg15[%c8_14, %c0_15] : memref<160x512xbf16, #tpu.memory_space<vmem>>, vector<8x4xbf16>
    tpu.vector_store %arg15[%c8_14, %c0_15], %15 {strides = array<i32>} : memref<160x512xbf16, #tpu.memory_space<vmem>>, vector<8x4xbf16>,
    %cst_16 = arith.constant 0.000000e+00 : bf16
    %17 = vector.broadcast %cst_16 : bf16 to vector<8x4xbf16>
    %c8_17 = arith.constant 8 : index
    %c100_18 = arith.constant 100 : index
    %18 = vector.load %arg15[%c8_17, %c100_18] : memref<160x512xbf16, #tpu.memory_space<vmem>>, vector<8x4xbf16>
    tpu.vector_store %arg15[%c8_17, %c100_18], %17 {strides = array<i32>} : memref<160x512xbf16, #tpu.memory_space<vmem>>, vector<8x4xbf16>,
    %cst_19 = arith.constant 0.000000e+00 : bf16
    %19 = vector.broadcast %cst_19 : bf16 to vector<8x4xbf16>
    %c8_20 = arith.constant 8 : index
    %c200_21 = arith.constant 200 : index
    %20 = vector.load %arg15[%c8_20, %c200_21] : memref<160x512xbf16, #tpu.memory_space<vmem>>, vector<8x4xbf16>
    tpu.vector_store %arg15[%c8_20, %c200_21], %19 {strides = array<i32>} : memref<160x512xbf16, #tpu.memory_space<vmem>>, vector<8x4xbf16>,
    %cst_22 = arith.constant 0.000000e+00 : bf16
    %21 = vector.broadcast %cst_22 : bf16 to vector<8x4xbf16>
    %c8_23 = arith.constant 8 : index
    %c300_24 = arith.constant 300 : index
    %22 = vector.load %arg15[%c8_23, %c300_24] : memref<160x512xbf16, #tpu.memory_space<vmem>>, vector<8x4xbf16>
    tpu.vector_store %arg15[%c8_23, %c300_24], %21 {strides = array<i32>} : memref<160x512xbf16, #tpu.memory_space<vmem>>, vector<8x4xbf16>,
    %23 = vector.extract_strided_slice %1 {offsets = [0, 0], sizes = [8, 397], strides = [1, 1]} : vector<8x400xbf16> to vector<8x397xbf16>
    %c16 = arith.constant 16 : index
    %c3 = arith.constant 3 : index
    %24 = vector.load %arg15[%c16, %c3] : memref<160x512xbf16, #tpu.memory_space<vmem>>, vector<8x397xbf16>
    tpu.vector_store %arg15[%c16, %c3], %23 {strides = array<i32>} : memref<160x512xbf16, #tpu.memory_space<vmem>>, vector<8x397xbf16>,
    %cst_25 = arith.constant 0.000000e+00 : bf16
    %25 = vector.broadcast %cst_25 : bf16 to vector<8x3xbf16>
    %c16_26 = arith.constant 16 : index
    %c0_27 = arith.constant 0 : index
    %26 = vector.load %arg15[%c16_26, %c0_27] : memref<160x512xbf16, #tpu.memory_space<vmem>>, vector<8x3xbf16>
    tpu.vector_store %arg15[%c16_26, %c0_27], %25 {strides = array<i32>} : memref<160x512xbf16, #tpu.memory_space<vmem>>, vector<8x3xbf16>,
    %cst_28 = arith.constant 0.000000e+00 : bf16
    %27 = vector.broadcast %cst_28 : bf16 to vector<8x3xbf16>
    %c16_29 = arith.constant 16 : index
    %c100_30 = arith.constant 100 : index
    %28 = vector.load %arg15[%c16_29, %c100_30] : memref<160x512xbf16, #tpu.memory_space<vmem>>, vector<8x3xbf16>
    tpu.vector_store %arg15[%c16_29, %c100_30], %27 {strides = array<i32>} : memref<160x512xbf16, #tpu.memory_space<vmem>>, vector<8x3xbf16>,
    %cst_31 = arith.constant 0.000000e+00 : bf16
    %29 = vector.broadcast %cst_31 : bf16 to vector<8x3xbf16>
    %c16_32 = arith.constant 16 : index
    %c200_33 = arith.constant 200 : index
    %30 = vector.load %arg15[%c16_32, %c200_33] : memref<160x512xbf16, #tpu.memory_space<vmem>>, vector<8x3xbf16>
    tpu.vector_store %arg15[%c16_32, %c200_33], %29 {strides = array<i32>} : memref<160x512xbf16, #tpu.memory_space<vmem>>, vector<8x3xbf16>,
    %cst_34 = arith.constant 0.000000e+00 : bf16
    %31 = vector.broadcast %cst_34 : bf16 to vector<8x3xbf16>
    %c16_35 = arith.constant 16 : index
    %c300_36 = arith.constant 300 : index
    %32 = vector.load %arg15[%c16_35, %c300_36] : memref<160x512xbf16, #tpu.memory_space<vmem>>, vector<8x3xbf16>
    tpu.vector_store %arg15[%c16_35, %c300_36], %31 {strides = array<i32>} : memref<160x512xbf16, #tpu.memory_space<vmem>>, vector<8x3xbf16>,
    %33 = vector.extract_strided_slice %1 {offsets = [0, 0], sizes = [8, 398], strides = [1, 1]} : vector<8x400xbf16> to vector<8x398xbf16>
    %c24 = arith.constant 24 : index
    %c2 = arith.constant 2 : index
    %34 = vector.load %arg15[%c24, %c2] : memref<160x512xbf16, #tpu.memory_space<vmem>>, vector<8x398xbf16>
    tpu.vector_store %arg15[%c24, %c2], %33 {strides = array<i32>} : memref<160x512xbf16, #tpu.memory_space<vmem>>, vector<8x398xbf16>,
    %cst_37 = arith.constant 0.000000e+00 : bf16
    %35 = vector.broadcast %cst_37 : bf16 to vector<8x2xbf16>
    %c24_38 = arith.constant 24 : index
    %c0_39 = arith.constant 0 : index
    %36 = vector.load %arg15[%c24_38, %c0_39] : memref<160x512xbf16, #tpu.memory_space<vmem>>, vector<8x2xbf16>
    tpu.vector_store %arg15[%c24_38, %c0_39], %35 {strides = array<i32>} : memref<160x512xbf16, #tpu.memory_space<vmem>>, vector<8x2xbf16>,
    %cst_40 = arith.constant 0.000000e+00 : bf16
    %37 = vector.broadcast %cst_40 : bf16 to vector<8x2xbf16>
    %c24_41 = arith.constant 24 : index
    %c100_42 = arith.constant 100 : index
    %38 = vector.load %arg15[%c24_41, %c100_42] : memref<160x512xbf16, #tpu.memory_space<vmem>>, vector<8x2xbf16>
    tpu.vector_store %arg15[%c24_41, %c100_42], %37 {strides = array<i32>} : memref<160x512xbf16, #tpu.memory_space<vmem>>, vector<8x2xbf16>,
    %cst_43 = arith.constant 0.000000e+00 : bf16
    %39 = vector.broadcast %cst_43 : bf16 to vector<8x2xbf16>
    %c24_44 = arith.constant 24 : index
    %c200_45 = arith.constant 200 : index
    %40 = vector.load %arg15[%c24_44, %c200_45] : memref<160x512xbf16, #tpu.memory_space<vmem>>, vector<8x2xbf16>
    tpu.vector_store %arg15[%c24_44, %c200_45], %39 {strides = array<i32>} : memref<160x512xbf16, #tpu.memory_space<vmem>>, vector<8x2xbf16>,
    %cst_46 = arith.constant 0.000000e+00 : bf16
    %41 = vector.broadcast %cst_46 : bf16 to vector<8x2xbf16>
    %c24_47 = arith.constant 24 : index
    %c300_48 = arith.constant 300 : index
    %42 = vector.load %arg15[%c24_47, %c300_48] : memref<160x512xbf16, #tpu.memory_space<vmem>>, vector<8x2xbf16>
    tpu.vector_store %arg15[%c24_47, %c300_48], %41 {strides = array<i32>} : memref<160x512xbf16, #tpu.memory_space<vmem>>, vector<8x2xbf16>,
    %43 = vector.extract_strided_slice %1 {offsets = [0, 0], sizes = [8, 399], strides = [1, 1]} : vector<8x400xbf16> to vector<8x399xbf16>
    %c32 = arith.constant 32 : index
    %c1 = arith.constant 1 : index
    %44 = vector.load %arg15[%c32, %c1] : memref<160x512xbf16, #tpu.memory_space<vmem>>, vector<8x399xbf16>
    tpu.vector_store %arg15[%c32, %c1], %43 {strides = array<i32>} : memref<160x512xbf16, #tpu.memory_space<vmem>>, vector<8x399xbf16>,
    %cst_49 = arith.constant 0.000000e+00 : bf16
    %45 = vector.broadcast %cst_49 : bf16 to vector<8x1xbf16>
    %c32_50 = arith.constant 32 : index
    %c0_51 = arith.constant 0 : index
    %46 = vector.load %arg15[%c32_50, %c0_51] : memref<160x512xbf16, #tpu.memory_space<vmem>>, vector<8x1xbf16>
    tpu.vector_store %arg15[%c32_50, %c0_51], %45 {strides = array<i32>} : memref<160x512xbf16, #tpu.memory_space<vmem>>, vector<8x1xbf16>,
    %cst_52 = arith.constant 0.000000e+00 : bf16
    %47 = vector.broadcast %cst_52 : bf16 to vector<8x1xbf16>
    %c32_53 = arith.constant 32 : index
    %c100_54 = arith.constant 100 : index
    %48 = vector.load %arg15[%c32_53, %c100_54] : memref<160x512xbf16, #tpu.memory_space<vmem>>, vector<8x1xbf16>
    tpu.vector_store %arg15[%c32_53, %c100_54], %47 {strides = array<i32>} : memref<160x512xbf16, #tpu.memory_space<vmem>>, vector<8x1xbf16>,
    %cst_55 = arith.constant 0.000000e+00 : bf16
    %49 = vector.broadcast %cst_55 : bf16 to vector<8x1xbf16>
    %c32_56 = arith.constant 32 : index
    %c200_57 = arith.constant 200 : index
    %50 = vector.load %arg15[%c32_56, %c200_57] : memref<160x512xbf16, #tpu.memory_space<vmem>>, vector<8x1xbf16>
    tpu.vector_store %arg15[%c32_56, %c200_57], %49 {strides = array<i32>} : memref<160x512xbf16, #tpu.memory_space<vmem>>, vector<8x1xbf16>,
    %cst_58 = arith.constant 0.000000e+00 : bf16
    %51 = vector.broadcast %cst_58 : bf16 to vector<8x1xbf16>
    %c32_59 = arith.constant 32 : index
    %c300_60 = arith.constant 300 : index
    %52 = vector.load %arg15[%c32_59, %c300_60] : memref<160x512xbf16, #tpu.memory_space<vmem>>, vector<8x1xbf16>
    tpu.vector_store %arg15[%c32_59, %c300_60], %51 {strides = array<i32>} : memref<160x512xbf16, #tpu.memory_space<vmem>>, vector<8x1xbf16>,
    %c40 = arith.constant 40 : index
    %c0_61 = arith.constant 0 : index
    %53 = vector.load %arg15[%c40, %c0_61] : memref<160x512xbf16, #tpu.memory_space<vmem>>, vector<8x400xbf16>
    tpu.vector_store %arg15[%c40, %c0_61], %1 {strides = array<i32>} : memref<160x512xbf16, #tpu.memory_space<vmem>>, vector<8x400xbf16>,
    %54 = vector.extract_strided_slice %1 {offsets = [0, 1], sizes = [8, 399], strides = [1, 1]} : vector<8x400xbf16> to vector<8x399xbf16>
    %c48 = arith.constant 48 : index
    %c0_62 = arith.constant 0 : index
    %55 = vector.load %arg15[%c48, %c0_62] : memref<160x512xbf16, #tpu.memory_space<vmem>>, vector<8x399xbf16>
    tpu.vector_store %arg15[%c48, %c0_62], %54 {strides = array<i32>} : memref<160x512xbf16, #tpu.memory_space<vmem>>, vector<8x399xbf16>,
    %cst_63 = arith.constant 0.000000e+00 : bf16
    %56 = vector.broadcast %cst_63 : bf16 to vector<8x1xbf16>
    %c48_64 = arith.constant 48 : index
    %c99 = arith.constant 99 : index
    %57 = vector.load %arg15[%c48_64, %c99] : memref<160x512xbf16, #tpu.memory_space<vmem>>, vector<8x1xbf16>
    tpu.vector_store %arg15[%c48_64, %c99], %56 {strides = array<i32>} : memref<160x512xbf16, #tpu.memory_space<vmem>>, vector<8x1xbf16>,
    %cst_65 = arith.constant 0.000000e+00 : bf16
    %58 = vector.broadcast %cst_65 : bf16 to vector<8x1xbf16>
    %c48_66 = arith.constant 48 : index
    %c199 = arith.constant 199 : index
    %59 = vector.load %arg15[%c48_66, %c199] : memref<160x512xbf16, #tpu.memory_space<vmem>>, vector<8x1xbf16>
    tpu.vector_store %arg15[%c48_66, %c199], %58 {strides = array<i32>} : memref<160x512xbf16, #tpu.memory_space<vmem>>, vector<8x1xbf16>,
    %cst_67 = arith.constant 0.000000e+00 : bf16
    %60 = vector.broadcast %cst_67 : bf16 to vector<8x1xbf16>
    %c48_68 = arith.constant 48 : index
    %c299 = arith.constant 299 : index
    %61 = vector.load %arg15[%c48_68, %c299] : memref<160x512xbf16, #tpu.memory_space<vmem>>, vector<8x1xbf16>
    tpu.vector_store %arg15[%c48_68, %c299], %60 {strides = array<i32>} : memref<160x512xbf16, #tpu.memory_space<vmem>>, vector<8x1xbf16>,
    %cst_69 = arith.constant 0.000000e+00 : bf16
    %62 = vector.broadcast %cst_69 : bf16 to vector<8x1xbf16>
    %c48_70 = arith.constant 48 : index
    %c399 = arith.constant 399 : index
    %63 = vector.load %arg15[%c48_70, %c399] : memref<160x512xbf16, #tpu.memory_space<vmem>>, vector<8x1xbf16>
    tpu.vector_store %arg15[%c48_70, %c399], %62 {strides = array<i32>} : memref<160x512xbf16, #tpu.memory_space<vmem>>, vector<8x1xbf16>,
    %64 = vector.extract_strided_slice %1 {offsets = [0, 2], sizes = [8, 398], strides = [1, 1]} : vector<8x400xbf16> to vector<8x398xbf16>
    %c56 = arith.constant 56 : index
    %c0_71 = arith.constant 0 : index
    %65 = vector.load %arg15[%c56, %c0_71] : memref<160x512xbf16, #tpu.memory_space<vmem>>, vector<8x398xbf16>
    tpu.vector_store %arg15[%c56, %c0_71], %64 {strides = array<i32>} : memref<160x512xbf16, #tpu.memory_space<vmem>>, vector<8x398xbf16>,
    %cst_72 = arith.constant 0.000000e+00 : bf16
    %66 = vector.broadcast %cst_72 : bf16 to vector<8x2xbf16>
    %c56_73 = arith.constant 56 : index
    %c98 = arith.constant 98 : index
    %67 = vector.load %arg15[%c56_73, %c98] : memref<160x512xbf16, #tpu.memory_space<vmem>>, vector<8x2xbf16>
    tpu.vector_store %arg15[%c56_73, %c98], %66 {strides = array<i32>} : memref<160x512xbf16, #tpu.memory_space<vmem>>, vector<8x2xbf16>,
    %cst_74 = arith.constant 0.000000e+00 : bf16
    %68 = vector.broadcast %cst_74 : bf16 to vector<8x2xbf16>
    %c56_75 = arith.constant 56 : index
    %c198 = arith.constant 198 : index
    %69 = vector.load %arg15[%c56_75, %c198] : memref<160x512xbf16, #tpu.memory_space<vmem>>, vector<8x2xbf16>
    tpu.vector_store %arg15[%c56_75, %c198], %68 {strides = array<i32>} : memref<160x512xbf16, #tpu.memory_space<vmem>>, vector<8x2xbf16>,
    %cst_76 = arith.constant 0.000000e+00 : bf16
    %70 = vector.broadcast %cst_76 : bf16 to vector<8x2xbf16>
    %c56_77 = arith.constant 56 : index
    %c298 = arith.constant 298 : index
    %71 = vector.load %arg15[%c56_77, %c298] : memref<160x512xbf16, #tpu.memory_space<vmem>>, vector<8x2xbf16>
    tpu.vector_store %arg15[%c56_77, %c298], %70 {strides = array<i32>} : memref<160x512xbf16, #tpu.memory_space<vmem>>, vector<8x2xbf16>,
    %cst_78 = arith.constant 0.000000e+00 : bf16
    %72 = vector.broadcast %cst_78 : bf16 to vector<8x2xbf16>
    %c56_79 = arith.constant 56 : index
    %c398 = arith.constant 398 : index
    %73 = vector.load %arg15[%c56_79, %c398] : memref<160x512xbf16, #tpu.memory_space<vmem>>, vector<8x2xbf16>
    tpu.vector_store %arg15[%c56_79, %c398], %72 {strides = array<i32>} : memref<160x512xbf16, #tpu.memory_space<vmem>>, vector<8x2xbf16>,
    %74 = vector.extract_strided_slice %1 {offsets = [0, 3], sizes = [8, 397], strides = [1, 1]} : vector<8x400xbf16> to vector<8x397xbf16>
    %c64 = arith.constant 64 : index
    %c0_80 = arith.constant 0 : index
    %75 = vector.load %arg15[%c64, %c0_80] : memref<160x512xbf16, #tpu.memory_space<vmem>>, vector<8x397xbf16>
    tpu.vector_store %arg15[%c64, %c0_80], %74 {strides = array<i32>} : memref<160x512xbf16, #tpu.memory_space<vmem>>, vector<8x397xbf16>,
    %cst_81 = arith.constant 0.000000e+00 : bf16
    %76 = vector.broadcast %cst_81 : bf16 to vector<8x3xbf16>
    %c64_82 = arith.constant 64 : index
    %c97 = arith.constant 97 : index
    %77 = vector.load %arg15[%c64_82, %c97] : memref<160x512xbf16, #tpu.memory_space<vmem>>, vector<8x3xbf16>
    tpu.vector_store %arg15[%c64_82, %c97], %76 {strides = array<i32>} : memref<160x512xbf16, #tpu.memory_space<vmem>>, vector<8x3xbf16>,
    %cst_83 = arith.constant 0.000000e+00 : bf16
    %78 = vector.broadcast %cst_83 : bf16 to vector<8x3xbf16>
    %c64_84 = arith.constant 64 : index
    %c197 = arith.constant 197 : index
    %79 = vector.load %arg15[%c64_84, %c197] : memref<160x512xbf16, #tpu.memory_space<vmem>>, vector<8x3xbf16>
    tpu.vector_store %arg15[%c64_84, %c197], %78 {strides = array<i32>} : memref<160x512xbf16, #tpu.memory_space<vmem>>, vector<8x3xbf16>,
    %cst_85 = arith.constant 0.000000e+00 : bf16
    %80 = vector.broadcast %cst_85 : bf16 to vector<8x3xbf16>
    %c64_86 = arith.constant 64 : index
    %c297 = arith.constant 297 : index
    %81 = vector.load %arg15[%c64_86, %c297] : memref<160x512xbf16, #tpu.memory_space<vmem>>, vector<8x3xbf16>
    tpu.vector_store %arg15[%c64_86, %c297], %80 {strides = array<i32>} : memref<160x512xbf16, #tpu.memory_space<vmem>>, vector<8x3xbf16>,
    %cst_87 = arith.constant 0.000000e+00 : bf16
    %82 = vector.broadcast %cst_87 : bf16 to vector<8x3xbf16>
    %c64_88 = arith.constant 64 : index
    %c397 = arith.constant 397 : index
    %83 = vector.load %arg15[%c64_88, %c397] : memref<160x512xbf16, #tpu.memory_space<vmem>>, vector<8x3xbf16>
    tpu.vector_store %arg15[%c64_88, %c397], %82 {strides = array<i32>} : memref<160x512xbf16, #tpu.memory_space<vmem>>, vector<8x3xbf16>,
    %84 = vector.extract_strided_slice %1 {offsets = [0, 4], sizes = [8, 396], strides = [1, 1]} : vector<8x400xbf16> to vector<8x396xbf16>
    %c72 = arith.constant 72 : index
    %c0_89 = arith.constant 0 : index
    %85 = vector.load %arg15[%c72, %c0_89] : memref<160x512xbf16, #tpu.memory_space<vmem>>, vector<8x396xbf16>
    tpu.vector_store %arg15[%c72, %c0_89], %84 {strides = array<i32>} : memref<160x512xbf16, #tpu.memory_space<vmem>>, vector<8x396xbf16>,
    %cst_90 = arith.constant 0.000000e+00 : bf16
    %86 = vector.broadcast %cst_90 : bf16 to vector<8x4xbf16>
    %c72_91 = arith.constant 72 : index
    %c96 = arith.constant 96 : index
    %87 = vector.load %arg15[%c72_91, %c96] : memref<160x512xbf16, #tpu.memory_space<vmem>>, vector<8x4xbf16>
    tpu.vector_store %arg15[%c72_91, %c96], %86 {strides = array<i32>} : memref<160x512xbf16, #tpu.memory_space<vmem>>, vector<8x4xbf16>,
    %cst_92 = arith.constant 0.000000e+00 : bf16
    %88 = vector.broadcast %cst_92 : bf16 to vector<8x4xbf16>
    %c72_93 = arith.constant 72 : index
    %c196 = arith.constant 196 : index
    %89 = vector.load %arg15[%c72_93, %c196] : memref<160x512xbf16, #tpu.memory_space<vmem>>, vector<8x4xbf16>
    tpu.vector_store %arg15[%c72_93, %c196], %88 {strides = array<i32>} : memref<160x512xbf16, #tpu.memory_space<vmem>>, vector<8x4xbf16>,
    %cst_94 = arith.constant 0.000000e+00 : bf16
    %90 = vector.broadcast %cst_94 : bf16 to vector<8x4xbf16>
    %c72_95 = arith.constant 72 : index
    %c296 = arith.constant 296 : index
    %91 = vector.load %arg15[%c72_95, %c296] : memref<160x512xbf16, #tpu.memory_space<vmem>>, vector<8x4xbf16>
    tpu.vector_store %arg15[%c72_95, %c296], %90 {strides = array<i32>} : memref<160x512xbf16, #tpu.memory_space<vmem>>, vector<8x4xbf16>,
    %cst_96 = arith.constant 0.000000e+00 : bf16
    %92 = vector.broadcast %cst_96 : bf16 to vector<8x4xbf16>
    %c72_97 = arith.constant 72 : index
    %c396 = arith.constant 396 : index
    %93 = vector.load %arg15[%c72_97, %c396] : memref<160x512xbf16, #tpu.memory_space<vmem>>, vector<8x4xbf16>
    tpu.vector_store %arg15[%c72_97, %c396], %92 {strides = array<i32>} : memref<160x512xbf16, #tpu.memory_space<vmem>>, vector<8x4xbf16>,
    %94 = vector.extract_strided_slice %1 {offsets = [0, 5], sizes = [8, 395], strides = [1, 1]} : vector<8x400xbf16> to vector<8x395xbf16>
    %c80 = arith.constant 80 : index
    %c0_98 = arith.constant 0 : index
    %95 = vector.load %arg15[%c80, %c0_98] : memref<160x512xbf16, #tpu.memory_space<vmem>>, vector<8x395xbf16>
    tpu.vector_store %arg15[%c80, %c0_98], %94 {strides = array<i32>} : memref<160x512xbf16, #tpu.memory_space<vmem>>, vector<8x395xbf16>,
    %cst_99 = arith.constant 0.000000e+00 : bf16
    %96 = vector.broadcast %cst_99 : bf16 to vector<8x5xbf16>
    %c80_100 = arith.constant 80 : index
    %c95 = arith.constant 95 : index
    %97 = vector.load %arg15[%c80_100, %c95] : memref<160x512xbf16, #tpu.memory_space<vmem>>, vector<8x5xbf16>
    tpu.vector_store %arg15[%c80_100, %c95], %96 {strides = array<i32>} : memref<160x512xbf16, #tpu.memory_space<vmem>>, vector<8x5xbf16>,
    %cst_101 = arith.constant 0.000000e+00 : bf16
    %98 = vector.broadcast %cst_101 : bf16 to vector<8x5xbf16>
    %c80_102 = arith.constant 80 : index
    %c195 = arith.constant 195 : index
    %99 = vector.load %arg15[%c80_102, %c195] : memref<160x512xbf16, #tpu.memory_space<vmem>>, vector<8x5xbf16>
    tpu.vector_store %arg15[%c80_102, %c195], %98 {strides = array<i32>} : memref<160x512xbf16, #tpu.memory_space<vmem>>, vector<8x5xbf16>,
    %cst_103 = arith.constant 0.000000e+00 : bf16
    %100 = vector.broadcast %cst_103 : bf16 to vector<8x5xbf16>
    %c80_104 = arith.constant 80 : index
    %c295 = arith.constant 295 : index
    %101 = vector.load %arg15[%c80_104, %c295] : memref<160x512xbf16, #tpu.memory_space<vmem>>, vector<8x5xbf16>
    tpu.vector_store %arg15[%c80_104, %c295], %100 {strides = array<i32>} : memref<160x512xbf16, #tpu.memory_space<vmem>>, vector<8x5xbf16>,
    %cst_105 = arith.constant 0.000000e+00 : bf16
    %102 = vector.broadcast %cst_105 : bf16 to vector<8x5xbf16>
    %c80_106 = arith.constant 80 : index
    %c395 = arith.constant 395 : index
    %103 = vector.load %arg15[%c80_106, %c395] : memref<160x512xbf16, #tpu.memory_space<vmem>>, vector<8x5xbf16>
    tpu.vector_store %arg15[%c80_106, %c395], %102 {strides = array<i32>} : memref<160x512xbf16, #tpu.memory_space<vmem>>, vector<8x5xbf16>,
    %c0_107 = arith.constant 0 : index
    %c0_108 = arith.constant 0 : index
    %104 = vector.load %arg2[%c0_107, %c0_108] : memref<8x88xbf16, #tpu.memory_space<vmem>>, vector<8x88xbf16>
    %c0_109 = arith.constant 0 : index
    %c0_110 = arith.constant 0 : index
    %105 = vector.load %arg15[%c0_109, %c0_110] : memref<160x512xbf16, #tpu.memory_space<vmem>>, vector<88x400xbf16>
    %cst_111 = arith.constant dense<0.000000e+00> : vector<8x400xf32>
    %106 = tpu.matmul %104, %105, %cst_111 {dimension_numbers = #tpu.dot_dimension_numbers<[1], [0], [0], [1], [0, 0, 1, 1], [], []>} : vector<8x88xbf16>, vector<88x400xbf16>, vector<8x400xf32> -> vector<8x400xf32>
    %107 = vector.broadcast %2 : vector<8x1xf32> to vector<8x400xf32>
    %108 = arith.addf %106, %107 : vector<8x400xf32>
    %cst_112 = arith.constant 0.000000e+00 : f32
    %109 = vector.broadcast %cst_112 : f32 to vector<8x400xf32>
    %110 = arith.maximumf %108, %109 : vector<8x400xf32>
    %111 = vector.extract_strided_slice %110 {offsets = [0, 0], sizes = [8, 396], strides = [1, 1]} : vector<8x400xf32> to vector<8x396xf32>
    %112 = vector.extract_strided_slice %110 {offsets = [0, 1], sizes = [8, 396], strides = [1, 1]} : vector<8x400xf32> to vector<8x396xf32>
    %113 = arith.maximumf %111, %112 : vector<8x396xf32>
    %114 = vector.extract_strided_slice %110 {offsets = [0, 2], sizes = [8, 396], strides = [1, 1]} : vector<8x400xf32> to vector<8x396xf32>
    %115 = arith.maximumf %113, %114 : vector<8x396xf32>
    %116 = vector.extract_strided_slice %110 {offsets = [0, 3], sizes = [8, 396], strides = [1, 1]} : vector<8x400xf32> to vector<8x396xf32>
    %117 = arith.maximumf %115, %116 : vector<8x396xf32>
    %118 = vector.extract_strided_slice %110 {offsets = [0, 4], sizes = [8, 396], strides = [1, 1]} : vector<8x400xf32> to vector<8x396xf32>
    %119 = arith.maximumf %117, %118 : vector<8x396xf32>
    %120 = arith.truncf %119 : vector<8x396xf32> to vector<8x396xbf16>
    %c0_113 = arith.constant 0 : index
    %c0_114 = arith.constant 0 : index
    %121 = vector.load %arg12[%c0_113, %c0_114] : memref<396x80xbf16, #tpu.memory_space<vmem>>, vector<396x80xbf16>
    %cst_115 = arith.constant dense<0.000000e+00> : vector<8x80xf32>
    %122 = tpu.matmul %120, %121, %cst_115 {dimension_numbers = #tpu.dot_dimension_numbers<[1], [0], [0], [1], [0, 0, 1, 1], [], []>} : vector<8x396xbf16>, vector<396x80xbf16>, vector<8x80xf32> -> vector<8x80xf32>
    %123 = arith.truncf %122 : vector<8x80xf32> to vector<8x80xbf16>
    %c8_116 = arith.constant 8 : index
    %c0_117 = arith.constant 0 : index
    %124 = vector.load %arg11[%c8_116, %c0_117] : memref<184x1xf32, #tpu.memory_space<vmem>>, vector<32x1xf32>
    %125 = vector.extract_strided_slice %123 {offsets = [0, 0], sizes = [8, 76], strides = [1, 1]} : vector<8x80xbf16> to vector<8x76xbf16>
    %c0_118 = arith.constant 0 : index
    %c4_119 = arith.constant 4 : index
    %126 = vector.load %arg15[%c0_118, %c4_119] : memref<160x512xbf16, #tpu.memory_space<vmem>>, vector<8x76xbf16>
    tpu.vector_store %arg15[%c0_118, %c4_119], %125 {strides = array<i32>} : memref<160x512xbf16, #tpu.memory_space<vmem>>, vector<8x76xbf16>,
    %cst_120 = arith.constant 0.000000e+00 : bf16
    %127 = vector.broadcast %cst_120 : bf16 to vector<8x4xbf16>
    %c0_121 = arith.constant 0 : index
    %c0_122 = arith.constant 0 : index
    %128 = vector.load %arg15[%c0_121, %c0_122] : memref<160x512xbf16, #tpu.memory_space<vmem>>, vector<8x4xbf16>
    tpu.vector_store %arg15[%c0_121, %c0_122], %127 {strides = array<i32>} : memref<160x512xbf16, #tpu.memory_space<vmem>>, vector<8x4xbf16>,
    %cst_123 = arith.constant 0.000000e+00 : bf16
    %129 = vector.broadcast %cst_123 : bf16 to vector<8x4xbf16>
    %c0_124 = arith.constant 0 : index
    %c20 = arith.constant 20 : index
    %130 = vector.load %arg15[%c0_124, %c20] : memref<160x512xbf16, #tpu.memory_space<vmem>>, vector<8x4xbf16>
    tpu.vector_store %arg15[%c0_124, %c20], %129 {strides = array<i32>} : memref<160x512xbf16, #tpu.memory_space<vmem>>, vector<8x4xbf16>,
    %cst_125 = arith.constant 0.000000e+00 : bf16
    %131 = vector.broadcast %cst_125 : bf16 to vector<8x4xbf16>
    %c0_126 = arith.constant 0 : index
    %c40_127 = arith.constant 40 : index
    %132 = vector.load %arg15[%c0_126, %c40_127] : memref<160x512xbf16, #tpu.memory_space<vmem>>, vector<8x4xbf16>
    tpu.vector_store %arg15[%c0_126, %c40_127], %131 {strides = array<i32>} : memref<160x512xbf16, #tpu.memory_space<vmem>>, vector<8x4xbf16>,
    %cst_128 = arith.constant 0.000000e+00 : bf16
    %133 = vector.broadcast %cst_128 : bf16 to vector<8x4xbf16>
    %c0_129 = arith.constant 0 : index
    %c60 = arith.constant 60 : index
    %134 = vector.load %arg15[%c0_129, %c60] : memref<160x512xbf16, #tpu.memory_space<vmem>>, vector<8x4xbf16>
    tpu.vector_store %arg15[%c0_129, %c60], %133 {strides = array<i32>} : memref<160x512xbf16, #tpu.memory_space<vmem>>, vector<8x4xbf16>,
    %135 = vector.extract_strided_slice %123 {offsets = [0, 0], sizes = [8, 77], strides = [1, 1]} : vector<8x80xbf16> to vector<8x77xbf16>
    %c8_130 = arith.constant 8 : index
    %c3_131 = arith.constant 3 : index
    %136 = vector.load %arg15[%c8_130, %c3_131] : memref<160x512xbf16, #tpu.memory_space<vmem>>, vector<8x77xbf16>
    tpu.vector_store %arg15[%c8_130, %c3_131], %135 {strides = array<i32>} : memref<160x512xbf16, #tpu.memory_space<vmem>>, vector<8x77xbf16>,
    %cst_132 = arith.constant 0.000000e+00 : bf16
    %137 = vector.broadcast %cst_132 : bf16 to vector<8x3xbf16>
    %c8_133 = arith.constant 8 : index
    %c0_134 = arith.constant 0 : index
    %138 = vector.load %arg15[%c8_133, %c0_134] : memref<160x512xbf16, #tpu.memory_space<vmem>>, vector<8x3xbf16>
    tpu.vector_store %arg15[%c8_133, %c0_134], %137 {strides = array<i32>} : memref<160x512xbf16, #tpu.memory_space<vmem>>, vector<8x3xbf16>,
    %cst_135 = arith.constant 0.000000e+00 : bf16
    %139 = vector.broadcast %cst_135 : bf16 to vector<8x3xbf16>
    %c8_136 = arith.constant 8 : index
    %c20_137 = arith.constant 20 : index
    %140 = vector.load %arg15[%c8_136, %c20_137] : memref<160x512xbf16, #tpu.memory_space<vmem>>, vector<8x3xbf16>
    tpu.vector_store %arg15[%c8_136, %c20_137], %139 {strides = array<i32>} : memref<160x512xbf16, #tpu.memory_space<vmem>>, vector<8x3xbf16>,
    %cst_138 = arith.constant 0.000000e+00 : bf16
    %141 = vector.broadcast %cst_138 : bf16 to vector<8x3xbf16>
    %c8_139 = arith.constant 8 : index
    %c40_140 = arith.constant 40 : index
    %142 = vector.load %arg15[%c8_139, %c40_140] : memref<160x512xbf16, #tpu.memory_space<vmem>>, vector<8x3xbf16>
    tpu.vector_store %arg15[%c8_139, %c40_140], %141 {strides = array<i32>} : memref<160x512xbf16, #tpu.memory_space<vmem>>, vector<8x3xbf16>,
    %cst_141 = arith.constant 0.000000e+00 : bf16
    %143 = vector.broadcast %cst_141 : bf16 to vector<8x3xbf16>
    %c8_142 = arith.constant 8 : index
    %c60_143 = arith.constant 60 : index
    %144 = vector.load %arg15[%c8_142, %c60_143] : memref<160x512xbf16, #tpu.memory_space<vmem>>, vector<8x3xbf16>
    tpu.vector_store %arg15[%c8_142, %c60_143], %143 {strides = array<i32>} : memref<160x512xbf16, #tpu.memory_space<vmem>>, vector<8x3xbf16>,
    %145 = vector.extract_strided_slice %123 {offsets = [0, 0], sizes = [8, 78], strides = [1, 1]} : vector<8x80xbf16> to vector<8x78xbf16>
    %c16_144 = arith.constant 16 : index
    %c2_145 = arith.constant 2 : index
    %146 = vector.load %arg15[%c16_144, %c2_145] : memref<160x512xbf16, #tpu.memory_space<vmem>>, vector<8x78xbf16>
    tpu.vector_store %arg15[%c16_144, %c2_145], %145 {strides = array<i32>} : memref<160x512xbf16, #tpu.memory_space<vmem>>, vector<8x78xbf16>,
    %cst_146 = arith.constant 0.000000e+00 : bf16
    %147 = vector.broadcast %cst_146 : bf16 to vector<8x2xbf16>
    %c16_147 = arith.constant 16 : index
    %c0_148 = arith.constant 0 : index
    %148 = vector.load %arg15[%c16_147, %c0_148] : memref<160x512xbf16, #tpu.memory_space<vmem>>, vector<8x2xbf16>
    tpu.vector_store %arg15[%c16_147, %c0_148], %147 {strides = array<i32>} : memref<160x512xbf16, #tpu.memory_space<vmem>>, vector<8x2xbf16>,
    %cst_149 = arith.constant 0.000000e+00 : bf16
    %149 = vector.broadcast %cst_149 : bf16 to vector<8x2xbf16>
    %c16_150 = arith.constant 16 : index
    %c20_151 = arith.constant 20 : index
    %150 = vector.load %arg15[%c16_150, %c20_151] : memref<160x512xbf16, #tpu.memory_space<vmem>>, vector<8x2xbf16>
    tpu.vector_store %arg15[%c16_150, %c20_151], %149 {strides = array<i32>} : memref<160x512xbf16, #tpu.memory_space<vmem>>, vector<8x2xbf16>,
    %cst_152 = arith.constant 0.000000e+00 : bf16
    %151 = vector.broadcast %cst_152 : bf16 to vector<8x2xbf16>
    %c16_153 = arith.constant 16 : index
    %c40_154 = arith.constant 40 : index
    %152 = vector.load %arg15[%c16_153, %c40_154] : memref<160x512xbf16, #tpu.memory_space<vmem>>, vector<8x2xbf16>
    tpu.vector_store %arg15[%c16_153, %c40_154], %151 {strides = array<i32>} : memref<160x512xbf16, #tpu.memory_space<vmem>>, vector<8x2xbf16>,
    %cst_155 = arith.constant 0.000000e+00 : bf16
    %153 = vector.broadcast %cst_155 : bf16 to vector<8x2xbf16>
    %c16_156 = arith.constant 16 : index
    %c60_157 = arith.constant 60 : index
    %154 = vector.load %arg15[%c16_156, %c60_157] : memref<160x512xbf16, #tpu.memory_space<vmem>>, vector<8x2xbf16>
    tpu.vector_store %arg15[%c16_156, %c60_157], %153 {strides = array<i32>} : memref<160x512xbf16, #tpu.memory_space<vmem>>, vector<8x2xbf16>,
    %155 = vector.extract_strided_slice %123 {offsets = [0, 0], sizes = [8, 79], strides = [1, 1]} : vector<8x80xbf16> to vector<8x79xbf16>
    %c24_158 = arith.constant 24 : index
    %c1_159 = arith.constant 1 : index
    %156 = vector.load %arg15[%c24_158, %c1_159] : memref<160x512xbf16, #tpu.memory_space<vmem>>, vector<8x79xbf16>
    tpu.vector_store %arg15[%c24_158, %c1_159], %155 {strides = array<i32>} : memref<160x512xbf16, #tpu.memory_space<vmem>>, vector<8x79xbf16>,
    %cst_160 = arith.constant 0.000000e+00 : bf16
    %157 = vector.broadcast %cst_160 : bf16 to vector<8x1xbf16>
    %c24_161 = arith.constant 24 : index
    %c0_162 = arith.constant 0 : index
    %158 = vector.load %arg15[%c24_161, %c0_162] : memref<160x512xbf16, #tpu.memory_space<vmem>>, vector<8x1xbf16>
    tpu.vector_store %arg15[%c24_161, %c0_162], %157 {strides = array<i32>} : memref<160x512xbf16, #tpu.memory_space<vmem>>, vector<8x1xbf16>,
    %cst_163 = arith.constant 0.000000e+00 : bf16
    %159 = vector.broadcast %cst_163 : bf16 to vector<8x1xbf16>
    %c24_164 = arith.constant 24 : index
    %c20_165 = arith.constant 20 : index
    %160 = vector.load %arg15[%c24_164, %c20_165] : memref<160x512xbf16, #tpu.memory_space<vmem>>, vector<8x1xbf16>
    tpu.vector_store %arg15[%c24_164, %c20_165], %159 {strides = array<i32>} : memref<160x512xbf16, #tpu.memory_space<vmem>>, vector<8x1xbf16>,
    %cst_166 = arith.constant 0.000000e+00 : bf16
    %161 = vector.broadcast %cst_166 : bf16 to vector<8x1xbf16>
    %c24_167 = arith.constant 24 : index
    %c40_168 = arith.constant 40 : index
    %162 = vector.load %arg15[%c24_167, %c40_168] : memref<160x512xbf16, #tpu.memory_space<vmem>>, vector<8x1xbf16>
    tpu.vector_store %arg15[%c24_167, %c40_168], %161 {strides = array<i32>} : memref<160x512xbf16, #tpu.memory_space<vmem>>, vector<8x1xbf16>,
    %cst_169 = arith.constant 0.000000e+00 : bf16
    %163 = vector.broadcast %cst_169 : bf16 to vector<8x1xbf16>
    %c24_170 = arith.constant 24 : index
    %c60_171 = arith.constant 60 : index
    %164 = vector.load %arg15[%c24_170, %c60_171] : memref<160x512xbf16, #tpu.memory_space<vmem>>, vector<8x1xbf16>
    tpu.vector_store %arg15[%c24_170, %c60_171], %163 {strides = array<i32>} : memref<160x512xbf16, #tpu.memory_space<vmem>>, vector<8x1xbf16>,
    %c32_172 = arith.constant 32 : index
    %c0_173 = arith.constant 0 : index
    %165 = vector.load %arg15[%c32_172, %c0_173] : memref<160x512xbf16, #tpu.memory_space<vmem>>, vector<8x80xbf16>
    tpu.vector_store %arg15[%c32_172, %c0_173], %123 {strides = array<i32>} : memref<160x512xbf16, #tpu.memory_space<vmem>>, vector<8x80xbf16>,
    %166 = vector.extract_strided_slice %123 {offsets = [0, 1], sizes = [8, 79], strides = [1, 1]} : vector<8x80xbf16> to vector<8x79xbf16>
    %c40_174 = arith.constant 40 : index
    %c0_175 = arith.constant 0 : index
    %167 = vector.load %arg15[%c40_174, %c0_175] : memref<160x512xbf16, #tpu.memory_space<vmem>>, vector<8x79xbf16>
    tpu.vector_store %arg15[%c40_174, %c0_175], %166 {strides = array<i32>} : memref<160x512xbf16, #tpu.memory_space<vmem>>, vector<8x79xbf16>,
    %cst_176 = arith.constant 0.000000e+00 : bf16
    %168 = vector.broadcast %cst_176 : bf16 to vector<8x1xbf16>
    %c40_177 = arith.constant 40 : index
    %c19 = arith.constant 19 : index
    %169 = vector.load %arg15[%c40_177, %c19] : memref<160x512xbf16, #tpu.memory_space<vmem>>, vector<8x1xbf16>
    tpu.vector_store %arg15[%c40_177, %c19], %168 {strides = array<i32>} : memref<160x512xbf16, #tpu.memory_space<vmem>>, vector<8x1xbf16>,
    %cst_178 = arith.constant 0.000000e+00 : bf16
    %170 = vector.broadcast %cst_178 : bf16 to vector<8x1xbf16>
    %c40_179 = arith.constant 40 : index
    %c39 = arith.constant 39 : index
    %171 = vector.load %arg15[%c40_179, %c39] : memref<160x512xbf16, #tpu.memory_space<vmem>>, vector<8x1xbf16>
    tpu.vector_store %arg15[%c40_179, %c39], %170 {strides = array<i32>} : memref<160x512xbf16, #tpu.memory_space<vmem>>, vector<8x1xbf16>,
    %cst_180 = arith.constant 0.000000e+00 : bf16
    %172 = vector.broadcast %cst_180 : bf16 to vector<8x1xbf16>
    %c40_181 = arith.constant 40 : index
    %c59 = arith.constant 59 : index
    %173 = vector.load %arg15[%c40_181, %c59] : memref<160x512xbf16, #tpu.memory_space<vmem>>, vector<8x1xbf16>
    tpu.vector_store %arg15[%c40_181, %c59], %172 {strides = array<i32>} : memref<160x512xbf16, #tpu.memory_space<vmem>>, vector<8x1xbf16>,
    %cst_182 = arith.constant 0.000000e+00 : bf16
    %174 = vector.broadcast %cst_182 : bf16 to vector<8x1xbf16>
    %c40_183 = arith.constant 40 : index
    %c79 = arith.constant 79 : index
    %175 = vector.load %arg15[%c40_183, %c79] : memref<160x512xbf16, #tpu.memory_space<vmem>>, vector<8x1xbf16>
    tpu.vector_store %arg15[%c40_183, %c79], %174 {strides = array<i32>} : memref<160x512xbf16, #tpu.memory_space<vmem>>, vector<8x1xbf16>,
    %176 = vector.extract_strided_slice %123 {offsets = [0, 2], sizes = [8, 78], strides = [1, 1]} : vector<8x80xbf16> to vector<8x78xbf16>
    %c48_184 = arith.constant 48 : index
    %c0_185 = arith.constant 0 : index
    %177 = vector.load %arg15[%c48_184, %c0_185] : memref<160x512xbf16, #tpu.memory_space<vmem>>, vector<8x78xbf16>
    tpu.vector_store %arg15[%c48_184, %c0_185], %176 {strides = array<i32>} : memref<160x512xbf16, #tpu.memory_space<vmem>>, vector<8x78xbf16>,
    %cst_186 = arith.constant 0.000000e+00 : bf16
    %178 = vector.broadcast %cst_186 : bf16 to vector<8x2xbf16>
    %c48_187 = arith.constant 48 : index
    %c18 = arith.constant 18 : index
    %179 = vector.load %arg15[%c48_187, %c18] : memref<160x512xbf16, #tpu.memory_space<vmem>>, vector<8x2xbf16>
    tpu.vector_store %arg15[%c48_187, %c18], %178 {strides = array<i32>} : memref<160x512xbf16, #tpu.memory_space<vmem>>, vector<8x2xbf16>,
    %cst_188 = arith.constant 0.000000e+00 : bf16
    %180 = vector.broadcast %cst_188 : bf16 to vector<8x2xbf16>
    %c48_189 = arith.constant 48 : index
    %c38 = arith.constant 38 : index
    %181 = vector.load %arg15[%c48_189, %c38] : memref<160x512xbf16, #tpu.memory_space<vmem>>, vector<8x2xbf16>
    tpu.vector_store %arg15[%c48_189, %c38], %180 {strides = array<i32>} : memref<160x512xbf16, #tpu.memory_space<vmem>>, vector<8x2xbf16>,
    %cst_190 = arith.constant 0.000000e+00 : bf16
    %182 = vector.broadcast %cst_190 : bf16 to vector<8x2xbf16>
    %c48_191 = arith.constant 48 : index
    %c58 = arith.constant 58 : index
    %183 = vector.load %arg15[%c48_191, %c58] : memref<160x512xbf16, #tpu.memory_space<vmem>>, vector<8x2xbf16>
    tpu.vector_store %arg15[%c48_191, %c58], %182 {strides = array<i32>} : memref<160x512xbf16, #tpu.memory_space<vmem>>, vector<8x2xbf16>,
    %cst_192 = arith.constant 0.000000e+00 : bf16
    %184 = vector.broadcast %cst_192 : bf16 to vector<8x2xbf16>
    %c48_193 = arith.constant 48 : index
    %c78 = arith.constant 78 : index
    %185 = vector.load %arg15[%c48_193, %c78] : memref<160x512xbf16, #tpu.memory_space<vmem>>, vector<8x2xbf16>
    tpu.vector_store %arg15[%c48_193, %c78], %184 {strides = array<i32>} : memref<160x512xbf16, #tpu.memory_space<vmem>>, vector<8x2xbf16>,
    %186 = vector.extract_strided_slice %123 {offsets = [0, 3], sizes = [8, 77], strides = [1, 1]} : vector<8x80xbf16> to vector<8x77xbf16>
    %c56_194 = arith.constant 56 : index
    %c0_195 = arith.constant 0 : index
    %187 = vector.load %arg15[%c56_194, %c0_195] : memref<160x512xbf16, #tpu.memory_space<vmem>>, vector<8x77xbf16>
    tpu.vector_store %arg15[%c56_194, %c0_195], %186 {strides = array<i32>} : memref<160x512xbf16, #tpu.memory_space<vmem>>, vector<8x77xbf16>,
    %cst_196 = arith.constant 0.000000e+00 : bf16
    %188 = vector.broadcast %cst_196 : bf16 to vector<8x3xbf16>
    %c56_197 = arith.constant 56 : index
    %c17 = arith.constant 17 : index
    %189 = vector.load %arg15[%c56_197, %c17] : memref<160x512xbf16, #tpu.memory_space<vmem>>, vector<8x3xbf16>
    tpu.vector_store %arg15[%c56_197, %c17], %188 {strides = array<i32>} : memref<160x512xbf16, #tpu.memory_space<vmem>>, vector<8x3xbf16>,
    %cst_198 = arith.constant 0.000000e+00 : bf16
    %190 = vector.broadcast %cst_198 : bf16 to vector<8x3xbf16>
    %c56_199 = arith.constant 56 : index
    %c37 = arith.constant 37 : index
    %191 = vector.load %arg15[%c56_199, %c37] : memref<160x512xbf16, #tpu.memory_space<vmem>>, vector<8x3xbf16>
    tpu.vector_store %arg15[%c56_199, %c37], %190 {strides = array<i32>} : memref<160x512xbf16, #tpu.memory_space<vmem>>, vector<8x3xbf16>,
    %cst_200 = arith.constant 0.000000e+00 : bf16
    %192 = vector.broadcast %cst_200 : bf16 to vector<8x3xbf16>
    %c56_201 = arith.constant 56 : index
    %c57 = arith.constant 57 : index
    %193 = vector.load %arg15[%c56_201, %c57] : memref<160x512xbf16, #tpu.memory_space<vmem>>, vector<8x3xbf16>
    tpu.vector_store %arg15[%c56_201, %c57], %192 {strides = array<i32>} : memref<160x512xbf16, #tpu.memory_space<vmem>>, vector<8x3xbf16>,
    %cst_202 = arith.constant 0.000000e+00 : bf16
    %194 = vector.broadcast %cst_202 : bf16 to vector<8x3xbf16>
    %c56_203 = arith.constant 56 : index
    %c77 = arith.constant 77 : index
    %195 = vector.load %arg15[%c56_203, %c77] : memref<160x512xbf16, #tpu.memory_space<vmem>>, vector<8x3xbf16>
    tpu.vector_store %arg15[%c56_203, %c77], %194 {strides = array<i32>} : memref<160x512xbf16, #tpu.memory_space<vmem>>, vector<8x3xbf16>,
    %196 = vector.extract_strided_slice %123 {offsets = [0, 4], sizes = [8, 76], strides = [1, 1]} : vector<8x80xbf16> to vector<8x76xbf16>
    %c64_204 = arith.constant 64 : index
    %c0_205 = arith.constant 0 : index
    %197 = vector.load %arg15[%c64_204, %c0_205] : memref<160x512xbf16, #tpu.memory_space<vmem>>, vector<8x76xbf16>
    tpu.vector_store %arg15[%c64_204, %c0_205], %196 {strides = array<i32>} : memref<160x512xbf16, #tpu.memory_space<vmem>>, vector<8x76xbf16>,
    %cst_206 = arith.constant 0.000000e+00 : bf16
    %198 = vector.broadcast %cst_206 : bf16 to vector<8x4xbf16>
    %c64_207 = arith.constant 64 : index
    %c16_208 = arith.constant 16 : index
    %199 = vector.load %arg15[%c64_207, %c16_208] : memref<160x512xbf16, #tpu.memory_space<vmem>>, vector<8x4xbf16>
    tpu.vector_store %arg15[%c64_207, %c16_208], %198 {strides = array<i32>} : memref<160x512xbf16, #tpu.memory_space<vmem>>, vector<8x4xbf16>,
    %cst_209 = arith.constant 0.000000e+00 : bf16
    %200 = vector.broadcast %cst_209 : bf16 to vector<8x4xbf16>
    %c64_210 = arith.constant 64 : index
    %c36 = arith.constant 36 : index
    %201 = vector.load %arg15[%c64_210, %c36] : memref<160x512xbf16, #tpu.memory_space<vmem>>, vector<8x4xbf16>
    tpu.vector_store %arg15[%c64_210, %c36], %200 {strides = array<i32>} : memref<160x512xbf16, #tpu.memory_space<vmem>>, vector<8x4xbf16>,
    %cst_211 = arith.constant 0.000000e+00 : bf16
    %202 = vector.broadcast %cst_211 : bf16 to vector<8x4xbf16>
    %c64_212 = arith.constant 64 : index
    %c56_213 = arith.constant 56 : index
    %203 = vector.load %arg15[%c64_212, %c56_213] : memref<160x512xbf16, #tpu.memory_space<vmem>>, vector<8x4xbf16>
    tpu.vector_store %arg15[%c64_212, %c56_213], %202 {strides = array<i32>} : memref<160x512xbf16, #tpu.memory_space<vmem>>, vector<8x4xbf16>,
    %cst_214 = arith.constant 0.000000e+00 : bf16
    %204 = vector.broadcast %cst_214 : bf16 to vector<8x4xbf16>
    %c64_215 = arith.constant 64 : index
    %c76 = arith.constant 76 : index
    %205 = vector.load %arg15[%c64_215, %c76] : memref<160x512xbf16, #tpu.memory_space<vmem>>, vector<8x4xbf16>
    tpu.vector_store %arg15[%c64_215, %c76], %204 {strides = array<i32>} : memref<160x512xbf16, #tpu.memory_space<vmem>>, vector<8x4xbf16>,
    %c0_216 = arith.constant 0 : index
    %c0_217 = arith.constant 0 : index
    %206 = vector.load %arg3[%c0_216, %c0_217] : memref<32x72xbf16, #tpu.memory_space<vmem>>, vector<32x72xbf16>
    %c0_218 = arith.constant 0 : index
    %c0_219 = arith.constant 0 : index
    %207 = vector.load %arg15[%c0_218, %c0_219] : memref<160x512xbf16, #tpu.memory_space<vmem>>, vector<72x80xbf16>
    %cst_220 = arith.constant dense<0.000000e+00> : vector<32x80xf32>
    %208 = tpu.matmul %206, %207, %cst_220 {dimension_numbers = #tpu.dot_dimension_numbers<[1], [0], [0], [1], [0, 0, 1, 1], [], []>} : vector<32x72xbf16>, vector<72x80xbf16>, vector<32x80xf32> -> vector<32x80xf32>
    %209 = vector.broadcast %124 : vector<32x1xf32> to vector<32x80xf32>
    %210 = arith.addf %208, %209 : vector<32x80xf32>
    %c40_221 = arith.constant 40 : index
    %c0_222 = arith.constant 0 : index
    %211 = vector.load %arg11[%c40_221, %c0_222] : memref<184x1xf32, #tpu.memory_space<vmem>>, vector<8x1xf32>
    %212 = vector.extract_strided_slice %123 {offsets = [0, 0], sizes = [8, 79], strides = [1, 1]} : vector<8x80xbf16> to vector<8x79xbf16>
    %c0_223 = arith.constant 0 : index
    %c1_224 = arith.constant 1 : index
    %213 = vector.load %arg15[%c0_223, %c1_224] : memref<160x512xbf16, #tpu.memory_space<vmem>>, vector<8x79xbf16>
    tpu.vector_store %arg15[%c0_223, %c1_224], %212 {strides = array<i32>} : memref<160x512xbf16, #tpu.memory_space<vmem>>, vector<8x79xbf16>,
    %cst_225 = arith.constant 0.000000e+00 : bf16
    %214 = vector.broadcast %cst_225 : bf16 to vector<8x1xbf16>
    %c0_226 = arith.constant 0 : index
    %c0_227 = arith.constant 0 : index
    %215 = vector.load %arg15[%c0_226, %c0_227] : memref<160x512xbf16, #tpu.memory_space<vmem>>, vector<8x1xbf16>
    tpu.vector_store %arg15[%c0_226, %c0_227], %214 {strides = array<i32>} : memref<160x512xbf16, #tpu.memory_space<vmem>>, vector<8x1xbf16>,
    %cst_228 = arith.constant 0.000000e+00 : bf16
    %216 = vector.broadcast %cst_228 : bf16 to vector<8x1xbf16>
    %c0_229 = arith.constant 0 : index
    %c20_230 = arith.constant 20 : index
    %217 = vector.load %arg15[%c0_229, %c20_230] : memref<160x512xbf16, #tpu.memory_space<vmem>>, vector<8x1xbf16>
    tpu.vector_store %arg15[%c0_229, %c20_230], %216 {strides = array<i32>} : memref<160x512xbf16, #tpu.memory_space<vmem>>, vector<8x1xbf16>,
    %cst_231 = arith.constant 0.000000e+00 : bf16
    %218 = vector.broadcast %cst_231 : bf16 to vector<8x1xbf16>
    %c0_232 = arith.constant 0 : index
    %c40_233 = arith.constant 40 : index
    %219 = vector.load %arg15[%c0_232, %c40_233] : memref<160x512xbf16, #tpu.memory_space<vmem>>, vector<8x1xbf16>
    tpu.vector_store %arg15[%c0_232, %c40_233], %218 {strides = array<i32>} : memref<160x512xbf16, #tpu.memory_space<vmem>>, vector<8x1xbf16>,
    %cst_234 = arith.constant 0.000000e+00 : bf16
    %220 = vector.broadcast %cst_234 : bf16 to vector<8x1xbf16>
    %c0_235 = arith.constant 0 : index
    %c60_236 = arith.constant 60 : index
    %221 = vector.load %arg15[%c0_235, %c60_236] : memref<160x512xbf16, #tpu.memory_space<vmem>>, vector<8x1xbf16>
    tpu.vector_store %arg15[%c0_235, %c60_236], %220 {strides = array<i32>} : memref<160x512xbf16, #tpu.memory_space<vmem>>, vector<8x1xbf16>,
    %c8_237 = arith.constant 8 : index
    %c0_238 = arith.constant 0 : index
    %222 = vector.load %arg15[%c8_237, %c0_238] : memref<160x512xbf16, #tpu.memory_space<vmem>>, vector<8x80xbf16>
    tpu.vector_store %arg15[%c8_237, %c0_238], %123 {strides = array<i32>} : memref<160x512xbf16, #tpu.memory_space<vmem>>, vector<8x80xbf16>,
    %223 = vector.extract_strided_slice %123 {offsets = [0, 1], sizes = [8, 79], strides = [1, 1]} : vector<8x80xbf16> to vector<8x79xbf16>
    %c16_239 = arith.constant 16 : index
    %c0_240 = arith.constant 0 : index
    %224 = vector.load %arg15[%c16_239, %c0_240] : memref<160x512xbf16, #tpu.memory_space<vmem>>, vector<8x79xbf16>
    tpu.vector_store %arg15[%c16_239, %c0_240], %223 {strides = array<i32>} : memref<160x512xbf16, #tpu.memory_space<vmem>>, vector<8x79xbf16>,
    %cst_241 = arith.constant 0.000000e+00 : bf16
    %225 = vector.broadcast %cst_241 : bf16 to vector<8x1xbf16>
    %c16_242 = arith.constant 16 : index
    %c19_243 = arith.constant 19 : index
    %226 = vector.load %arg15[%c16_242, %c19_243] : memref<160x512xbf16, #tpu.memory_space<vmem>>, vector<8x1xbf16>
    tpu.vector_store %arg15[%c16_242, %c19_243], %225 {strides = array<i32>} : memref<160x512xbf16, #tpu.memory_space<vmem>>, vector<8x1xbf16>,
    %cst_244 = arith.constant 0.000000e+00 : bf16
    %227 = vector.broadcast %cst_244 : bf16 to vector<8x1xbf16>
    %c16_245 = arith.constant 16 : index
    %c39_246 = arith.constant 39 : index
    %228 = vector.load %arg15[%c16_245, %c39_246] : memref<160x512xbf16, #tpu.memory_space<vmem>>, vector<8x1xbf16>
    tpu.vector_store %arg15[%c16_245, %c39_246], %227 {strides = array<i32>} : memref<160x512xbf16, #tpu.memory_space<vmem>>, vector<8x1xbf16>,
    %cst_247 = arith.constant 0.000000e+00 : bf16
    %229 = vector.broadcast %cst_247 : bf16 to vector<8x1xbf16>
    %c16_248 = arith.constant 16 : index
    %c59_249 = arith.constant 59 : index
    %230 = vector.load %arg15[%c16_248, %c59_249] : memref<160x512xbf16, #tpu.memory_space<vmem>>, vector<8x1xbf16>
    tpu.vector_store %arg15[%c16_248, %c59_249], %229 {strides = array<i32>} : memref<160x512xbf16, #tpu.memory_space<vmem>>, vector<8x1xbf16>,
    %cst_250 = arith.constant 0.000000e+00 : bf16
    %231 = vector.broadcast %cst_250 : bf16 to vector<8x1xbf16>
    %c16_251 = arith.constant 16 : index
    %c79_252 = arith.constant 79 : index
    %232 = vector.load %arg15[%c16_251, %c79_252] : memref<160x512xbf16, #tpu.memory_space<vmem>>, vector<8x1xbf16>
    tpu.vector_store %arg15[%c16_251, %c79_252], %231 {strides = array<i32>} : memref<160x512xbf16, #tpu.memory_space<vmem>>, vector<8x1xbf16>,
    %c0_253 = arith.constant 0 : index
    %c0_254 = arith.constant 0 : index
    %233 = vector.load %arg4[%c0_253, %c0_254] : memref<8x24xbf16, #tpu.memory_space<vmem>>, vector<8x24xbf16>
    %c0_255 = arith.constant 0 : index
    %c0_256 = arith.constant 0 : index
    %234 = vector.load %arg15[%c0_255, %c0_256] : memref<160x512xbf16, #tpu.memory_space<vmem>>, vector<24x80xbf16>
    %cst_257 = arith.constant dense<0.000000e+00> : vector<8x80xf32>
    %235 = tpu.matmul %233, %234, %cst_257 {dimension_numbers = #tpu.dot_dimension_numbers<[1], [0], [0], [1], [0, 0, 1, 1], [], []>} : vector<8x24xbf16>, vector<24x80xbf16>, vector<8x80xf32> -> vector<8x80xf32>
    %236 = vector.broadcast %211 : vector<8x1xf32> to vector<8x80xf32>
    %237 = arith.addf %235, %236 : vector<8x80xf32>
    %cst_258 = arith.constant 0.000000e+00 : f32
    %238 = vector.broadcast %cst_258 : f32 to vector<8x80xf32>
    %239 = arith.maximumf %237, %238 : vector<8x80xf32>
    %c48_259 = arith.constant 48 : index
    %c0_260 = arith.constant 0 : index
    %240 = vector.load %arg11[%c48_259, %c0_260] : memref<184x1xf32, #tpu.memory_space<vmem>>, vector<8x1xf32>
    %241 = arith.truncf %239 : vector<8x80xf32> to vector<8x80xbf16>
    %242 = vector.extract_strided_slice %241 {offsets = [0, 0], sizes = [8, 77], strides = [1, 1]} : vector<8x80xbf16> to vector<8x77xbf16>
    %c0_261 = arith.constant 0 : index
    %c3_262 = arith.constant 3 : index
    %243 = vector.load %arg15[%c0_261, %c3_262] : memref<160x512xbf16, #tpu.memory_space<vmem>>, vector<8x77xbf16>
    tpu.vector_store %arg15[%c0_261, %c3_262], %242 {strides = array<i32>} : memref<160x512xbf16, #tpu.memory_space<vmem>>, vector<8x77xbf16>,
    %cst_263 = arith.constant 0.000000e+00 : bf16
    %244 = vector.broadcast %cst_263 : bf16 to vector<8x3xbf16>
    %c0_264 = arith.constant 0 : index
    %c0_265 = arith.constant 0 : index
    %245 = vector.load %arg15[%c0_264, %c0_265] : memref<160x512xbf16, #tpu.memory_space<vmem>>, vector<8x3xbf16>
    tpu.vector_store %arg15[%c0_264, %c0_265], %244 {strides = array<i32>} : memref<160x512xbf16, #tpu.memory_space<vmem>>, vector<8x3xbf16>,
    %cst_266 = arith.constant 0.000000e+00 : bf16
    %246 = vector.broadcast %cst_266 : bf16 to vector<8x3xbf16>
    %c0_267 = arith.constant 0 : index
    %c20_268 = arith.constant 20 : index
    %247 = vector.load %arg15[%c0_267, %c20_268] : memref<160x512xbf16, #tpu.memory_space<vmem>>, vector<8x3xbf16>
    tpu.vector_store %arg15[%c0_267, %c20_268], %246 {strides = array<i32>} : memref<160x512xbf16, #tpu.memory_space<vmem>>, vector<8x3xbf16>,
    %cst_269 = arith.constant 0.000000e+00 : bf16
    %248 = vector.broadcast %cst_269 : bf16 to vector<8x3xbf16>
    %c0_270 = arith.constant 0 : index
    %c40_271 = arith.constant 40 : index
    %249 = vector.load %arg15[%c0_270, %c40_271] : memref<160x512xbf16, #tpu.memory_space<vmem>>, vector<8x3xbf16>
    tpu.vector_store %arg15[%c0_270, %c40_271], %248 {strides = array<i32>} : memref<160x512xbf16, #tpu.memory_space<vmem>>, vector<8x3xbf16>,
    %cst_272 = arith.constant 0.000000e+00 : bf16
    %250 = vector.broadcast %cst_272 : bf16 to vector<8x3xbf16>
    %c0_273 = arith.constant 0 : index
    %c60_274 = arith.constant 60 : index
    %251 = vector.load %arg15[%c0_273, %c60_274] : memref<160x512xbf16, #tpu.memory_space<vmem>>, vector<8x3xbf16>
    tpu.vector_store %arg15[%c0_273, %c60_274], %250 {strides = array<i32>} : memref<160x512xbf16, #tpu.memory_space<vmem>>, vector<8x3xbf16>,
    %252 = vector.extract_strided_slice %241 {offsets = [0, 0], sizes = [8, 78], strides = [1, 1]} : vector<8x80xbf16> to vector<8x78xbf16>
    %c8_275 = arith.constant 8 : index
    %c2_276 = arith.constant 2 : index
    %253 = vector.load %arg15[%c8_275, %c2_276] : memref<160x512xbf16, #tpu.memory_space<vmem>>, vector<8x78xbf16>
    tpu.vector_store %arg15[%c8_275, %c2_276], %252 {strides = array<i32>} : memref<160x512xbf16, #tpu.memory_space<vmem>>, vector<8x78xbf16>,
    %cst_277 = arith.constant 0.000000e+00 : bf16
    %254 = vector.broadcast %cst_277 : bf16 to vector<8x2xbf16>
    %c8_278 = arith.constant 8 : index
    %c0_279 = arith.constant 0 : index
    %255 = vector.load %arg15[%c8_278, %c0_279] : memref<160x512xbf16, #tpu.memory_space<vmem>>, vector<8x2xbf16>
    tpu.vector_store %arg15[%c8_278, %c0_279], %254 {strides = array<i32>} : memref<160x512xbf16, #tpu.memory_space<vmem>>, vector<8x2xbf16>,
    %cst_280 = arith.constant 0.000000e+00 : bf16
    %256 = vector.broadcast %cst_280 : bf16 to vector<8x2xbf16>
    %c8_281 = arith.constant 8 : index
    %c20_282 = arith.constant 20 : index
    %257 = vector.load %arg15[%c8_281, %c20_282] : memref<160x512xbf16, #tpu.memory_space<vmem>>, vector<8x2xbf16>
    tpu.vector_store %arg15[%c8_281, %c20_282], %256 {strides = array<i32>} : memref<160x512xbf16, #tpu.memory_space<vmem>>, vector<8x2xbf16>,
    %cst_283 = arith.constant 0.000000e+00 : bf16
    %258 = vector.broadcast %cst_283 : bf16 to vector<8x2xbf16>
    %c8_284 = arith.constant 8 : index
    %c40_285 = arith.constant 40 : index
    %259 = vector.load %arg15[%c8_284, %c40_285] : memref<160x512xbf16, #tpu.memory_space<vmem>>, vector<8x2xbf16>
    tpu.vector_store %arg15[%c8_284, %c40_285], %258 {strides = array<i32>} : memref<160x512xbf16, #tpu.memory_space<vmem>>, vector<8x2xbf16>,
    %cst_286 = arith.constant 0.000000e+00 : bf16
    %260 = vector.broadcast %cst_286 : bf16 to vector<8x2xbf16>
    %c8_287 = arith.constant 8 : index
    %c60_288 = arith.constant 60 : index
    %261 = vector.load %arg15[%c8_287, %c60_288] : memref<160x512xbf16, #tpu.memory_space<vmem>>, vector<8x2xbf16>
    tpu.vector_store %arg15[%c8_287, %c60_288], %260 {strides = array<i32>} : memref<160x512xbf16, #tpu.memory_space<vmem>>, vector<8x2xbf16>,
    %262 = vector.extract_strided_slice %241 {offsets = [0, 0], sizes = [8, 79], strides = [1, 1]} : vector<8x80xbf16> to vector<8x79xbf16>
    %c16_289 = arith.constant 16 : index
    %c1_290 = arith.constant 1 : index
    %263 = vector.load %arg15[%c16_289, %c1_290] : memref<160x512xbf16, #tpu.memory_space<vmem>>, vector<8x79xbf16>
    tpu.vector_store %arg15[%c16_289, %c1_290], %262 {strides = array<i32>} : memref<160x512xbf16, #tpu.memory_space<vmem>>, vector<8x79xbf16>,
    %cst_291 = arith.constant 0.000000e+00 : bf16
    %264 = vector.broadcast %cst_291 : bf16 to vector<8x1xbf16>
    %c16_292 = arith.constant 16 : index
    %c0_293 = arith.constant 0 : index
    %265 = vector.load %arg15[%c16_292, %c0_293] : memref<160x512xbf16, #tpu.memory_space<vmem>>, vector<8x1xbf16>
    tpu.vector_store %arg15[%c16_292, %c0_293], %264 {strides = array<i32>} : memref<160x512xbf16, #tpu.memory_space<vmem>>, vector<8x1xbf16>,
    %cst_294 = arith.constant 0.000000e+00 : bf16
    %266 = vector.broadcast %cst_294 : bf16 to vector<8x1xbf16>
    %c16_295 = arith.constant 16 : index
    %c20_296 = arith.constant 20 : index
    %267 = vector.load %arg15[%c16_295, %c20_296] : memref<160x512xbf16, #tpu.memory_space<vmem>>, vector<8x1xbf16>
    tpu.vector_store %arg15[%c16_295, %c20_296], %266 {strides = array<i32>} : memref<160x512xbf16, #tpu.memory_space<vmem>>, vector<8x1xbf16>,
    %cst_297 = arith.constant 0.000000e+00 : bf16
    %268 = vector.broadcast %cst_297 : bf16 to vector<8x1xbf16>
    %c16_298 = arith.constant 16 : index
    %c40_299 = arith.constant 40 : index
    %269 = vector.load %arg15[%c16_298, %c40_299] : memref<160x512xbf16, #tpu.memory_space<vmem>>, vector<8x1xbf16>
    tpu.vector_store %arg15[%c16_298, %c40_299], %268 {strides = array<i32>} : memref<160x512xbf16, #tpu.memory_space<vmem>>, vector<8x1xbf16>,
    %cst_300 = arith.constant 0.000000e+00 : bf16
    %270 = vector.broadcast %cst_300 : bf16 to vector<8x1xbf16>
    %c16_301 = arith.constant 16 : index
    %c60_302 = arith.constant 60 : index
    %271 = vector.load %arg15[%c16_301, %c60_302] : memref<160x512xbf16, #tpu.memory_space<vmem>>, vector<8x1xbf16>
    tpu.vector_store %arg15[%c16_301, %c60_302], %270 {strides = array<i32>} : memref<160x512xbf16, #tpu.memory_space<vmem>>, vector<8x1xbf16>,
    %c24_303 = arith.constant 24 : index
    %c0_304 = arith.constant 0 : index
    %272 = vector.load %arg15[%c24_303, %c0_304] : memref<160x512xbf16, #tpu.memory_space<vmem>>, vector<8x80xbf16>
    tpu.vector_store %arg15[%c24_303, %c0_304], %241 {strides = array<i32>} : memref<160x512xbf16, #tpu.memory_space<vmem>>, vector<8x80xbf16>,
    %273 = vector.extract_strided_slice %241 {offsets = [0, 1], sizes = [8, 79], strides = [1, 1]} : vector<8x80xbf16> to vector<8x79xbf16>
    %c32_305 = arith.constant 32 : index
    %c0_306 = arith.constant 0 : index
    %274 = vector.load %arg15[%c32_305, %c0_306] : memref<160x512xbf16, #tpu.memory_space<vmem>>, vector<8x79xbf16>
    tpu.vector_store %arg15[%c32_305, %c0_306], %273 {strides = array<i32>} : memref<160x512xbf16, #tpu.memory_space<vmem>>, vector<8x79xbf16>,
    %cst_307 = arith.constant 0.000000e+00 : bf16
    %275 = vector.broadcast %cst_307 : bf16 to vector<8x1xbf16>
    %c32_308 = arith.constant 32 : index
    %c19_309 = arith.constant 19 : index
    %276 = vector.load %arg15[%c32_308, %c19_309] : memref<160x512xbf16, #tpu.memory_space<vmem>>, vector<8x1xbf16>
    tpu.vector_store %arg15[%c32_308, %c19_309], %275 {strides = array<i32>} : memref<160x512xbf16, #tpu.memory_space<vmem>>, vector<8x1xbf16>,
    %cst_310 = arith.constant 0.000000e+00 : bf16
    %277 = vector.broadcast %cst_310 : bf16 to vector<8x1xbf16>
    %c32_311 = arith.constant 32 : index
    %c39_312 = arith.constant 39 : index
    %278 = vector.load %arg15[%c32_311, %c39_312] : memref<160x512xbf16, #tpu.memory_space<vmem>>, vector<8x1xbf16>
    tpu.vector_store %arg15[%c32_311, %c39_312], %277 {strides = array<i32>} : memref<160x512xbf16, #tpu.memory_space<vmem>>, vector<8x1xbf16>,
    %cst_313 = arith.constant 0.000000e+00 : bf16
    %279 = vector.broadcast %cst_313 : bf16 to vector<8x1xbf16>
    %c32_314 = arith.constant 32 : index
    %c59_315 = arith.constant 59 : index
    %280 = vector.load %arg15[%c32_314, %c59_315] : memref<160x512xbf16, #tpu.memory_space<vmem>>, vector<8x1xbf16>
    tpu.vector_store %arg15[%c32_314, %c59_315], %279 {strides = array<i32>} : memref<160x512xbf16, #tpu.memory_space<vmem>>, vector<8x1xbf16>,
    %cst_316 = arith.constant 0.000000e+00 : bf16
    %281 = vector.broadcast %cst_316 : bf16 to vector<8x1xbf16>
    %c32_317 = arith.constant 32 : index
    %c79_318 = arith.constant 79 : index
    %282 = vector.load %arg15[%c32_317, %c79_318] : memref<160x512xbf16, #tpu.memory_space<vmem>>, vector<8x1xbf16>
    tpu.vector_store %arg15[%c32_317, %c79_318], %281 {strides = array<i32>} : memref<160x512xbf16, #tpu.memory_space<vmem>>, vector<8x1xbf16>,
    %283 = vector.extract_strided_slice %241 {offsets = [0, 2], sizes = [8, 78], strides = [1, 1]} : vector<8x80xbf16> to vector<8x78xbf16>
    %c40_319 = arith.constant 40 : index
    %c0_320 = arith.constant 0 : index
    %284 = vector.load %arg15[%c40_319, %c0_320] : memref<160x512xbf16, #tpu.memory_space<vmem>>, vector<8x78xbf16>
    tpu.vector_store %arg15[%c40_319, %c0_320], %283 {strides = array<i32>} : memref<160x512xbf16, #tpu.memory_space<vmem>>, vector<8x78xbf16>,
    %cst_321 = arith.constant 0.000000e+00 : bf16
    %285 = vector.broadcast %cst_321 : bf16 to vector<8x2xbf16>
    %c40_322 = arith.constant 40 : index
    %c18_323 = arith.constant 18 : index
    %286 = vector.load %arg15[%c40_322, %c18_323] : memref<160x512xbf16, #tpu.memory_space<vmem>>, vector<8x2xbf16>
    tpu.vector_store %arg15[%c40_322, %c18_323], %285 {strides = array<i32>} : memref<160x512xbf16, #tpu.memory_space<vmem>>, vector<8x2xbf16>,
    %cst_324 = arith.constant 0.000000e+00 : bf16
    %287 = vector.broadcast %cst_324 : bf16 to vector<8x2xbf16>
    %c40_325 = arith.constant 40 : index
    %c38_326 = arith.constant 38 : index
    %288 = vector.load %arg15[%c40_325, %c38_326] : memref<160x512xbf16, #tpu.memory_space<vmem>>, vector<8x2xbf16>
    tpu.vector_store %arg15[%c40_325, %c38_326], %287 {strides = array<i32>} : memref<160x512xbf16, #tpu.memory_space<vmem>>, vector<8x2xbf16>,
    %cst_327 = arith.constant 0.000000e+00 : bf16
    %289 = vector.broadcast %cst_327 : bf16 to vector<8x2xbf16>
    %c40_328 = arith.constant 40 : index
    %c58_329 = arith.constant 58 : index
    %290 = vector.load %arg15[%c40_328, %c58_329] : memref<160x512xbf16, #tpu.memory_space<vmem>>, vector<8x2xbf16>
    tpu.vector_store %arg15[%c40_328, %c58_329], %289 {strides = array<i32>} : memref<160x512xbf16, #tpu.memory_space<vmem>>, vector<8x2xbf16>,
    %cst_330 = arith.constant 0.000000e+00 : bf16
    %291 = vector.broadcast %cst_330 : bf16 to vector<8x2xbf16>
    %c40_331 = arith.constant 40 : index
    %c78_332 = arith.constant 78 : index
    %292 = vector.load %arg15[%c40_331, %c78_332] : memref<160x512xbf16, #tpu.memory_space<vmem>>, vector<8x2xbf16>
    tpu.vector_store %arg15[%c40_331, %c78_332], %291 {strides = array<i32>} : memref<160x512xbf16, #tpu.memory_space<vmem>>, vector<8x2xbf16>,
    %293 = vector.extract_strided_slice %241 {offsets = [0, 3], sizes = [8, 77], strides = [1, 1]} : vector<8x80xbf16> to vector<8x77xbf16>
    %c48_333 = arith.constant 48 : index
    %c0_334 = arith.constant 0 : index
    %294 = vector.load %arg15[%c48_333, %c0_334] : memref<160x512xbf16, #tpu.memory_space<vmem>>, vector<8x77xbf16>
    tpu.vector_store %arg15[%c48_333, %c0_334], %293 {strides = array<i32>} : memref<160x512xbf16, #tpu.memory_space<vmem>>, vector<8x77xbf16>,
    %cst_335 = arith.constant 0.000000e+00 : bf16
    %295 = vector.broadcast %cst_335 : bf16 to vector<8x3xbf16>
    %c48_336 = arith.constant 48 : index
    %c17_337 = arith.constant 17 : index
    %296 = vector.load %arg15[%c48_336, %c17_337] : memref<160x512xbf16, #tpu.memory_space<vmem>>, vector<8x3xbf16>
    tpu.vector_store %arg15[%c48_336, %c17_337], %295 {strides = array<i32>} : memref<160x512xbf16, #tpu.memory_space<vmem>>, vector<8x3xbf16>,
    %cst_338 = arith.constant 0.000000e+00 : bf16
    %297 = vector.broadcast %cst_338 : bf16 to vector<8x3xbf16>
    %c48_339 = arith.constant 48 : index
    %c37_340 = arith.constant 37 : index
    %298 = vector.load %arg15[%c48_339, %c37_340] : memref<160x512xbf16, #tpu.memory_space<vmem>>, vector<8x3xbf16>
    tpu.vector_store %arg15[%c48_339, %c37_340], %297 {strides = array<i32>} : memref<160x512xbf16, #tpu.memory_space<vmem>>, vector<8x3xbf16>,
    %cst_341 = arith.constant 0.000000e+00 : bf16
    %299 = vector.broadcast %cst_341 : bf16 to vector<8x3xbf16>
    %c48_342 = arith.constant 48 : index
    %c57_343 = arith.constant 57 : index
    %300 = vector.load %arg15[%c48_342, %c57_343] : memref<160x512xbf16, #tpu.memory_space<vmem>>, vector<8x3xbf16>
    tpu.vector_store %arg15[%c48_342, %c57_343], %299 {strides = array<i32>} : memref<160x512xbf16, #tpu.memory_space<vmem>>, vector<8x3xbf16>,
    %cst_344 = arith.constant 0.000000e+00 : bf16
    %301 = vector.broadcast %cst_344 : bf16 to vector<8x3xbf16>
    %c48_345 = arith.constant 48 : index
    %c77_346 = arith.constant 77 : index
    %302 = vector.load %arg15[%c48_345, %c77_346] : memref<160x512xbf16, #tpu.memory_space<vmem>>, vector<8x3xbf16>
    tpu.vector_store %arg15[%c48_345, %c77_346], %301 {strides = array<i32>} : memref<160x512xbf16, #tpu.memory_space<vmem>>, vector<8x3xbf16>,
    %c0_347 = arith.constant 0 : index
    %c0_348 = arith.constant 0 : index
    %303 = vector.load %arg5[%c0_347, %c0_348] : memref<8x56xbf16, #tpu.memory_space<vmem>>, vector<8x56xbf16>
    %c0_349 = arith.constant 0 : index
    %c0_350 = arith.constant 0 : index
    %304 = vector.load %arg15[%c0_349, %c0_350] : memref<160x512xbf16, #tpu.memory_space<vmem>>, vector<56x80xbf16>
    %cst_351 = arith.constant dense<0.000000e+00> : vector<8x80xf32>
    %305 = tpu.matmul %303, %304, %cst_351 {dimension_numbers = #tpu.dot_dimension_numbers<[1], [0], [0], [1], [0, 0, 1, 1], [], []>} : vector<8x56xbf16>, vector<56x80xbf16>, vector<8x80xf32> -> vector<8x80xf32>
    %306 = vector.broadcast %240 : vector<8x1xf32> to vector<8x80xf32>
    %307 = arith.addf %305, %306 : vector<8x80xf32>
    %cst_352 = arith.constant 0.000000e+00 : f32
    %308 = vector.broadcast %cst_352 : f32 to vector<8x80xf32>
    %309 = arith.maximumf %307, %308 : vector<8x80xf32>
    %c56_353 = arith.constant 56 : index
    %c0_354 = arith.constant 0 : index
    %310 = vector.load %arg11[%c56_353, %c0_354] : memref<184x1xf32, #tpu.memory_space<vmem>>, vector<32x1xf32>
    %311 = arith.truncf %309 : vector<8x80xf32> to vector<8x80xbf16>
    %312 = vector.extract_strided_slice %311 {offsets = [0, 0], sizes = [8, 79], strides = [1, 1]} : vector<8x80xbf16> to vector<8x79xbf16>
    %c0_355 = arith.constant 0 : index
    %c1_356 = arith.constant 1 : index
    %313 = vector.load %arg15[%c0_355, %c1_356] : memref<160x512xbf16, #tpu.memory_space<vmem>>, vector<8x79xbf16>
    tpu.vector_store %arg15[%c0_355, %c1_356], %312 {strides = array<i32>} : memref<160x512xbf16, #tpu.memory_space<vmem>>, vector<8x79xbf16>,
    %cst_357 = arith.constant 0.000000e+00 : bf16
    %314 = vector.broadcast %cst_357 : bf16 to vector<8x1xbf16>
    %c0_358 = arith.constant 0 : index
    %c0_359 = arith.constant 0 : index
    %315 = vector.load %arg15[%c0_358, %c0_359] : memref<160x512xbf16, #tpu.memory_space<vmem>>, vector<8x1xbf16>
    tpu.vector_store %arg15[%c0_358, %c0_359], %314 {strides = array<i32>} : memref<160x512xbf16, #tpu.memory_space<vmem>>, vector<8x1xbf16>,
    %cst_360 = arith.constant 0.000000e+00 : bf16
    %316 = vector.broadcast %cst_360 : bf16 to vector<8x1xbf16>
    %c0_361 = arith.constant 0 : index
    %c20_362 = arith.constant 20 : index
    %317 = vector.load %arg15[%c0_361, %c20_362] : memref<160x512xbf16, #tpu.memory_space<vmem>>, vector<8x1xbf16>
    tpu.vector_store %arg15[%c0_361, %c20_362], %316 {strides = array<i32>} : memref<160x512xbf16, #tpu.memory_space<vmem>>, vector<8x1xbf16>,
    %cst_363 = arith.constant 0.000000e+00 : bf16
    %318 = vector.broadcast %cst_363 : bf16 to vector<8x1xbf16>
    %c0_364 = arith.constant 0 : index
    %c40_365 = arith.constant 40 : index
    %319 = vector.load %arg15[%c0_364, %c40_365] : memref<160x512xbf16, #tpu.memory_space<vmem>>, vector<8x1xbf16>
    tpu.vector_store %arg15[%c0_364, %c40_365], %318 {strides = array<i32>} : memref<160x512xbf16, #tpu.memory_space<vmem>>, vector<8x1xbf16>,
    %cst_366 = arith.constant 0.000000e+00 : bf16
    %320 = vector.broadcast %cst_366 : bf16 to vector<8x1xbf16>
    %c0_367 = arith.constant 0 : index
    %c60_368 = arith.constant 60 : index
    %321 = vector.load %arg15[%c0_367, %c60_368] : memref<160x512xbf16, #tpu.memory_space<vmem>>, vector<8x1xbf16>
    tpu.vector_store %arg15[%c0_367, %c60_368], %320 {strides = array<i32>} : memref<160x512xbf16, #tpu.memory_space<vmem>>, vector<8x1xbf16>,
    %c8_369 = arith.constant 8 : index
    %c0_370 = arith.constant 0 : index
    %322 = vector.load %arg15[%c8_369, %c0_370] : memref<160x512xbf16, #tpu.memory_space<vmem>>, vector<8x80xbf16>
    tpu.vector_store %arg15[%c8_369, %c0_370], %311 {strides = array<i32>} : memref<160x512xbf16, #tpu.memory_space<vmem>>, vector<8x80xbf16>,
    %323 = vector.extract_strided_slice %311 {offsets = [0, 1], sizes = [8, 79], strides = [1, 1]} : vector<8x80xbf16> to vector<8x79xbf16>
    %c16_371 = arith.constant 16 : index
    %c0_372 = arith.constant 0 : index
    %324 = vector.load %arg15[%c16_371, %c0_372] : memref<160x512xbf16, #tpu.memory_space<vmem>>, vector<8x79xbf16>
    tpu.vector_store %arg15[%c16_371, %c0_372], %323 {strides = array<i32>} : memref<160x512xbf16, #tpu.memory_space<vmem>>, vector<8x79xbf16>,
    %cst_373 = arith.constant 0.000000e+00 : bf16
    %325 = vector.broadcast %cst_373 : bf16 to vector<8x1xbf16>
    %c16_374 = arith.constant 16 : index
    %c19_375 = arith.constant 19 : index
    %326 = vector.load %arg15[%c16_374, %c19_375] : memref<160x512xbf16, #tpu.memory_space<vmem>>, vector<8x1xbf16>
    tpu.vector_store %arg15[%c16_374, %c19_375], %325 {strides = array<i32>} : memref<160x512xbf16, #tpu.memory_space<vmem>>, vector<8x1xbf16>,
    %cst_376 = arith.constant 0.000000e+00 : bf16
    %327 = vector.broadcast %cst_376 : bf16 to vector<8x1xbf16>
    %c16_377 = arith.constant 16 : index
    %c39_378 = arith.constant 39 : index
    %328 = vector.load %arg15[%c16_377, %c39_378] : memref<160x512xbf16, #tpu.memory_space<vmem>>, vector<8x1xbf16>
    tpu.vector_store %arg15[%c16_377, %c39_378], %327 {strides = array<i32>} : memref<160x512xbf16, #tpu.memory_space<vmem>>, vector<8x1xbf16>,
    %cst_379 = arith.constant 0.000000e+00 : bf16
    %329 = vector.broadcast %cst_379 : bf16 to vector<8x1xbf16>
    %c16_380 = arith.constant 16 : index
    %c59_381 = arith.constant 59 : index
    %330 = vector.load %arg15[%c16_380, %c59_381] : memref<160x512xbf16, #tpu.memory_space<vmem>>, vector<8x1xbf16>
    tpu.vector_store %arg15[%c16_380, %c59_381], %329 {strides = array<i32>} : memref<160x512xbf16, #tpu.memory_space<vmem>>, vector<8x1xbf16>,
    %cst_382 = arith.constant 0.000000e+00 : bf16
    %331 = vector.broadcast %cst_382 : bf16 to vector<8x1xbf16>
    %c16_383 = arith.constant 16 : index
    %c79_384 = arith.constant 79 : index
    %332 = vector.load %arg15[%c16_383, %c79_384] : memref<160x512xbf16, #tpu.memory_space<vmem>>, vector<8x1xbf16>
    tpu.vector_store %arg15[%c16_383, %c79_384], %331 {strides = array<i32>} : memref<160x512xbf16, #tpu.memory_space<vmem>>, vector<8x1xbf16>,
    %c0_385 = arith.constant 0 : index
    %c0_386 = arith.constant 0 : index
    %333 = vector.load %arg6[%c0_385, %c0_386] : memref<32x24xbf16, #tpu.memory_space<vmem>>, vector<32x24xbf16>
    %c0_387 = arith.constant 0 : index
    %c0_388 = arith.constant 0 : index
    %334 = vector.load %arg15[%c0_387, %c0_388] : memref<160x512xbf16, #tpu.memory_space<vmem>>, vector<24x80xbf16>
    %cst_389 = arith.constant dense<0.000000e+00> : vector<32x80xf32>
    %335 = tpu.matmul %333, %334, %cst_389 {dimension_numbers = #tpu.dot_dimension_numbers<[1], [0], [0], [1], [0, 0, 1, 1], [], []>} : vector<32x24xbf16>, vector<24x80xbf16>, vector<32x80xf32> -> vector<32x80xf32>
    %336 = vector.broadcast %310 : vector<32x1xf32> to vector<32x80xf32>
    %337 = arith.addf %335, %336 : vector<32x80xf32>
    %cst_390 = arith.constant 0.000000e+00 : f32
    %338 = vector.broadcast %cst_390 : f32 to vector<32x80xf32>
    %339 = arith.maximumf %337, %338 : vector<32x80xf32>
    %340 = arith.addf %339, %210 : vector<32x80xf32>
    %341 = vector.extract_strided_slice %340 {offsets = [0, 0], sizes = [32, 76], strides = [1, 1]} : vector<32x80xf32> to vector<32x76xf32>
    %342 = vector.extract_strided_slice %340 {offsets = [0, 1], sizes = [32, 76], strides = [1, 1]} : vector<32x80xf32> to vector<32x76xf32>
    %343 = arith.maximumf %341, %342 : vector<32x76xf32>
    %344 = vector.extract_strided_slice %340 {offsets = [0, 2], sizes = [32, 76], strides = [1, 1]} : vector<32x80xf32> to vector<32x76xf32>
    %345 = arith.maximumf %343, %344 : vector<32x76xf32>
    %346 = vector.extract_strided_slice %340 {offsets = [0, 3], sizes = [32, 76], strides = [1, 1]} : vector<32x80xf32> to vector<32x76xf32>
    %347 = arith.maximumf %345, %346 : vector<32x76xf32>
    %348 = vector.extract_strided_slice %340 {offsets = [0, 4], sizes = [32, 76], strides = [1, 1]} : vector<32x80xf32> to vector<32x76xf32>
    %349 = arith.maximumf %347, %348 : vector<32x76xf32>
    %350 = arith.truncf %349 : vector<32x76xf32> to vector<32x76xbf16>
    %c0_391 = arith.constant 0 : index
    %c0_392 = arith.constant 0 : index
    %351 = vector.load %arg13[%c0_391, %c0_392] : memref<76x16xbf16, #tpu.memory_space<vmem>>, vector<76x16xbf16>
    %cst_393 = arith.constant dense<0.000000e+00> : vector<32x16xf32>
    %352 = tpu.matmul %350, %351, %cst_393 {dimension_numbers = #tpu.dot_dimension_numbers<[1], [0], [0], [1], [0, 0, 1, 1], [], []>} : vector<32x76xbf16>, vector<76x16xbf16>, vector<32x16xf32> -> vector<32x16xf32>
    %353 = arith.truncf %352 : vector<32x16xf32> to vector<32x16xbf16>
    %c88 = arith.constant 88 : index
    %c0_394 = arith.constant 0 : index
    %354 = vector.load %arg11[%c88, %c0_394] : memref<184x1xf32, #tpu.memory_space<vmem>>, vector<32x1xf32>
    %cst_395 = arith.constant 0.000000e+00 : bf16
    %355 = vector.broadcast %cst_395 : bf16 to vector<32x16xbf16>
    %c0_396 = arith.constant 0 : index
    %c0_397 = arith.constant 0 : index
    %356 = vector.load %arg15[%c0_396, %c0_397] : memref<160x512xbf16, #tpu.memory_space<vmem>>, vector<32x16xbf16>
    tpu.vector_store %arg15[%c0_396, %c0_397], %355 {strides = array<i32>} : memref<160x512xbf16, #tpu.memory_space<vmem>>, vector<32x16xbf16>,
    %357 = vector.extract_strided_slice %353 {offsets = [0, 0], sizes = [32, 14], strides = [1, 1]} : vector<32x16xbf16> to vector<32x14xbf16>
    %c32_398 = arith.constant 32 : index
    %c2_399 = arith.constant 2 : index
    %358 = vector.load %arg15[%c32_398, %c2_399] : memref<160x512xbf16, #tpu.memory_space<vmem>>, vector<32x14xbf16>
    tpu.vector_store %arg15[%c32_398, %c2_399], %357 {strides = array<i32>} : memref<160x512xbf16, #tpu.memory_space<vmem>>, vector<32x14xbf16>,
    %cst_400 = arith.constant 0.000000e+00 : bf16
    %359 = vector.broadcast %cst_400 : bf16 to vector<32x2xbf16>
    %c32_401 = arith.constant 32 : index
    %c0_402 = arith.constant 0 : index
    %360 = vector.load %arg15[%c32_401, %c0_402] : memref<160x512xbf16, #tpu.memory_space<vmem>>, vector<32x2xbf16>
    tpu.vector_store %arg15[%c32_401, %c0_402], %359 {strides = array<i32>} : memref<160x512xbf16, #tpu.memory_space<vmem>>, vector<32x2xbf16>,
    %cst_403 = arith.constant 0.000000e+00 : bf16
    %361 = vector.broadcast %cst_403 : bf16 to vector<32x2xbf16>
    %c32_404 = arith.constant 32 : index
    %c4_405 = arith.constant 4 : index
    %362 = vector.load %arg15[%c32_404, %c4_405] : memref<160x512xbf16, #tpu.memory_space<vmem>>, vector<32x2xbf16>
    tpu.vector_store %arg15[%c32_404, %c4_405], %361 {strides = array<i32>} : memref<160x512xbf16, #tpu.memory_space<vmem>>, vector<32x2xbf16>,
    %cst_406 = arith.constant 0.000000e+00 : bf16
    %363 = vector.broadcast %cst_406 : bf16 to vector<32x2xbf16>
    %c32_407 = arith.constant 32 : index
    %c8_408 = arith.constant 8 : index
    %364 = vector.load %arg15[%c32_407, %c8_408] : memref<160x512xbf16, #tpu.memory_space<vmem>>, vector<32x2xbf16>
    tpu.vector_store %arg15[%c32_407, %c8_408], %363 {strides = array<i32>} : memref<160x512xbf16, #tpu.memory_space<vmem>>, vector<32x2xbf16>,
    %cst_409 = arith.constant 0.000000e+00 : bf16
    %365 = vector.broadcast %cst_409 : bf16 to vector<32x2xbf16>
    %c32_410 = arith.constant 32 : index
    %c12 = arith.constant 12 : index
    %366 = vector.load %arg15[%c32_410, %c12] : memref<160x512xbf16, #tpu.memory_space<vmem>>, vector<32x2xbf16>
    tpu.vector_store %arg15[%c32_410, %c12], %365 {strides = array<i32>} : memref<160x512xbf16, #tpu.memory_space<vmem>>, vector<32x2xbf16>,
    %c64_411 = arith.constant 64 : index
    %c0_412 = arith.constant 0 : index
    %367 = vector.load %arg15[%c64_411, %c0_412] : memref<160x512xbf16, #tpu.memory_space<vmem>>, vector<32x16xbf16>
    tpu.vector_store %arg15[%c64_411, %c0_412], %353 {strides = array<i32>} : memref<160x512xbf16, #tpu.memory_space<vmem>>, vector<32x16xbf16>,
    %368 = vector.extract_strided_slice %353 {offsets = [0, 2], sizes = [32, 14], strides = [1, 1]} : vector<32x16xbf16> to vector<32x14xbf16>
    %c96_413 = arith.constant 96 : index
    %c0_414 = arith.constant 0 : index
    %369 = vector.load %arg15[%c96_413, %c0_414] : memref<160x512xbf16, #tpu.memory_space<vmem>>, vector<32x14xbf16>
    tpu.vector_store %arg15[%c96_413, %c0_414], %368 {strides = array<i32>} : memref<160x512xbf16, #tpu.memory_space<vmem>>, vector<32x14xbf16>,
    %cst_415 = arith.constant 0.000000e+00 : bf16
    %370 = vector.broadcast %cst_415 : bf16 to vector<32x2xbf16>
    %c96_416 = arith.constant 96 : index
    %c2_417 = arith.constant 2 : index
    %371 = vector.load %arg15[%c96_416, %c2_417] : memref<160x512xbf16, #tpu.memory_space<vmem>>, vector<32x2xbf16>
    tpu.vector_store %arg15[%c96_416, %c2_417], %370 {strides = array<i32>} : memref<160x512xbf16, #tpu.memory_space<vmem>>, vector<32x2xbf16>,
    %cst_418 = arith.constant 0.000000e+00 : bf16
    %372 = vector.broadcast %cst_418 : bf16 to vector<32x2xbf16>
    %c96_419 = arith.constant 96 : index
    %c6 = arith.constant 6 : index
    %373 = vector.load %arg15[%c96_419, %c6] : memref<160x512xbf16, #tpu.memory_space<vmem>>, vector<32x2xbf16>
    tpu.vector_store %arg15[%c96_419, %c6], %372 {strides = array<i32>} : memref<160x512xbf16, #tpu.memory_space<vmem>>, vector<32x2xbf16>,
    %cst_420 = arith.constant 0.000000e+00 : bf16
    %374 = vector.broadcast %cst_420 : bf16 to vector<32x2xbf16>
    %c96_421 = arith.constant 96 : index
    %c10 = arith.constant 10 : index
    %375 = vector.load %arg15[%c96_421, %c10] : memref<160x512xbf16, #tpu.memory_space<vmem>>, vector<32x2xbf16>
    tpu.vector_store %arg15[%c96_421, %c10], %374 {strides = array<i32>} : memref<160x512xbf16, #tpu.memory_space<vmem>>, vector<32x2xbf16>,
    %cst_422 = arith.constant 0.000000e+00 : bf16
    %376 = vector.broadcast %cst_422 : bf16 to vector<32x2xbf16>
    %c96_423 = arith.constant 96 : index
    %c14 = arith.constant 14 : index
    %377 = vector.load %arg15[%c96_423, %c14] : memref<160x512xbf16, #tpu.memory_space<vmem>>, vector<32x2xbf16>
    tpu.vector_store %arg15[%c96_423, %c14], %376 {strides = array<i32>} : memref<160x512xbf16, #tpu.memory_space<vmem>>, vector<32x2xbf16>,
    %cst_424 = arith.constant 0.000000e+00 : bf16
    %378 = vector.broadcast %cst_424 : bf16 to vector<32x16xbf16>
    %c128 = arith.constant 128 : index
    %c0_425 = arith.constant 0 : index
    %379 = vector.load %arg15[%c128, %c0_425] : memref<160x512xbf16, #tpu.memory_space<vmem>>, vector<32x16xbf16>
    tpu.vector_store %arg15[%c128, %c0_425], %378 {strides = array<i32>} : memref<160x512xbf16, #tpu.memory_space<vmem>>, vector<32x16xbf16>,
    %c0_426 = arith.constant 0 : index
    %c0_427 = arith.constant 0 : index
    %380 = vector.load %arg7[%c0_426, %c0_427] : memref<32x160xbf16, #tpu.memory_space<vmem>>, vector<32x160xbf16>
    %c0_428 = arith.constant 0 : index
    %c0_429 = arith.constant 0 : index
    %381 = vector.load %arg15[%c0_428, %c0_429] : memref<160x512xbf16, #tpu.memory_space<vmem>>, vector<160x16xbf16>
    %cst_430 = arith.constant dense<0.000000e+00> : vector<32x16xf32>
    %382 = tpu.matmul %380, %381, %cst_430 {dimension_numbers = #tpu.dot_dimension_numbers<[1], [0], [0], [1], [0, 0, 1, 1], [], []>} : vector<32x160xbf16>, vector<160x16xbf16>, vector<32x16xf32> -> vector<32x16xf32>
    %383 = vector.broadcast %354 : vector<32x1xf32> to vector<32x16xf32>
    %384 = arith.addf %382, %383 : vector<32x16xf32>
    %c120 = arith.constant 120 : index
    %c0_431 = arith.constant 0 : index
    %385 = vector.load %arg11[%c120, %c0_431] : memref<184x1xf32, #tpu.memory_space<vmem>>, vector<16x1xf32>
    %386 = vector.extract_strided_slice %353 {offsets = [0, 0], sizes = [32, 15], strides = [1, 1]} : vector<32x16xbf16> to vector<32x15xbf16>
    %c0_432 = arith.constant 0 : index
    %c1_433 = arith.constant 1 : index
    %387 = vector.load %arg15[%c0_432, %c1_433] : memref<160x512xbf16, #tpu.memory_space<vmem>>, vector<32x15xbf16>
    tpu.vector_store %arg15[%c0_432, %c1_433], %386 {strides = array<i32>} : memref<160x512xbf16, #tpu.memory_space<vmem>>, vector<32x15xbf16>,
    %cst_434 = arith.constant 0.000000e+00 : bf16
    %388 = vector.broadcast %cst_434 : bf16 to vector<32x1xbf16>
    %c0_435 = arith.constant 0 : index
    %c0_436 = arith.constant 0 : index
    %389 = vector.load %arg15[%c0_435, %c0_436] : memref<160x512xbf16, #tpu.memory_space<vmem>>, vector<32x1xbf16>
    tpu.vector_store %arg15[%c0_435, %c0_436], %388 {strides = array<i32>} : memref<160x512xbf16, #tpu.memory_space<vmem>>, vector<32x1xbf16>,
    %cst_437 = arith.constant 0.000000e+00 : bf16
    %390 = vector.broadcast %cst_437 : bf16 to vector<32x1xbf16>
    %c0_438 = arith.constant 0 : index
    %c4_439 = arith.constant 4 : index
    %391 = vector.load %arg15[%c0_438, %c4_439] : memref<160x512xbf16, #tpu.memory_space<vmem>>, vector<32x1xbf16>
    tpu.vector_store %arg15[%c0_438, %c4_439], %390 {strides = array<i32>} : memref<160x512xbf16, #tpu.memory_space<vmem>>, vector<32x1xbf16>,
    %cst_440 = arith.constant 0.000000e+00 : bf16
    %392 = vector.broadcast %cst_440 : bf16 to vector<32x1xbf16>
    %c0_441 = arith.constant 0 : index
    %c8_442 = arith.constant 8 : index
    %393 = vector.load %arg15[%c0_441, %c8_442] : memref<160x512xbf16, #tpu.memory_space<vmem>>, vector<32x1xbf16>
    tpu.vector_store %arg15[%c0_441, %c8_442], %392 {strides = array<i32>} : memref<160x512xbf16, #tpu.memory_space<vmem>>, vector<32x1xbf16>,
    %cst_443 = arith.constant 0.000000e+00 : bf16
    %394 = vector.broadcast %cst_443 : bf16 to vector<32x1xbf16>
    %c0_444 = arith.constant 0 : index
    %c12_445 = arith.constant 12 : index
    %395 = vector.load %arg15[%c0_444, %c12_445] : memref<160x512xbf16, #tpu.memory_space<vmem>>, vector<32x1xbf16>
    tpu.vector_store %arg15[%c0_444, %c12_445], %394 {strides = array<i32>} : memref<160x512xbf16, #tpu.memory_space<vmem>>, vector<32x1xbf16>,
    %c32_446 = arith.constant 32 : index
    %c0_447 = arith.constant 0 : index
    %396 = vector.load %arg15[%c32_446, %c0_447] : memref<160x512xbf16, #tpu.memory_space<vmem>>, vector<32x16xbf16>
    tpu.vector_store %arg15[%c32_446, %c0_447], %353 {strides = array<i32>} : memref<160x512xbf16, #tpu.memory_space<vmem>>, vector<32x16xbf16>,
    %397 = vector.extract_strided_slice %353 {offsets = [0, 1], sizes = [32, 15], strides = [1, 1]} : vector<32x16xbf16> to vector<32x15xbf16>
    %c64_448 = arith.constant 64 : index
    %c0_449 = arith.constant 0 : index
    %398 = vector.load %arg15[%c64_448, %c0_449] : memref<160x512xbf16, #tpu.memory_space<vmem>>, vector<32x15xbf16>
    tpu.vector_store %arg15[%c64_448, %c0_449], %397 {strides = array<i32>} : memref<160x512xbf16, #tpu.memory_space<vmem>>, vector<32x15xbf16>,
    %cst_450 = arith.constant 0.000000e+00 : bf16
    %399 = vector.broadcast %cst_450 : bf16 to vector<32x1xbf16>
    %c64_451 = arith.constant 64 : index
    %c3_452 = arith.constant 3 : index
    %400 = vector.load %arg15[%c64_451, %c3_452] : memref<160x512xbf16, #tpu.memory_space<vmem>>, vector<32x1xbf16>
    tpu.vector_store %arg15[%c64_451, %c3_452], %399 {strides = array<i32>} : memref<160x512xbf16, #tpu.memory_space<vmem>>, vector<32x1xbf16>,
    %cst_453 = arith.constant 0.000000e+00 : bf16
    %401 = vector.broadcast %cst_453 : bf16 to vector<32x1xbf16>
    %c64_454 = arith.constant 64 : index
    %c7 = arith.constant 7 : index
    %402 = vector.load %arg15[%c64_454, %c7] : memref<160x512xbf16, #tpu.memory_space<vmem>>, vector<32x1xbf16>
    tpu.vector_store %arg15[%c64_454, %c7], %401 {strides = array<i32>} : memref<160x512xbf16, #tpu.memory_space<vmem>>, vector<32x1xbf16>,
    %cst_455 = arith.constant 0.000000e+00 : bf16
    %403 = vector.broadcast %cst_455 : bf16 to vector<32x1xbf16>
    %c64_456 = arith.constant 64 : index
    %c11 = arith.constant 11 : index
    %404 = vector.load %arg15[%c64_456, %c11] : memref<160x512xbf16, #tpu.memory_space<vmem>>, vector<32x1xbf16>
    tpu.vector_store %arg15[%c64_456, %c11], %403 {strides = array<i32>} : memref<160x512xbf16, #tpu.memory_space<vmem>>, vector<32x1xbf16>,
    %cst_457 = arith.constant 0.000000e+00 : bf16
    %405 = vector.broadcast %cst_457 : bf16 to vector<32x1xbf16>
    %c64_458 = arith.constant 64 : index
    %c15 = arith.constant 15 : index
    %406 = vector.load %arg15[%c64_458, %c15] : memref<160x512xbf16, #tpu.memory_space<vmem>>, vector<32x1xbf16>
    tpu.vector_store %arg15[%c64_458, %c15], %405 {strides = array<i32>} : memref<160x512xbf16, #tpu.memory_space<vmem>>, vector<32x1xbf16>,
    %c0_459 = arith.constant 0 : index
    %c0_460 = arith.constant 0 : index
    %407 = vector.load %arg8[%c0_459, %c0_460] : memref<16x96xbf16, #tpu.memory_space<vmem>>, vector<16x96xbf16>
    %c0_461 = arith.constant 0 : index
    %c0_462 = arith.constant 0 : index
    %408 = vector.load %arg15[%c0_461, %c0_462] : memref<160x512xbf16, #tpu.memory_space<vmem>>, vector<96x16xbf16>
    %cst_463 = arith.constant dense<0.000000e+00> : vector<16x16xf32>
    %409 = tpu.matmul %407, %408, %cst_463 {dimension_numbers = #tpu.dot_dimension_numbers<[1], [0], [0], [1], [0, 0, 1, 1], [], []>} : vector<16x96xbf16>, vector<96x16xbf16>, vector<16x16xf32> -> vector<16x16xf32>
    %410 = vector.broadcast %385 : vector<16x1xf32> to vector<16x16xf32>
    %411 = arith.addf %409, %410 : vector<16x16xf32>
    %cst_464 = arith.constant 0.000000e+00 : f32
    %412 = vector.broadcast %cst_464 : f32 to vector<16x16xf32>
    %413 = arith.maximumf %411, %412 : vector<16x16xf32>
    %c136 = arith.constant 136 : index
    %c0_465 = arith.constant 0 : index
    %414 = vector.load %arg11[%c136, %c0_465] : memref<184x1xf32, #tpu.memory_space<vmem>>, vector<16x1xf32>
    %415 = arith.truncf %413 : vector<16x16xf32> to vector<16x16xbf16>
    %416 = vector.extract_strided_slice %415 {offsets = [0, 0], sizes = [16, 13], strides = [1, 1]} : vector<16x16xbf16> to vector<16x13xbf16>
    %c0_466 = arith.constant 0 : index
    %c3_467 = arith.constant 3 : index
    %417 = vector.load %arg15[%c0_466, %c3_467] : memref<160x512xbf16, #tpu.memory_space<vmem>>, vector<16x13xbf16>
    tpu.vector_store %arg15[%c0_466, %c3_467], %416 {strides = array<i32>} : memref<160x512xbf16, #tpu.memory_space<vmem>>, vector<16x13xbf16>,
    %cst_468 = arith.constant 0.000000e+00 : bf16
    %418 = vector.broadcast %cst_468 : bf16 to vector<16x3xbf16>
    %c0_469 = arith.constant 0 : index
    %c0_470 = arith.constant 0 : index
    %419 = vector.load %arg15[%c0_469, %c0_470] : memref<160x512xbf16, #tpu.memory_space<vmem>>, vector<16x3xbf16>
    tpu.vector_store %arg15[%c0_469, %c0_470], %418 {strides = array<i32>} : memref<160x512xbf16, #tpu.memory_space<vmem>>, vector<16x3xbf16>,
    %cst_471 = arith.constant 0.000000e+00 : bf16
    %420 = vector.broadcast %cst_471 : bf16 to vector<16x3xbf16>
    %c0_472 = arith.constant 0 : index
    %c4_473 = arith.constant 4 : index
    %421 = vector.load %arg15[%c0_472, %c4_473] : memref<160x512xbf16, #tpu.memory_space<vmem>>, vector<16x3xbf16>
    tpu.vector_store %arg15[%c0_472, %c4_473], %420 {strides = array<i32>} : memref<160x512xbf16, #tpu.memory_space<vmem>>, vector<16x3xbf16>,
    %cst_474 = arith.constant 0.000000e+00 : bf16
    %422 = vector.broadcast %cst_474 : bf16 to vector<16x3xbf16>
    %c0_475 = arith.constant 0 : index
    %c8_476 = arith.constant 8 : index
    %423 = vector.load %arg15[%c0_475, %c8_476] : memref<160x512xbf16, #tpu.memory_space<vmem>>, vector<16x3xbf16>
    tpu.vector_store %arg15[%c0_475, %c8_476], %422 {strides = array<i32>} : memref<160x512xbf16, #tpu.memory_space<vmem>>, vector<16x3xbf16>,
    %cst_477 = arith.constant 0.000000e+00 : bf16
    %424 = vector.broadcast %cst_477 : bf16 to vector<16x3xbf16>
    %c0_478 = arith.constant 0 : index
    %c12_479 = arith.constant 12 : index
    %425 = vector.load %arg15[%c0_478, %c12_479] : memref<160x512xbf16, #tpu.memory_space<vmem>>, vector<16x3xbf16>
    tpu.vector_store %arg15[%c0_478, %c12_479], %424 {strides = array<i32>} : memref<160x512xbf16, #tpu.memory_space<vmem>>, vector<16x3xbf16>,
    %426 = vector.extract_strided_slice %415 {offsets = [0, 0], sizes = [16, 14], strides = [1, 1]} : vector<16x16xbf16> to vector<16x14xbf16>
    %c16_480 = arith.constant 16 : index
    %c2_481 = arith.constant 2 : index
    %427 = vector.load %arg15[%c16_480, %c2_481] : memref<160x512xbf16, #tpu.memory_space<vmem>>, vector<16x14xbf16>
    tpu.vector_store %arg15[%c16_480, %c2_481], %426 {strides = array<i32>} : memref<160x512xbf16, #tpu.memory_space<vmem>>, vector<16x14xbf16>,
    %cst_482 = arith.constant 0.000000e+00 : bf16
    %428 = vector.broadcast %cst_482 : bf16 to vector<16x2xbf16>
    %c16_483 = arith.constant 16 : index
    %c0_484 = arith.constant 0 : index
    %429 = vector.load %arg15[%c16_483, %c0_484] : memref<160x512xbf16, #tpu.memory_space<vmem>>, vector<16x2xbf16>
    tpu.vector_store %arg15[%c16_483, %c0_484], %428 {strides = array<i32>} : memref<160x512xbf16, #tpu.memory_space<vmem>>, vector<16x2xbf16>,
    %cst_485 = arith.constant 0.000000e+00 : bf16
    %430 = vector.broadcast %cst_485 : bf16 to vector<16x2xbf16>
    %c16_486 = arith.constant 16 : index
    %c4_487 = arith.constant 4 : index
    %431 = vector.load %arg15[%c16_486, %c4_487] : memref<160x512xbf16, #tpu.memory_space<vmem>>, vector<16x2xbf16>
    tpu.vector_store %arg15[%c16_486, %c4_487], %430 {strides = array<i32>} : memref<160x512xbf16, #tpu.memory_space<vmem>>, vector<16x2xbf16>,
    %cst_488 = arith.constant 0.000000e+00 : bf16
    %432 = vector.broadcast %cst_488 : bf16 to vector<16x2xbf16>
    %c16_489 = arith.constant 16 : index
    %c8_490 = arith.constant 8 : index
    %433 = vector.load %arg15[%c16_489, %c8_490] : memref<160x512xbf16, #tpu.memory_space<vmem>>, vector<16x2xbf16>
    tpu.vector_store %arg15[%c16_489, %c8_490], %432 {strides = array<i32>} : memref<160x512xbf16, #tpu.memory_space<vmem>>, vector<16x2xbf16>,
    %cst_491 = arith.constant 0.000000e+00 : bf16
    %434 = vector.broadcast %cst_491 : bf16 to vector<16x2xbf16>
    %c16_492 = arith.constant 16 : index
    %c12_493 = arith.constant 12 : index
    %435 = vector.load %arg15[%c16_492, %c12_493] : memref<160x512xbf16, #tpu.memory_space<vmem>>, vector<16x2xbf16>
    tpu.vector_store %arg15[%c16_492, %c12_493], %434 {strides = array<i32>} : memref<160x512xbf16, #tpu.memory_space<vmem>>, vector<16x2xbf16>,
    %436 = vector.extract_strided_slice %415 {offsets = [0, 0], sizes = [16, 15], strides = [1, 1]} : vector<16x16xbf16> to vector<16x15xbf16>
    %c32_494 = arith.constant 32 : index
    %c1_495 = arith.constant 1 : index
    %437 = vector.load %arg15[%c32_494, %c1_495] : memref<160x512xbf16, #tpu.memory_space<vmem>>, vector<16x15xbf16>
    tpu.vector_store %arg15[%c32_494, %c1_495], %436 {strides = array<i32>} : memref<160x512xbf16, #tpu.memory_space<vmem>>, vector<16x15xbf16>,
    %cst_496 = arith.constant 0.000000e+00 : bf16
    %438 = vector.broadcast %cst_496 : bf16 to vector<16x1xbf16>
    %c32_497 = arith.constant 32 : index
    %c0_498 = arith.constant 0 : index
    %439 = vector.load %arg15[%c32_497, %c0_498] : memref<160x512xbf16, #tpu.memory_space<vmem>>, vector<16x1xbf16>
    tpu.vector_store %arg15[%c32_497, %c0_498], %438 {strides = array<i32>} : memref<160x512xbf16, #tpu.memory_space<vmem>>, vector<16x1xbf16>,
    %cst_499 = arith.constant 0.000000e+00 : bf16
    %440 = vector.broadcast %cst_499 : bf16 to vector<16x1xbf16>
    %c32_500 = arith.constant 32 : index
    %c4_501 = arith.constant 4 : index
    %441 = vector.load %arg15[%c32_500, %c4_501] : memref<160x512xbf16, #tpu.memory_space<vmem>>, vector<16x1xbf16>
    tpu.vector_store %arg15[%c32_500, %c4_501], %440 {strides = array<i32>} : memref<160x512xbf16, #tpu.memory_space<vmem>>, vector<16x1xbf16>,
    %cst_502 = arith.constant 0.000000e+00 : bf16
    %442 = vector.broadcast %cst_502 : bf16 to vector<16x1xbf16>
    %c32_503 = arith.constant 32 : index
    %c8_504 = arith.constant 8 : index
    %443 = vector.load %arg15[%c32_503, %c8_504] : memref<160x512xbf16, #tpu.memory_space<vmem>>, vector<16x1xbf16>
    tpu.vector_store %arg15[%c32_503, %c8_504], %442 {strides = array<i32>} : memref<160x512xbf16, #tpu.memory_space<vmem>>, vector<16x1xbf16>,
    %cst_505 = arith.constant 0.000000e+00 : bf16
    %444 = vector.broadcast %cst_505 : bf16 to vector<16x1xbf16>
    %c32_506 = arith.constant 32 : index
    %c12_507 = arith.constant 12 : index
    %445 = vector.load %arg15[%c32_506, %c12_507] : memref<160x512xbf16, #tpu.memory_space<vmem>>, vector<16x1xbf16>
    tpu.vector_store %arg15[%c32_506, %c12_507], %444 {strides = array<i32>} : memref<160x512xbf16, #tpu.memory_space<vmem>>, vector<16x1xbf16>,
    %c48_508 = arith.constant 48 : index
    %c0_509 = arith.constant 0 : index
    %446 = vector.load %arg15[%c48_508, %c0_509] : memref<160x512xbf16, #tpu.memory_space<vmem>>, vector<16x16xbf16>
    tpu.vector_store %arg15[%c48_508, %c0_509], %415 {strides = array<i32>} : memref<160x512xbf16, #tpu.memory_space<vmem>>, vector<16x16xbf16>,
    %447 = vector.extract_strided_slice %415 {offsets = [0, 1], sizes = [16, 15], strides = [1, 1]} : vector<16x16xbf16> to vector<16x15xbf16>
    %c64_510 = arith.constant 64 : index
    %c0_511 = arith.constant 0 : index
    %448 = vector.load %arg15[%c64_510, %c0_511] : memref<160x512xbf16, #tpu.memory_space<vmem>>, vector<16x15xbf16>
    tpu.vector_store %arg15[%c64_510, %c0_511], %447 {strides = array<i32>} : memref<160x512xbf16, #tpu.memory_space<vmem>>, vector<16x15xbf16>,
    %cst_512 = arith.constant 0.000000e+00 : bf16
    %449 = vector.broadcast %cst_512 : bf16 to vector<16x1xbf16>
    %c64_513 = arith.constant 64 : index
    %c3_514 = arith.constant 3 : index
    %450 = vector.load %arg15[%c64_513, %c3_514] : memref<160x512xbf16, #tpu.memory_space<vmem>>, vector<16x1xbf16>
    tpu.vector_store %arg15[%c64_513, %c3_514], %449 {strides = array<i32>} : memref<160x512xbf16, #tpu.memory_space<vmem>>, vector<16x1xbf16>,
    %cst_515 = arith.constant 0.000000e+00 : bf16
    %451 = vector.broadcast %cst_515 : bf16 to vector<16x1xbf16>
    %c64_516 = arith.constant 64 : index
    %c7_517 = arith.constant 7 : index
    %452 = vector.load %arg15[%c64_516, %c7_517] : memref<160x512xbf16, #tpu.memory_space<vmem>>, vector<16x1xbf16>
    tpu.vector_store %arg15[%c64_516, %c7_517], %451 {strides = array<i32>} : memref<160x512xbf16, #tpu.memory_space<vmem>>, vector<16x1xbf16>,
    %cst_518 = arith.constant 0.000000e+00 : bf16
    %453 = vector.broadcast %cst_518 : bf16 to vector<16x1xbf16>
    %c64_519 = arith.constant 64 : index
    %c11_520 = arith.constant 11 : index
    %454 = vector.load %arg15[%c64_519, %c11_520] : memref<160x512xbf16, #tpu.memory_space<vmem>>, vector<16x1xbf16>
    tpu.vector_store %arg15[%c64_519, %c11_520], %453 {strides = array<i32>} : memref<160x512xbf16, #tpu.memory_space<vmem>>, vector<16x1xbf16>,
    %cst_521 = arith.constant 0.000000e+00 : bf16
    %455 = vector.broadcast %cst_521 : bf16 to vector<16x1xbf16>
    %c64_522 = arith.constant 64 : index
    %c15_523 = arith.constant 15 : index
    %456 = vector.load %arg15[%c64_522, %c15_523] : memref<160x512xbf16, #tpu.memory_space<vmem>>, vector<16x1xbf16>
    tpu.vector_store %arg15[%c64_522, %c15_523], %455 {strides = array<i32>} : memref<160x512xbf16, #tpu.memory_space<vmem>>, vector<16x1xbf16>,
    %457 = vector.extract_strided_slice %415 {offsets = [0, 2], sizes = [16, 14], strides = [1, 1]} : vector<16x16xbf16> to vector<16x14xbf16>
    %c80_524 = arith.constant 80 : index
    %c0_525 = arith.constant 0 : index
    %458 = vector.load %arg15[%c80_524, %c0_525] : memref<160x512xbf16, #tpu.memory_space<vmem>>, vector<16x14xbf16>
    tpu.vector_store %arg15[%c80_524, %c0_525], %457 {strides = array<i32>} : memref<160x512xbf16, #tpu.memory_space<vmem>>, vector<16x14xbf16>,
    %cst_526 = arith.constant 0.000000e+00 : bf16
    %459 = vector.broadcast %cst_526 : bf16 to vector<16x2xbf16>
    %c80_527 = arith.constant 80 : index
    %c2_528 = arith.constant 2 : index
    %460 = vector.load %arg15[%c80_527, %c2_528] : memref<160x512xbf16, #tpu.memory_space<vmem>>, vector<16x2xbf16>
    tpu.vector_store %arg15[%c80_527, %c2_528], %459 {strides = array<i32>} : memref<160x512xbf16, #tpu.memory_space<vmem>>, vector<16x2xbf16>,
    %cst_529 = arith.constant 0.000000e+00 : bf16
    %461 = vector.broadcast %cst_529 : bf16 to vector<16x2xbf16>
    %c80_530 = arith.constant 80 : index
    %c6_531 = arith.constant 6 : index
    %462 = vector.load %arg15[%c80_530, %c6_531] : memref<160x512xbf16, #tpu.memory_space<vmem>>, vector<16x2xbf16>
    tpu.vector_store %arg15[%c80_530, %c6_531], %461 {strides = array<i32>} : memref<160x512xbf16, #tpu.memory_space<vmem>>, vector<16x2xbf16>,
    %cst_532 = arith.constant 0.000000e+00 : bf16
    %463 = vector.broadcast %cst_532 : bf16 to vector<16x2xbf16>
    %c80_533 = arith.constant 80 : index
    %c10_534 = arith.constant 10 : index
    %464 = vector.load %arg15[%c80_533, %c10_534] : memref<160x512xbf16, #tpu.memory_space<vmem>>, vector<16x2xbf16>
    tpu.vector_store %arg15[%c80_533, %c10_534], %463 {strides = array<i32>} : memref<160x512xbf16, #tpu.memory_space<vmem>>, vector<16x2xbf16>,
    %cst_535 = arith.constant 0.000000e+00 : bf16
    %465 = vector.broadcast %cst_535 : bf16 to vector<16x2xbf16>
    %c80_536 = arith.constant 80 : index
    %c14_537 = arith.constant 14 : index
    %466 = vector.load %arg15[%c80_536, %c14_537] : memref<160x512xbf16, #tpu.memory_space<vmem>>, vector<16x2xbf16>
    tpu.vector_store %arg15[%c80_536, %c14_537], %465 {strides = array<i32>} : memref<160x512xbf16, #tpu.memory_space<vmem>>, vector<16x2xbf16>,
    %467 = vector.extract_strided_slice %415 {offsets = [0, 3], sizes = [16, 13], strides = [1, 1]} : vector<16x16xbf16> to vector<16x13xbf16>
    %c96_538 = arith.constant 96 : index
    %c0_539 = arith.constant 0 : index
    %468 = vector.load %arg15[%c96_538, %c0_539] : memref<160x512xbf16, #tpu.memory_space<vmem>>, vector<16x13xbf16>
    tpu.vector_store %arg15[%c96_538, %c0_539], %467 {strides = array<i32>} : memref<160x512xbf16, #tpu.memory_space<vmem>>, vector<16x13xbf16>,
    %cst_540 = arith.constant 0.000000e+00 : bf16
    %469 = vector.broadcast %cst_540 : bf16 to vector<16x3xbf16>
    %c96_541 = arith.constant 96 : index
    %c1_542 = arith.constant 1 : index
    %470 = vector.load %arg15[%c96_541, %c1_542] : memref<160x512xbf16, #tpu.memory_space<vmem>>, vector<16x3xbf16>
    tpu.vector_store %arg15[%c96_541, %c1_542], %469 {strides = array<i32>} : memref<160x512xbf16, #tpu.memory_space<vmem>>, vector<16x3xbf16>,
    %cst_543 = arith.constant 0.000000e+00 : bf16
    %471 = vector.broadcast %cst_543 : bf16 to vector<16x3xbf16>
    %c96_544 = arith.constant 96 : index
    %c5_545 = arith.constant 5 : index
    %472 = vector.load %arg15[%c96_544, %c5_545] : memref<160x512xbf16, #tpu.memory_space<vmem>>, vector<16x3xbf16>
    tpu.vector_store %arg15[%c96_544, %c5_545], %471 {strides = array<i32>} : memref<160x512xbf16, #tpu.memory_space<vmem>>, vector<16x3xbf16>,
    %cst_546 = arith.constant 0.000000e+00 : bf16
    %473 = vector.broadcast %cst_546 : bf16 to vector<16x3xbf16>
    %c96_547 = arith.constant 96 : index
    %c9 = arith.constant 9 : index
    %474 = vector.load %arg15[%c96_547, %c9] : memref<160x512xbf16, #tpu.memory_space<vmem>>, vector<16x3xbf16>
    tpu.vector_store %arg15[%c96_547, %c9], %473 {strides = array<i32>} : memref<160x512xbf16, #tpu.memory_space<vmem>>, vector<16x3xbf16>,
    %cst_548 = arith.constant 0.000000e+00 : bf16
    %475 = vector.broadcast %cst_548 : bf16 to vector<16x3xbf16>
    %c96_549 = arith.constant 96 : index
    %c13 = arith.constant 13 : index
    %476 = vector.load %arg15[%c96_549, %c13] : memref<160x512xbf16, #tpu.memory_space<vmem>>, vector<16x3xbf16>
    tpu.vector_store %arg15[%c96_549, %c13], %475 {strides = array<i32>} : memref<160x512xbf16, #tpu.memory_space<vmem>>, vector<16x3xbf16>,
    %c0_550 = arith.constant 0 : index
    %c0_551 = arith.constant 0 : index
    %477 = vector.load %arg9[%c0_550, %c0_551] : memref<16x112xbf16, #tpu.memory_space<vmem>>, vector<16x112xbf16>
    %c0_552 = arith.constant 0 : index
    %c0_553 = arith.constant 0 : index
    %478 = vector.load %arg15[%c0_552, %c0_553] : memref<160x512xbf16, #tpu.memory_space<vmem>>, vector<112x16xbf16>
    %cst_554 = arith.constant dense<0.000000e+00> : vector<16x16xf32>
    %479 = tpu.matmul %477, %478, %cst_554 {dimension_numbers = #tpu.dot_dimension_numbers<[1], [0], [0], [1], [0, 0, 1, 1], [], []>} : vector<16x112xbf16>, vector<112x16xbf16>, vector<16x16xf32> -> vector<16x16xf32>
    %480 = vector.broadcast %414 : vector<16x1xf32> to vector<16x16xf32>
    %481 = arith.addf %479, %480 : vector<16x16xf32>
    %cst_555 = arith.constant 0.000000e+00 : f32
    %482 = vector.broadcast %cst_555 : f32 to vector<16x16xf32>
    %483 = arith.maximumf %481, %482 : vector<16x16xf32>
    %c152 = arith.constant 152 : index
    %c0_556 = arith.constant 0 : index
    %484 = vector.load %arg11[%c152, %c0_556] : memref<184x1xf32, #tpu.memory_space<vmem>>, vector<32x1xf32>
    %485 = arith.truncf %483 : vector<16x16xf32> to vector<16x16xbf16>
    %486 = vector.extract_strided_slice %485 {offsets = [0, 0], sizes = [16, 15], strides = [1, 1]} : vector<16x16xbf16> to vector<16x15xbf16>
    %c0_557 = arith.constant 0 : index
    %c1_558 = arith.constant 1 : index
    %487 = vector.load %arg15[%c0_557, %c1_558] : memref<160x512xbf16, #tpu.memory_space<vmem>>, vector<16x15xbf16>
    tpu.vector_store %arg15[%c0_557, %c1_558], %486 {strides = array<i32>} : memref<160x512xbf16, #tpu.memory_space<vmem>>, vector<16x15xbf16>,
    %cst_559 = arith.constant 0.000000e+00 : bf16
    %488 = vector.broadcast %cst_559 : bf16 to vector<16x1xbf16>
    %c0_560 = arith.constant 0 : index
    %c0_561 = arith.constant 0 : index
    %489 = vector.load %arg15[%c0_560, %c0_561] : memref<160x512xbf16, #tpu.memory_space<vmem>>, vector<16x1xbf16>
    tpu.vector_store %arg15[%c0_560, %c0_561], %488 {strides = array<i32>} : memref<160x512xbf16, #tpu.memory_space<vmem>>, vector<16x1xbf16>,
    %cst_562 = arith.constant 0.000000e+00 : bf16
    %490 = vector.broadcast %cst_562 : bf16 to vector<16x1xbf16>
    %c0_563 = arith.constant 0 : index
    %c4_564 = arith.constant 4 : index
    %491 = vector.load %arg15[%c0_563, %c4_564] : memref<160x512xbf16, #tpu.memory_space<vmem>>, vector<16x1xbf16>
    tpu.vector_store %arg15[%c0_563, %c4_564], %490 {strides = array<i32>} : memref<160x512xbf16, #tpu.memory_space<vmem>>, vector<16x1xbf16>,
    %cst_565 = arith.constant 0.000000e+00 : bf16
    %492 = vector.broadcast %cst_565 : bf16 to vector<16x1xbf16>
    %c0_566 = arith.constant 0 : index
    %c8_567 = arith.constant 8 : index
    %493 = vector.load %arg15[%c0_566, %c8_567] : memref<160x512xbf16, #tpu.memory_space<vmem>>, vector<16x1xbf16>
    tpu.vector_store %arg15[%c0_566, %c8_567], %492 {strides = array<i32>} : memref<160x512xbf16, #tpu.memory_space<vmem>>, vector<16x1xbf16>,
    %cst_568 = arith.constant 0.000000e+00 : bf16
    %494 = vector.broadcast %cst_568 : bf16 to vector<16x1xbf16>
    %c0_569 = arith.constant 0 : index
    %c12_570 = arith.constant 12 : index
    %495 = vector.load %arg15[%c0_569, %c12_570] : memref<160x512xbf16, #tpu.memory_space<vmem>>, vector<16x1xbf16>
    tpu.vector_store %arg15[%c0_569, %c12_570], %494 {strides = array<i32>} : memref<160x512xbf16, #tpu.memory_space<vmem>>, vector<16x1xbf16>,
    %c16_571 = arith.constant 16 : index
    %c0_572 = arith.constant 0 : index
    %496 = vector.load %arg15[%c16_571, %c0_572] : memref<160x512xbf16, #tpu.memory_space<vmem>>, vector<16x16xbf16>
    tpu.vector_store %arg15[%c16_571, %c0_572], %485 {strides = array<i32>} : memref<160x512xbf16, #tpu.memory_space<vmem>>, vector<16x16xbf16>,
    %497 = vector.extract_strided_slice %485 {offsets = [0, 1], sizes = [16, 15], strides = [1, 1]} : vector<16x16xbf16> to vector<16x15xbf16>
    %c32_573 = arith.constant 32 : index
    %c0_574 = arith.constant 0 : index
    %498 = vector.load %arg15[%c32_573, %c0_574] : memref<160x512xbf16, #tpu.memory_space<vmem>>, vector<16x15xbf16>
    tpu.vector_store %arg15[%c32_573, %c0_574], %497 {strides = array<i32>} : memref<160x512xbf16, #tpu.memory_space<vmem>>, vector<16x15xbf16>,
    %cst_575 = arith.constant 0.000000e+00 : bf16
    %499 = vector.broadcast %cst_575 : bf16 to vector<16x1xbf16>
    %c32_576 = arith.constant 32 : index
    %c3_577 = arith.constant 3 : index
    %500 = vector.load %arg15[%c32_576, %c3_577] : memref<160x512xbf16, #tpu.memory_space<vmem>>, vector<16x1xbf16>
    tpu.vector_store %arg15[%c32_576, %c3_577], %499 {strides = array<i32>} : memref<160x512xbf16, #tpu.memory_space<vmem>>, vector<16x1xbf16>,
    %cst_578 = arith.constant 0.000000e+00 : bf16
    %501 = vector.broadcast %cst_578 : bf16 to vector<16x1xbf16>
    %c32_579 = arith.constant 32 : index
    %c7_580 = arith.constant 7 : index
    %502 = vector.load %arg15[%c32_579, %c7_580] : memref<160x512xbf16, #tpu.memory_space<vmem>>, vector<16x1xbf16>
    tpu.vector_store %arg15[%c32_579, %c7_580], %501 {strides = array<i32>} : memref<160x512xbf16, #tpu.memory_space<vmem>>, vector<16x1xbf16>,
    %cst_581 = arith.constant 0.000000e+00 : bf16
    %503 = vector.broadcast %cst_581 : bf16 to vector<16x1xbf16>
    %c32_582 = arith.constant 32 : index
    %c11_583 = arith.constant 11 : index
    %504 = vector.load %arg15[%c32_582, %c11_583] : memref<160x512xbf16, #tpu.memory_space<vmem>>, vector<16x1xbf16>
    tpu.vector_store %arg15[%c32_582, %c11_583], %503 {strides = array<i32>} : memref<160x512xbf16, #tpu.memory_space<vmem>>, vector<16x1xbf16>,
    %cst_584 = arith.constant 0.000000e+00 : bf16
    %505 = vector.broadcast %cst_584 : bf16 to vector<16x1xbf16>
    %c32_585 = arith.constant 32 : index
    %c15_586 = arith.constant 15 : index
    %506 = vector.load %arg15[%c32_585, %c15_586] : memref<160x512xbf16, #tpu.memory_space<vmem>>, vector<16x1xbf16>
    tpu.vector_store %arg15[%c32_585, %c15_586], %505 {strides = array<i32>} : memref<160x512xbf16, #tpu.memory_space<vmem>>, vector<16x1xbf16>,
    %c0_587 = arith.constant 0 : index
    %c0_588 = arith.constant 0 : index
    %507 = vector.load %arg10[%c0_587, %c0_588] : memref<32x48xbf16, #tpu.memory_space<vmem>>, vector<32x48xbf16>
    %c0_589 = arith.constant 0 : index
    %c0_590 = arith.constant 0 : index
    %508 = vector.load %arg15[%c0_589, %c0_590] : memref<160x512xbf16, #tpu.memory_space<vmem>>, vector<48x16xbf16>
    %cst_591 = arith.constant dense<0.000000e+00> : vector<32x16xf32>
    %509 = tpu.matmul %507, %508, %cst_591 {dimension_numbers = #tpu.dot_dimension_numbers<[1], [0], [0], [1], [0, 0, 1, 1], [], []>} : vector<32x48xbf16>, vector<48x16xbf16>, vector<32x16xf32> -> vector<32x16xf32>
    %510 = vector.broadcast %484 : vector<32x1xf32> to vector<32x16xf32>
    %511 = arith.addf %509, %510 : vector<32x16xf32>
    %cst_592 = arith.constant 0.000000e+00 : f32
    %512 = vector.broadcast %cst_592 : f32 to vector<32x16xf32>
    %513 = arith.maximumf %511, %512 : vector<32x16xf32>
    %514 = arith.addf %513, %384 : vector<32x16xf32>
    %c0_593 = arith.constant 0 : index
    %c0_594 = arith.constant 0 : index
    %c0_595 = arith.constant 0 : index
    %515 = vector.load %arg14[%c0_593, %c0_594, %c0_595] : memref<1x32x16xf32, #tpu.memory_space<vmem>>, vector<1x32x16xf32>
    %516 = vector.shape_cast %515 : vector<1x32x16xf32> to vector<32x16xf32>
    %517 = vector.shape_cast %514 : vector<32x16xf32> to vector<1x32x16xf32>
    tpu.vector_store %arg14[%c0_593, %c0_594, %c0_595], %517 {strides = array<i32>} : memref<1x32x16xf32, #tpu.memory_space<vmem>>, vector<1x32x16xf32>,
    return
  }
  func.func @transform_0(%arg0: i32) -> (i32, i32, i32) {
    %c0_i32 = arith.constant 0 : i32
    %c0_i32_0 = arith.constant 0 : i32
    %c0_i32_1 = arith.constant 0 : i32
    return %arg0, %c0_i32, %c0_i32_0 : i32, i32, i32
  }
  func.func @transform_1(%arg0: i32) -> (i32, i32) {
    %c0_i32 = arith.constant 0 : i32
    %c0_i32_0 = arith.constant 0 : i32
    %c0_i32_1 = arith.constant 0 : i32
    return %c0_i32, %c0_i32_0 : i32, i32
  }
  func.func @transform_2(%arg0: i32) -> (i32, i32) {
    %c0_i32 = arith.constant 0 : i32
    %c0_i32_0 = arith.constant 0 : i32
    %c0_i32_1 = arith.constant 0 : i32
    return %c0_i32, %c0_i32_0 : i32, i32
  }
  func.func @transform_3(%arg0: i32) -> (i32, i32) {
    %c0_i32 = arith.constant 0 : i32
    %c0_i32_0 = arith.constant 0 : i32
    %c0_i32_1 = arith.constant 0 : i32
    return %c0_i32, %c0_i32_0 : i32, i32
  }
  func.func @transform_4(%arg0: i32) -> (i32, i32) {
    %c0_i32 = arith.constant 0 : i32
    %c0_i32_0 = arith.constant 0 : i32
    %c0_i32_1 = arith.constant 0 : i32
    return %c0_i32, %c0_i32_0 : i32, i32
  }
  func.func @transform_5(%arg0: i32) -> (i32, i32) {
    %c0_i32 = arith.constant 0 : i32
    %c0_i32_0 = arith.constant 0 : i32
    %c0_i32_1 = arith.constant 0 : i32
    return %c0_i32, %c0_i32_0 : i32, i32
  }
  func.func @transform_6(%arg0: i32) -> (i32, i32) {
    %c0_i32 = arith.constant 0 : i32
    %c0_i32_0 = arith.constant 0 : i32
    %c0_i32_1 = arith.constant 0 : i32
    return %c0_i32, %c0_i32_0 : i32, i32
  }
  func.func @transform_7(%arg0: i32) -> (i32, i32) {
    %c0_i32 = arith.constant 0 : i32
    %c0_i32_0 = arith.constant 0 : i32
    %c0_i32_1 = arith.constant 0 : i32
    return %c0_i32, %c0_i32_0 : i32, i32
  }
  func.func @transform_8(%arg0: i32) -> (i32, i32) {
    %c0_i32 = arith.constant 0 : i32
    %c0_i32_0 = arith.constant 0 : i32
    %c0_i32_1 = arith.constant 0 : i32
    return %c0_i32, %c0_i32_0 : i32, i32
  }
  func.func @transform_9(%arg0: i32) -> (i32, i32) {
    %c0_i32 = arith.constant 0 : i32
    %c0_i32_0 = arith.constant 0 : i32
    %c0_i32_1 = arith.constant 0 : i32
    return %c0_i32, %c0_i32_0 : i32, i32
  }
  func.func @transform_10(%arg0: i32) -> (i32, i32) {
    %c0_i32 = arith.constant 0 : i32
    %c0_i32_0 = arith.constant 0 : i32
    %c0_i32_1 = arith.constant 0 : i32
    return %c0_i32, %c0_i32_0 : i32, i32
  }
  func.func @transform_11(%arg0: i32) -> (i32, i32) {
    %c0_i32 = arith.constant 0 : i32
    %c0_i32_0 = arith.constant 0 : i32
    %c0_i32_1 = arith.constant 0 : i32
    return %c0_i32, %c0_i32_0 : i32, i32
  }
  func.func @transform_12(%arg0: i32) -> (i32, i32) {
    %c0_i32 = arith.constant 0 : i32
    %c0_i32_0 = arith.constant 0 : i32
    %c0_i32_1 = arith.constant 0 : i32
    return %c0_i32, %c0_i32_0 : i32, i32
  }
  func.func @transform_13(%arg0: i32) -> (i32, i32, i32) {
    %c0_i32 = arith.constant 0 : i32
    %c0_i32_0 = arith.constant 0 : i32
    %c0_i32_1 = arith.constant 0 : i32
    return %arg0, %c0_i32, %c0_i32_0 : i32, i32, i32
  }
}

</mosaic_0001>

<llo_original>
// kernel: tpu_custom_call.1
$region0: #{tpu_custom_call.1}
  #allocation0 [shape = 'u32[]', space=smem, size = 0x4, offset = 0x4, fixed_abs, tag = 'smem constant byte address 0x4 - core index']
  #allocation1 [shape = 'u32[144,128]{1,0:T(1,128)}', space=vmem, size = 0x12000, scoped, tag = 'internal scratch']
  #allocation2 [shape = 'bf16[160,512]{1,0:T(16,128)(2,1)}', space=vmem, size = 0x28000, scoped, tag = 'scratch operand']
  %s0 = inlined_call_operand.vmem [shape: bf16[2,8,400], index: 0, kind: input, shape index: {}]
  %s1 = inlined_call_operand.vmem [shape: bf16[8,88], index: 1, kind: input, shape index: {}]
  %s2 = inlined_call_operand.vmem [shape: bf16[32,72], index: 2, kind: input, shape index: {}]
  %s3 = inlined_call_operand.vmem [shape: bf16[8,24], index: 3, kind: input, shape index: {}]
  %s4 = inlined_call_operand.vmem [shape: bf16[8,56], index: 4, kind: input, shape index: {}]
  %s5 = inlined_call_operand.vmem [shape: bf16[32,24], index: 5, kind: input, shape index: {}]
  %s6 = inlined_call_operand.vmem [shape: bf16[32,160], index: 6, kind: input, shape index: {}]
  %s7 = inlined_call_operand.vmem [shape: bf16[16,96], index: 7, kind: input, shape index: {}]
  %s8 = inlined_call_operand.vmem [shape: bf16[16,112], index: 8, kind: input, shape index: {}]
  %s9 = inlined_call_operand.vmem [shape: bf16[32,48], index: 9, kind: input, shape index: {}]
  %s10 = inlined_call_operand.vmem [shape: f32[184,1], index: 10, kind: input, shape index: {}]
  %s11 = inlined_call_operand.vmem [shape: bf16[396,80], index: 11, kind: input, shape index: {}]
  %s12 = inlined_call_operand.vmem [shape: bf16[76,16], index: 12, kind: input, shape index: {}]
  %s13 = inlined_call_operand.vmem [shape: f32[2,32,16], index: 13, kind: output, shape index: {}]
  %s14 = sld [smem:[#allocation0]]
  $region85: #{tpu_custom_call.1} parent=0
    _
  %s16 = ssub.s32 1, %s14
  %s17 = scalar_select 0, %s16, %s14
  loop: start=0, step=1, limit=4
  $region2: #{tpu_custom_call.1} parent=0 // loop_pre_header
    _
  $region3: #{tpu_custom_call.1} parent=0 // loop_header
    %s19 = sphi 0, %s23
    %p20 = scmp.ge.s32.totalorder %s19, 4
    %s29 = sphi 0, %s31
    %s32 = sphi 0, %s29
    %s33 = sphi 0, %s32
    %s49 = sphi 0, %s33
    %s53 = sphi 0, %s53
    %s55 = sphi 0, %s53
    %s56 = sphi 0, %s55
    %s70 = sphi 0, %s56
    %s74 = sphi 0, %s74
    %s76 = sphi 0, %s74
    %s77 = sphi 0, %s76
    %s91 = sphi 0, %s77
    %s95 = sphi 0, %s95
    %s97 = sphi 0, %s95
    %s98 = sphi 0, %s97
    %s112 = sphi 0, %s98
    %s116 = sphi 0, %s116
    %s118 = sphi 0, %s116
    %s119 = sphi 0, %s118
    %s133 = sphi 0, %s119
    %s137 = sphi 0, %s137
    %s139 = sphi 0, %s137
    %s140 = sphi 0, %s139
    %s154 = sphi 0, %s140
    %s158 = sphi 0, %s158
    %s160 = sphi 0, %s158
    %s161 = sphi 0, %s160
    %s175 = sphi 0, %s161
    %s179 = sphi 0, %s179
    %s181 = sphi 0, %s179
    %s182 = sphi 0, %s181
    %s196 = sphi 0, %s182
    %s200 = sphi 0, %s200
    %s202 = sphi 0, %s200
    %s203 = sphi 0, %s202
    %s217 = sphi 0, %s203
    %s221 = sphi 0, %s221
    %s223 = sphi 0, %s221
    %s224 = sphi 0, %s223
    %s238 = sphi 0, %s224
    %s242 = sphi 0, %s242
    %s244 = sphi 0, %s242
    %s245 = sphi 0, %s244
    %s259 = sphi 0, %s245
    %s263 = sphi 0, %s263
    %s265 = sphi 0, %s263
    %s266 = sphi 0, %s265
    %s280 = sphi 0, %s266
    %s284 = sphi 0, %s284
    %s286 = sphi 0, %s284
    %s287 = sphi 0, %s286
    %s301 = sphi 0, %s287
    %s307 = sphi 0, %s309
    %s310 = sphi 0, %s307
    %s311 = sphi 0, %s310
    %s327 = sphi 0, %s311
  $region4: #{tpu_custom_call.1} parent=0 // loop_header_branch
    %22 = sbr.rel (%p20) target = $region8
  $region5: #{tpu_custom_call.1} parent=0 // loop_body
    %s24 = ssub.s32 %s19, 1
    %s25 = ssub.s32 %s19, 2
    %s26 = sadd.s32 %s19, 1
    %s27 = ssub.s32 %s19, %s26
    %p28 = scmp.eq.s32.totalorder %s27, 0
    %s30 = sadd.s32 %s29, 1
    %s31 = scalar_select %p28, %s29, %s30
    %p34 = pneg %p28
    %p35 = scmp.eq.s32.totalorder %s19, 1
    %p36 = por %p34, %p35
    %p37 = scmp.ne.s32.totalorder %s29, %s32
    %p38 = scmp.eq.s32.totalorder %s19, 0
    %p39 = por %p37, %p38
    %p40 = scmp.ne.s32.totalorder %s29, %s32
    %p41 = scmp.eq.s32.totalorder %s24, 1
    %p42 = por %p40, %p41
    %p43 = scmp.ne.s32.totalorder %s32, %s33
    %p44 = scmp.eq.s32.totalorder %s24, 0
    %p45 = por %p43, %p44
    %p46 = scmp.ne.s32.totalorder %s32, %s33
    %p47 = scmp.eq.s32.totalorder %s25, 1
    %p48 = por %p46, %p47
    %p50 = scmp.ne.s32.totalorder %s33, %s49
    %p51 = scmp.eq.s32.totalorder %s25, 0
    %p52 = por %p50, %p51
    %s54 = sadd.s32 %s53, 1
    %p57 = scmp.eq.s32.totalorder %s19, 1
    %p58 = scmp.ne.s32.totalorder %s53, %s55
    %p59 = scmp.eq.s32.totalorder %s19, 0
    %p60 = por %p58, %p59
    %p61 = scmp.ne.s32.totalorder %s53, %s55
    %p62 = scmp.eq.s32.totalorder %s24, 1
    %p63 = por %p61, %p62
    %p64 = scmp.ne.s32.totalorder %s55, %s56
    %p65 = scmp.eq.s32.totalorder %s24, 0
    %p66 = por %p64, %p65
    %p67 = scmp.ne.s32.totalorder %s55, %s56
    %p68 = scmp.eq.s32.totalorder %s25, 1
    %p69 = por %p67, %p68
    %p71 = scmp.ne.s32.totalorder %s56, %s70
    %p72 = scmp.eq.s32.totalorder %s25, 0
    %p73 = por %p71, %p72
    %s75 = sadd.s32 %s74, 1
    %p78 = scmp.eq.s32.totalorder %s19, 1
    %p79 = scmp.ne.s32.totalorder %s74, %s76
    %p80 = scmp.eq.s32.totalorder %s19, 0
    %p81 = por %p79, %p80
    %p82 = scmp.ne.s32.totalorder %s74, %s76
    %p83 = scmp.eq.s32.totalorder %s24, 1
    %p84 = por %p82, %p83
    %p85 = scmp.ne.s32.totalorder %s76, %s77
    %p86 = scmp.eq.s32.totalorder %s24, 0
    %p87 = por %p85, %p86
    %p88 = scmp.ne.s32.totalorder %s76, %s77
    %p89 = scmp.eq.s32.totalorder %s25, 1
    %p90 = por %p88, %p89
    %p92 = scmp.ne.s32.totalorder %s77, %s91
    %p93 = scmp.eq.s32.totalorder %s25, 0
    %p94 = por %p92, %p93
    %s96 = sadd.s32 %s95, 1
    %p99 = scmp.eq.s32.totalorder %s19, 1
    %p100 = scmp.ne.s32.totalorder %s95, %s97
    %p101 = scmp.eq.s32.totalorder %s19, 0
    %p102 = por %p100, %p101
    %p103 = scmp.ne.s32.totalorder %s95, %s97
    %p104 = scmp.eq.s32.totalorder %s24, 1
    %p105 = por %p103, %p104
    %p106 = scmp.ne.s32.totalorder %s97, %s98
    %p107 = scmp.eq.s32.totalorder %s24, 0
    %p108 = por %p106, %p107
    %p109 = scmp.ne.s32.totalorder %s97, %s98
    %p110 = scmp.eq.s32.totalorder %s25, 1
    %p111 = por %p109, %p110
    %p113 = scmp.ne.s32.totalorder %s98, %s112
    %p114 = scmp.eq.s32.totalorder %s25, 0
    %p115 = por %p113, %p114
    %s117 = sadd.s32 %s116, 1
    %p120 = scmp.eq.s32.totalorder %s19, 1
    %p121 = scmp.ne.s32.totalorder %s116, %s118
    %p122 = scmp.eq.s32.totalorder %s19, 0
    %p123 = por %p121, %p122
    %p124 = scmp.ne.s32.totalorder %s116, %s118
    %p125 = scmp.eq.s32.totalorder %s24, 1
    %p126 = por %p124, %p125
    %p127 = scmp.ne.s32.totalorder %s118, %s119
    %p128 = scmp.eq.s32.totalorder %s24, 0
    %p129 = por %p127, %p128
    %p130 = scmp.ne.s32.totalorder %s118, %s119
    %p131 = scmp.eq.s32.totalorder %s25, 1
    %p132 = por %p130, %p131
    %p134 = scmp.ne.s32.totalorder %s119, %s133
    %p135 = scmp.eq.s32.totalorder %s25, 0
    %p136 = por %p134, %p135
    %s138 = sadd.s32 %s137, 1
    %p141 = scmp.eq.s32.totalorder %s19, 1
    %p142 = scmp.ne.s32.totalorder %s137, %s139
    %p143 = scmp.eq.s32.totalorder %s19, 0
    %p144 = por %p142, %p143
    %p145 = scmp.ne.s32.totalorder %s137, %s139
    %p146 = scmp.eq.s32.totalorder %s24, 1
    %p147 = por %p145, %p146
    %p148 = scmp.ne.s32.totalorder %s139, %s140
    %p149 = scmp.eq.s32.totalorder %s24, 0
    %p150 = por %p148, %p149
    %p151 = scmp.ne.s32.totalorder %s139, %s140
    %p152 = scmp.eq.s32.totalorder %s25, 1
    %p153 = por %p151, %p152
    %p155 = scmp.ne.s32.totalorder %s140, %s154
    %p156 = scmp.eq.s32.totalorder %s25, 0
    %p157 = por %p155, %p156
    %s159 = sadd.s32 %s158, 1
    %p162 = scmp.eq.s32.totalorder %s19, 1
    %p163 = scmp.ne.s32.totalorder %s158, %s160
    %p164 = scmp.eq.s32.totalorder %s19, 0
    %p165 = por %p163, %p164
    %p166 = scmp.ne.s32.totalorder %s158, %s160
    %p167 = scmp.eq.s32.totalorder %s24, 1
    %p168 = por %p166, %p167
    %p169 = scmp.ne.s32.totalorder %s160, %s161
    %p170 = scmp.eq.s32.totalorder %s24, 0
    %p171 = por %p169, %p170
    %p172 = scmp.ne.s32.totalorder %s160, %s161
    %p173 = scmp.eq.s32.totalorder %s25, 1
    %p174 = por %p172, %p173
    %p176 = scmp.ne.s32.totalorder %s161, %s175
    %p177 = scmp.eq.s32.totalorder %s25, 0
    %p178 = por %p176, %p177
    %s180 = sadd.s32 %s179, 1
    %p183 = scmp.eq.s32.totalorder %s19, 1
    %p184 = scmp.ne.s32.totalorder %s179, %s181
    %p185 = scmp.eq.s32.totalorder %s19, 0
    %p186 = por %p184, %p185
    %p187 = scmp.ne.s32.totalorder %s179, %s181
    %p188 = scmp.eq.s32.totalorder %s24, 1
    %p189 = por %p187, %p188
    %p190 = scmp.ne.s32.totalorder %s181, %s182
    %p191 = scmp.eq.s32.totalorder %s24, 0
    %p192 = por %p190, %p191
    %p193 = scmp.ne.s32.totalorder %s181, %s182
    %p194 = scmp.eq.s32.totalorder %s25, 1
    %p195 = por %p193, %p194
    %p197 = scmp.ne.s32.totalorder %s182, %s196
    %p198 = scmp.eq.s32.totalorder %s25, 0
    %p199 = por %p197, %p198
    %s201 = sadd.s32 %s200, 1
    %p204 = scmp.eq.s32.totalorder %s19, 1
    %p205 = scmp.ne.s32.totalorder %s200, %s202
    %p206 = scmp.eq.s32.totalorder %s19, 0
    %p207 = por %p205, %p206
    %p208 = scmp.ne.s32.totalorder %s200, %s202
    %p209 = scmp.eq.s32.totalorder %s24, 1
    %p210 = por %p208, %p209
    %p211 = scmp.ne.s32.totalorder %s202, %s203
    %p212 = scmp.eq.s32.totalorder %s24, 0
    %p213 = por %p211, %p212
    %p214 = scmp.ne.s32.totalorder %s202, %s203
    %p215 = scmp.eq.s32.totalorder %s25, 1
    %p216 = por %p214, %p215
    %p218 = scmp.ne.s32.totalorder %s203, %s217
    %p219 = scmp.eq.s32.totalorder %s25, 0
    %p220 = por %p218, %p219
    %s222 = sadd.s32 %s221, 1
    %p225 = scmp.eq.s32.totalorder %s19, 1
    %p226 = scmp.ne.s32.totalorder %s221, %s223
    %p227 = scmp.eq.s32.totalorder %s19, 0
    %p228 = por %p226, %p227
    %p229 = scmp.ne.s32.totalorder %s221, %s223
    %p230 = scmp.eq.s32.totalorder %s24, 1
    %p231 = por %p229, %p230
    %p232 = scmp.ne.s32.totalorder %s223, %s224
    %p233 = scmp.eq.s32.totalorder %s24, 0
    %p234 = por %p232, %p233
    %p235 = scmp.ne.s32.totalorder %s223, %s224
    %p236 = scmp.eq.s32.totalorder %s25, 1
    %p237 = por %p235, %p236
    %p239 = scmp.ne.s32.totalorder %s224, %s238
    %p240 = scmp.eq.s32.totalorder %s25, 0
    %p241 = por %p239, %p240
    %s243 = sadd.s32 %s242, 1
    %p246 = scmp.eq.s32.totalorder %s19, 1
    %p247 = scmp.ne.s32.totalorder %s242, %s244
    %p248 = scmp.eq.s32.totalorder %s19, 0
    %p249 = por %p247, %p248
    %p250 = scmp.ne.s32.totalorder %s242, %s244
    %p251 = scmp.eq.s32.totalorder %s24, 1
    %p252 = por %p250, %p251
    %p253 = scmp.ne.s32.totalorder %s244, %s245
    %p254 = scmp.eq.s32.totalorder %s24, 0
    %p255 = por %p253, %p254
    %p256 = scmp.ne.s32.totalorder %s244, %s245
    %p257 = scmp.eq.s32.totalorder %s25, 1
    %p258 = por %p256, %p257
    %p260 = scmp.ne.s32.totalorder %s245, %s259
    %p261 = scmp.eq.s32.totalorder %s25, 0
    %p262 = por %p260, %p261
    %s264 = sadd.s32 %s263, 1
    %p267 = scmp.eq.s32.totalorder %s19, 1
    %p268 = scmp.ne.s32.totalorder %s263, %s265
    %p269 = scmp.eq.s32.totalorder %s19, 0
    %p270 = por %p268, %p269
    %p271 = scmp.ne.s32.totalorder %s263, %s265
    %p272 = scmp.eq.s32.totalorder %s24, 1
    %p273 = por %p271, %p272
    %p274 = scmp.ne.s32.totalorder %s265, %s266
    %p275 = scmp.eq.s32.totalorder %s24, 0
    %p276 = por %p274, %p275
    %p277 = scmp.ne.s32.totalorder %s265, %s266
    %p278 = scmp.eq.s32.totalorder %s25, 1
    %p279 = por %p277, %p278
    %p281 = scmp.ne.s32.totalorder %s266, %s280
    %p282 = scmp.eq.s32.totalorder %s25, 0
    %p283 = por %p281, %p282
    %s285 = sadd.s32 %s284, 1
    %p288 = scmp.eq.s32.totalorder %s19, 1
    %p289 = scmp.ne.s32.totalorder %s284, %s286
    %p290 = scmp.eq.s32.totalorder %s19, 0
    %p291 = por %p289, %p290
    %p292 = scmp.ne.s32.totalorder %s284, %s286
    %p293 = scmp.eq.s32.totalorder %s24, 1
    %p294 = por %p292, %p293
    %p295 = scmp.ne.s32.totalorder %s286, %s287
    %p296 = scmp.eq.s32.totalorder %s24, 0
    %p297 = por %p295, %p296
    %p298 = scmp.ne.s32.totalorder %s286, %s287
    %p299 = scmp.eq.s32.totalorder %s25, 1
    %p300 = por %p298, %p299
    %p302 = scmp.ne.s32.totalorder %s287, %s301
    %p303 = scmp.eq.s32.totalorder %s25, 0
    %p304 = por %p302, %p303
    %s305 = ssub.s32 %s19, %s26
    %p306 = scmp.eq.s32.totalorder %s305, 0
    %s308 = sadd.s32 %s307, 1
    %s309 = scalar_select %p306, %s307, %s308
    %p312 = pneg %p306
    %p313 = scmp.eq.s32.totalorder %s19, 1
    %p314 = por %p312, %p313
    %p315 = scmp.ne.s32.totalorder %s307, %s310
    %p316 = scmp.eq.s32.totalorder %s19, 0
    %p317 = por %p315, %p316
    %p318 = scmp.ne.s32.totalorder %s307, %s310
    %p319 = scmp.eq.s32.totalorder %s24, 1
    %p320 = por %p318, %p319
    %p321 = scmp.ne.s32.totalorder %s310, %s311
    %p322 = scmp.eq.s32.totalorder %s24, 0
    %p323 = por %p321, %p322
    %p324 = scmp.ne.s32.totalorder %s310, %s311
    %p325 = scmp.eq.s32.totalorder %s25, 1
    %p326 = por %p324, %p325
    %p328 = scmp.ne.s32.totalorder %s311, %s327
    %p329 = scmp.eq.s32.totalorder %s25, 0
    %p330 = por %p328, %p329
    %p331 = scmp.le.s32.totalorder 1, %s19
    %p332 = scmp.lt.s32.totalorder %s19, 3
    %p333 = pnand %p331, %p332
    %p334 = pneg %p333
    // Predicated region
    $region9: #{tpu_custom_call.1} parent=5 // pred_check
      _
    $region10: #{tpu_custom_call.1} parent=5 // pred_check_branch
      %336 = sbr.rel (%p333) target = $region12
    $region11: #{tpu_custom_call.1} parent=5 // pred_region
      %s337 = ssub.s32 %s19, 1
      // Predicated region
      $region13: #{tpu_custom_call.1} parent=11 // pred_check
        %p338 = pneg %p66
      $region14: #{tpu_custom_call.1} parent=11 // pred_check_branch
        %340 = sbr.rel (%p338) target = $region16
      $region15: #{tpu_custom_call.1} parent=11 // pred_region
        _
      $region16: #{tpu_custom_call.1} parent=11 // pred_fallthru
        _
      // Predicated region
      $region17: #{tpu_custom_call.1} parent=11 // pred_check
        %p341 = pneg %p87
      $region18: #{tpu_custom_call.1} parent=11 // pred_check_branch
        %343 = sbr.rel (%p341) target = $region20
      $region19: #{tpu_custom_call.1} parent=11 // pred_region
        _
      $region20: #{tpu_custom_call.1} parent=11 // pred_fallthru
        _
      // Predicated region
      $region21: #{tpu_custom_call.1} parent=11 // pred_check
        %p344 = pneg %p108
      $region22: #{tpu_custom_call.1} parent=11 // pred_check_branch
        %346 = sbr.rel (%p344) target = $region24
      $region23: #{tpu_custom_call.1} parent=11 // pred_region
        _
      $region24: #{tpu_custom_call.1} parent=11 // pred_fallthru
        _
      // Predicated region
      $region25: #{tpu_custom_call.1} parent=11 // pred_check
        %p347 = pneg %p129
      $region26: #{tpu_custom_call.1} parent=11 // pred_check_branch
        %349 = sbr.rel (%p347) target = $region28
      $region27: #{tpu_custom_call.1} parent=11 // pred_region
        _
      $region28: #{tpu_custom_call.1} parent=11 // pred_fallthru
        _
      // Predicated region
      $region29: #{tpu_custom_call.1} parent=11 // pred_check
        %p350 = pneg %p150
      $region30: #{tpu_custom_call.1} parent=11 // pred_check_branch
        %352 = sbr.rel (%p350) target = $region32
      $region31: #{tpu_custom_call.1} parent=11 // pred_region
        _
      $region32: #{tpu_custom_call.1} parent=11 // pred_fallthru
        _
      // Predicated region
      $region33: #{tpu_custom_call.1} parent=11 // pred_check
        %p353 = pneg %p171
      $region34: #{tpu_custom_call.1} parent=11 // pred_check_branch
        %355 = sbr.rel (%p353) target = $region36
      $region35: #{tpu_custom_call.1} parent=11 // pred_region
        _
      $region36: #{tpu_custom_call.1} parent=11 // pred_fallthru
        _
      // Predicated region
      $region37: #{tpu_custom_call.1} parent=11 // pred_check
        %p356 = pneg %p192
      $region38: #{tpu_custom_call.1} parent=11 // pred_check_branch
        %358 = sbr.rel (%p356) target = $region40
      $region39: #{tpu_custom_call.1} parent=11 // pred_region
        _
      $region40: #{tpu_custom_call.1} parent=11 // pred_fallthru
        _
      // Predicated region
      $region41: #{tpu_custom_call.1} parent=11 // pred_check
        %p359 = pneg %p213
      $region42: #{tpu_custom_call.1} parent=11 // pred_check_branch
        %361 = sbr.rel (%p359) target = $region44
      $region43: #{tpu_custom_call.1} parent=11 // pred_region
        _
      $region44: #{tpu_custom_call.1} parent=11 // pred_fallthru
        _
      // Predicated region
      $region45: #{tpu_custom_call.1} parent=11 // pred_check
        %p362 = pneg %p234
      $region46: #{tpu_custom_call.1} parent=11 // pred_check_branch
        %364 = sbr.rel (%p362) target = $region48
      $region47: #{tpu_custom_call.1} parent=11 // pred_region
        _
      $region48: #{tpu_custom_call.1} parent=11 // pred_fallthru
        _
      // Predicated region
      $region49: #{tpu_custom_call.1} parent=11 // pred_check
        %p365 = pneg %p255
      $region50: #{tpu_custom_call.1} parent=11 // pred_check_branch
        %367 = sbr.rel (%p365) target = $region52
      $region51: #{tpu_custom_call.1} parent=11 // pred_region
        _
      $region52: #{tpu_custom_call.1} parent=11 // pred_fallthru
        _
      // Predicated region
      $region53: #{tpu_custom_call.1} parent=11 // pred_check
        %p368 = pneg %p276
      $region54: #{tpu_custom_call.1} parent=11 // pred_check_branch
        %370 = sbr.rel (%p368) target = $region56
      $region55: #{tpu_custom_call.1} parent=11 // pred_region
        _
      $region56: #{tpu_custom_call.1} parent=11 // pred_fallthru
        _
      // Predicated region
      $region57: #{tpu_custom_call.1} parent=11 // pred_check
        %p371 = pneg %p297
      $region58: #{tpu_custom_call.1} parent=11 // pred_check_branch
        %373 = sbr.rel (%p371) target = $region60
      $region59: #{tpu_custom_call.1} parent=11 // pred_region
        _
      $region60: #{tpu_custom_call.1} parent=11 // pred_fallthru
        _
    $region12: #{tpu_custom_call.1} parent=5 // pred_fallthru
      _
    %p374 = scmp.lt.s32.totalorder %s19, 2
    // Predicated region
    $region61: #{tpu_custom_call.1} parent=5 // pred_check
      %p375 = pneg %p374
    $region62: #{tpu_custom_call.1} parent=5 // pred_check_branch
      %377 = sbr.rel (%p375) target = $region64
    $region63: #{tpu_custom_call.1} parent=5 // pred_region
      // Predicated region
      $region65: #{tpu_custom_call.1} parent=63 // pred_check
        %p378 = pneg %p39
      $region66: #{tpu_custom_call.1} parent=63 // pred_check_branch
        %380 = sbr.rel (%p378) target = $region68
      $region67: #{tpu_custom_call.1} parent=63 // pred_region
        %p381 = scmp.lt.s32.totalorder %s19, 1
        %s382 = scalar_select %p381, %s19, 1
        %s383 = smul.addr %s382, 4
        %s384 = smul.addr %s383, 4
        %s385 = scalar_lea.vmem %s0, %s384
      $region68: #{tpu_custom_call.1} parent=63 // pred_fallthru
        _
    $region64: #{tpu_custom_call.1} parent=5 // pred_fallthru
      _
    %p386 = scmp.le.s32.totalorder 1, %s19
    %p387 = scmp.lt.s32.totalorder %s19, 3
    %p388 = pnand %p386, %p387
    %p389 = pneg %p388
    // Predicated region
    $region69: #{tpu_custom_call.1} parent=5 // pred_check
      _
    $region70: #{tpu_custom_call.1} parent=5 // pred_check_branch
      %391 = sbr.rel (%p388) target = $region72
    $region71: #{tpu_custom_call.1} parent=5 // pred_region
      %s392 = ssub.s32 %s19, 1
      %p393 = scmp.lt.s32.totalorder %s24, 1
      %s394 = scalar_select %p393, %s24, 1
      %s395 = smul.addr %s394, 4
      %s396 = smul.addr %s395, 4
      %s397 = scalar_lea.vmem %s0, %s396
      %p398 = pneg %p45
      %p399 = pneg %p42
      %p400 = pneg %p66
      %p401 = pneg %p63
      %p402 = pneg %p87
      %p403 = pneg %p84
      %p404 = pneg %p108
      %p405 = pneg %p105
      %p406 = pneg %p129
      %p407 = pneg %p126
      %p408 = pneg %p150
      %p409 = pneg %p147
      %p410 = pneg %p171
      %p411 = pneg %p168
      %p412 = pneg %p192
      %p413 = pneg %p189
      %p414 = pneg %p213
      %p415 = pneg %p210
      %p416 = pneg %p234
      %p417 = pneg %p231
      %p418 = pneg %p255
      %p419 = pneg %p252
      %p420 = pneg %p276
      %p421 = pneg %p273
      %p422 = pneg %p297
      %p423 = pneg %p294
      %p424 = pneg %p323
      %p425 = pneg %p320
      %p426 = scmp.lt.s32.totalorder %s24, 1
      %s427 = scalar_select %p426, %s24, 1
      %s428 = smul.addr %s427, 4
      %s429 = smul.addr %s428, 8
      %s430 = scalar_lea.vmem %s13, %s429
      %p431 = scmp.lt.s32.totalorder %s24, 1
      %s432 = scalar_select %p431, %s24, 1
      %s433 = smul.addr %s432, 4
      %s434 = smul.addr %s433, 4
      %s435 = scalar_lea.vmem %s0, %s434
      %p436 = scmp.lt.s32.totalorder %s24, 1
      %s437 = scalar_select %p436, %s24, 1
      %s438 = smul.addr %s437, 4
      %s439 = smul.addr %s438, 8
      %s440 = scalar_lea.vmem %s13, %s439
      %v442 = vld [vmem:[%s435] sm:$0xff]
      %v443 = vld [vmem:[%s435 + $0x8] sm:$0xff]
      %v444 = vld [vmem:[%s10] sm:$0xff]
      %v447 = vunpack.c.l.b16 %v442
      %v448 = vunpack.c.h.b16 %v442
      %v449 = vunpack.c.l.b16 %v443
      %v450 = vunpack.c.h.b16 %v443
      %v451 = vpack.c.b16 %v447, %v447
      %v452 = vpack.c.b16 %v448, %v448
      %v453 = vpack.c.b16 %v449, %v449
      %v454 = vpack.c.b16 %v450, %v450
      %455 = vrot.lane.b32.xlu0 %v451, 5
      %v456 = vpop.permute.xlu0 %455
      %457 = vrot.lane.b32.xlu0 %v452, 5
      %v458 = vpop.permute.xlu0 %457
      %459 = vrot.lane.b32.xlu0 %v453, 5
      %v460 = vpop.permute.xlu0 %459
      %461 = vrot.lane.b32.xlu0 %v454, 5
      %v462 = vpop.permute.xlu0 %461
      %vm463 = vcmask 39936
      %v464 = vsel %vm463, %v456, %v458
      %v465 = vsel %vm463, %v458, %v460
      %v466 = vsel %vm463, %v460, %v462
      %vm471 = vcmask 1043496
      %472 = vst.msk [vmem:[#allocation2] sm:$0xf] %vm471, %v456
      %473 = vst [vmem:[#allocation2 + $0x8] sm:$0xf] %v464
      %474 = vst [vmem:[#allocation2 + $0x10] sm:$0xf] %v465
      %vm475 = vcmask 125952
      %476 = vst.msk [vmem:[#allocation2 + $0x18] sm:$0xf] %vm475, %v466
      %vm477 = vcmask 35840
      %478 = vst.msk [vmem:[#allocation2] sm:$0xf] %vm477, 0
      %vm479 = vcmask 855840
      %480 = vst.msk [vmem:[#allocation2] sm:$0xf] %vm479, 0
      %vm481 = vcmask 626240
      %482 = vst.msk [vmem:[#allocation2 + $0x8] sm:$0xf] %vm481, 0
      %vm483 = vcmask 396640
      %484 = vst.msk [vmem:[#allocation2 + $0x10] sm:$0xf] %vm483, 0
      %485 = vrot.lane.b32.xlu0 %v451, 4
      %v486 = vpop.permute.xlu0 %485
      %487 = vrot.lane.b32.xlu0 %v452, 4
      %v488 = vpop.permute.xlu0 %487
      %489 = vrot.lane.b32.xlu0 %v453, 4
      %v490 = vpop.permute.xlu0 %489
      %491 = vrot.lane.b32.xlu0 %v454, 4
      %v492 = vpop.permute.xlu0 %491
      %vm493 = vcmask 31744
      %v494 = vsel %vm493, %v486, %v488
      %v495 = vsel %vm493, %v488, %v490
      %v496 = vsel %vm493, %v490, %v492
      %vm501 = vcmask 1047588
      %502 = vst.msk [vmem:[#allocation2] sm:$0xf0] %vm501, %v486
      %503 = vst [vmem:[#allocation2 + $0x8] sm:$0xf0] %v494
      %504 = vst [vmem:[#allocation2 + $0x10] sm:$0xf0] %v495
      %vm505 = vcmask 130052
      %506 = vst.msk [vmem:[#allocation2 + $0x18] sm:$0xf0] %vm505, %v496
      %vm507 = vcmask 31748
      %508 = vst.msk [vmem:[#allocation2] sm:$0xf0] %vm507, 0
      %vm509 = vcmask 851748
      %510 = vst.msk [vmem:[#allocation2] sm:$0xf0] %vm509, 0
      %vm511 = vcmask 622148
      %512 = vst.msk [vmem:[#allocation2 + $0x8] sm:$0xf0] %vm511, 0
      %vm513 = vcmask 392548
      %514 = vst.msk [vmem:[#allocation2 + $0x10] sm:$0xf0] %vm513, 0
      %515 = vrot.lane.b32.xlu0 %v451, 3
      %v516 = vpop.permute.xlu0 %515
      %517 = vrot.lane.b32.xlu0 %v452, 3
      %v518 = vpop.permute.xlu0 %517
      %519 = vrot.lane.b32.xlu0 %v453, 3
      %v520 = vpop.permute.xlu0 %519
      %521 = vrot.lane.b32.xlu0 %v454, 3
      %v522 = vpop.permute.xlu0 %521
      %vm523 = vcmask 23552
      %v524 = vsel %vm523, %v516, %v518
      %v525 = vsel %vm523, %v518, %v520
      %v526 = vsel %vm523, %v520, %v522
      %vm531 = vcmask 1043480
      %532 = vst.msk [vmem:[#allocation2 + $0x20] sm:$0xf] %vm531, %v516
      %533 = vst [vmem:[#allocation2 + $0x28] sm:$0xf] %v524
      %534 = vst [vmem:[#allocation2 + $0x30] sm:$0xf] %v525
      %535 = vst.msk [vmem:[#allocation2 + $0x38] sm:$0xf] %vm475, %v526
      %vm536 = vcmask 19456
      %537 = vst.msk [vmem:[#allocation2 + $0x20] sm:$0xf] %vm536, 0
      %vm538 = vcmask 839456
      %539 = vst.msk [vmem:[#allocation2 + $0x20] sm:$0xf] %vm538, 0
      %vm540 = vcmask 609856
      %541 = vst.msk [vmem:[#allocation2 + $0x28] sm:$0xf] %vm540, 0
      %vm542 = vcmask 380256
      %543 = vst.msk [vmem:[#allocation2 + $0x30] sm:$0xf] %vm542, 0
      %544 = vrot.lane.b32.xlu0 %v451, 2
      %v545 = vpop.permute.xlu0 %544
      %546 = vrot.lane.b32.xlu0 %v452, 2
      %v547 = vpop.permute.xlu0 %546
      %548 = vrot.lane.b32.xlu0 %v453, 2
      %v549 = vpop.permute.xlu0 %548
      %550 = vrot.lane.b32.xlu0 %v454, 2
      %v551 = vpop.permute.xlu0 %550
      %vm552 = vcmask 15360
      %v553 = vsel %vm552, %v545, %v547
      %v554 = vsel %vm552, %v547, %v549
      %v555 = vsel %vm552, %v549, %v551
      %vm560 = vcmask 1047572
      %561 = vst.msk [vmem:[#allocation2 + $0x20] sm:$0xf0] %vm560, %v545
      %562 = vst [vmem:[#allocation2 + $0x28] sm:$0xf0] %v553
      %563 = vst [vmem:[#allocation2 + $0x30] sm:$0xf0] %v554
      %564 = vst.msk [vmem:[#allocation2 + $0x38] sm:$0xf0] %vm505, %v555
      %vm565 = vcmask 15364
      %566 = vst.msk [vmem:[#allocation2 + $0x20] sm:$0xf0] %vm565, 0
      %vm567 = vcmask 835364
      %568 = vst.msk [vmem:[#allocation2 + $0x20] sm:$0xf0] %vm567, 0
      %vm569 = vcmask 605764
      %570 = vst.msk [vmem:[#allocation2 + $0x28] sm:$0xf0] %vm569, 0
      %vm571 = vcmask 376164
      %572 = vst.msk [vmem:[#allocation2 + $0x30] sm:$0xf0] %vm571, 0
      %573 = vrot.lane.b32.xlu0 %v451, 1
      %v574 = vpop.permute.xlu0 %573
      %575 = vrot.lane.b32.xlu0 %v452, 1
      %v576 = vpop.permute.xlu0 %575
      %577 = vrot.lane.b32.xlu0 %v453, 1
      %v578 = vpop.permute.xlu0 %577
      %579 = vrot.lane.b32.xlu0 %v454, 1
      %v580 = vpop.permute.xlu0 %579
      %vm581 = vcmask 7168
      %v582 = vsel %vm581, %v574, %v576
      %v583 = vsel %vm581, %v576, %v578
      %v584 = vsel %vm581, %v578, %v580
      %vm589 = vcmask 1043464
      %590 = vst.msk [vmem:[#allocation2 + $0x40] sm:$0xf] %vm589, %v574
      %591 = vst [vmem:[#allocation2 + $0x48] sm:$0xf] %v582
      %592 = vst [vmem:[#allocation2 + $0x50] sm:$0xf] %v583
      %593 = vst.msk [vmem:[#allocation2 + $0x58] sm:$0xf] %vm475, %v584
      %vm594 = vcmask 3072
      %595 = vst.msk [vmem:[#allocation2 + $0x40] sm:$0xf] %vm594, 0
      %vm596 = vcmask 823072
      %597 = vst.msk [vmem:[#allocation2 + $0x40] sm:$0xf] %vm596, 0
      %vm598 = vcmask 593472
      %599 = vst.msk [vmem:[#allocation2 + $0x48] sm:$0xf] %vm598, 0
      %vm600 = vcmask 363872
      %601 = vst.msk [vmem:[#allocation2 + $0x50] sm:$0xf] %vm600, 0
      %606 = vst [vmem:[#allocation2 + $0x40] sm:$0xf0] %v451
      %607 = vst [vmem:[#allocation2 + $0x48] sm:$0xf0] %v452
      %608 = vst [vmem:[#allocation2 + $0x50] sm:$0xf0] %v453
      %609 = vst.msk [vmem:[#allocation2 + $0x58] sm:$0xf0] %vm505, %v454
      %610 = vrot.lane.b32.xlu0 %v451, 127
      %v611 = vpop.permute.xlu0 %610
      %612 = vrot.lane.b32.xlu0 %v452, 127
      %v613 = vpop.permute.xlu0 %612
      %614 = vrot.lane.b32.xlu0 %v453, 127
      %v615 = vpop.permute.xlu0 %614
      %616 = vrot.lane.b32.xlu0 %v454, 127
      %v617 = vpop.permute.xlu0 %616
      %vm618 = vcmask 1039360
      %v619 = vsel %vm618, %v611, %v613
      %v620 = vsel %vm618, %v613, %v615
      %v621 = vsel %vm618, %v615, %v617
      %626 = vst [vmem:[#allocation2 + $0x60] sm:$0xf] %v619
      %627 = vst [vmem:[#allocation2 + $0x68] sm:$0xf] %v620
      %628 = vst [vmem:[#allocation2 + $0x70] sm:$0xf] %v621
      %vm629 = vcmask 117760
      %630 = vst.msk [vmem:[#allocation2 + $0x78] sm:$0xf] %vm629, %v617
      %vm631 = vcmask 814872
      %632 = vst.msk [vmem:[#allocation2 + $0x60] sm:$0xf] %vm631, 0
      %vm633 = vcmask 585272
      %634 = vst.msk [vmem:[#allocation2 + $0x68] sm:$0xf] %vm633, 0
      %vm635 = vcmask 355672
      %636 = vst.msk [vmem:[#allocation2 + $0x70] sm:$0xf] %vm635, 0
      %vm637 = vcmask 126072
      %638 = vst.msk [vmem:[#allocation2 + $0x78] sm:$0xf] %vm637, 0
      %639 = vrot.lane.b32.xlu0 %v451, 126
      %v640 = vpop.permute.xlu0 %639
      %641 = vrot.lane.b32.xlu0 %v452, 126
      %v642 = vpop.permute.xlu0 %641
      %643 = vrot.lane.b32.xlu0 %v453, 126
      %v644 = vpop.permute.xlu0 %643
      %645 = vrot.lane.b32.xlu0 %v454, 126
      %v646 = vpop.permute.xlu0 %645
      %vm647 = vcmask 1031168
      %v648 = vsel %vm647, %v640, %v642
      %v649 = vsel %vm647, %v642, %v644
      %v650 = vsel %vm647, %v644, %v646
      %655 = vst [vmem:[#allocation2 + $0x60] sm:$0xf0] %v648
      %656 = vst [vmem:[#allocation2 + $0x68] sm:$0xf0] %v649
      %657 = vst [vmem:[#allocation2 + $0x70] sm:$0xf0] %v650
      %vm658 = vcmask 113668
      %659 = vst.msk [vmem:[#allocation2 + $0x78] sm:$0xf0] %vm658, %v646
      %vm660 = vcmask 818964
      %661 = vst.msk [vmem:[#allocation2 + $0x60] sm:$0xf0] %vm660, 0
      %vm662 = vcmask 589364
      %663 = vst.msk [vmem:[#allocation2 + $0x68] sm:$0xf0] %vm662, 0
      %vm664 = vcmask 359764
      %665 = vst.msk [vmem:[#allocation2 + $0x70] sm:$0xf0] %vm664, 0
      %vm666 = vcmask 130164
      %667 = vst.msk [vmem:[#allocation2 + $0x78] sm:$0xf0] %vm666, 0
      %668 = vrot.lane.b32.xlu0 %v451, 125
      %v669 = vpop.permute.xlu0 %668
      %670 = vrot.lane.b32.xlu0 %v452, 125
      %v671 = vpop.permute.xlu0 %670
      %672 = vrot.lane.b32.xlu0 %v453, 125
      %v673 = vpop.permute.xlu0 %672
      %674 = vrot.lane.b32.xlu0 %v454, 125
      %v675 = vpop.permute.xlu0 %674
      %vm676 = vcmask 1022976
      %v677 = vsel %vm676, %v669, %v671
      %v678 = vsel %vm676, %v671, %v673
      %v679 = vsel %vm676, %v673, %v675
      %684 = vst [vmem:[#allocation2 + $0x80] sm:$0xf] %v677
      %685 = vst [vmem:[#allocation2 + $0x88] sm:$0xf] %v678
      %686 = vst [vmem:[#allocation2 + $0x90] sm:$0xf] %v679
      %vm687 = vcmask 101376
      %688 = vst.msk [vmem:[#allocation2 + $0x98] sm:$0xf] %vm687, %v675
      %vm689 = vcmask 814856
      %690 = vst.msk [vmem:[#allocation2 + $0x80] sm:$0xf] %vm689, 0
      %vm691 = vcmask 585256
      %692 = vst.msk [vmem:[#allocation2 + $0x88] sm:$0xf] %vm691, 0
      %vm693 = vcmask 355656
      %694 = vst.msk [vmem:[#allocation2 + $0x90] sm:$0xf] %vm693, 0
      %vm695 = vcmask 126056
      %696 = vst.msk [vmem:[#allocation2 + $0x98] sm:$0xf] %vm695, 0
      %697 = vrot.lane.b32.xlu0 %v451, 124
      %v698 = vpop.permute.xlu0 %697
      %699 = vrot.lane.b32.xlu0 %v452, 124
      %v700 = vpop.permute.xlu0 %699
      %701 = vrot.lane.b32.xlu0 %v453, 124
      %v702 = vpop.permute.xlu0 %701
      %703 = vrot.lane.b32.xlu0 %v454, 124
      %v704 = vpop.permute.xlu0 %703
      %vm705 = vcmask 1014784
      %v706 = vsel %vm705, %v698, %v700
      %v707 = vsel %vm705, %v700, %v702
      %v708 = vsel %vm705, %v702, %v704
      %713 = vst [vmem:[#allocation2 + $0x80] sm:$0xf0] %v706
      %714 = vst [vmem:[#allocation2 + $0x88] sm:$0xf0] %v707
      %715 = vst [vmem:[#allocation2 + $0x90] sm:$0xf0] %v708
      %vm716 = vcmask 97284
      %717 = vst.msk [vmem:[#allocation2 + $0x98] sm:$0xf0] %vm716, %v704
      %vm718 = vcmask 818948
      %719 = vst.msk [vmem:[#allocation2 + $0x80] sm:$0xf0] %vm718, 0
      %vm720 = vcmask 589348
      %721 = vst.msk [vmem:[#allocation2 + $0x88] sm:$0xf0] %vm720, 0
      %vm722 = vcmask 359748
      %723 = vst.msk [vmem:[#allocation2 + $0x90] sm:$0xf0] %vm722, 0
      %vm724 = vcmask 130148
      %725 = vst.msk [vmem:[#allocation2 + $0x98] sm:$0xf0] %vm724, 0
      %726 = vrot.lane.b32.xlu0 %v451, 123
      %v727 = vpop.permute.xlu0 %726
      %728 = vrot.lane.b32.xlu0 %v452, 123
      %v729 = vpop.permute.xlu0 %728
      %730 = vrot.lane.b32.xlu0 %v453, 123
      %v731 = vpop.permute.xlu0 %730
      %732 = vrot.lane.b32.xlu0 %v454, 123
      %v733 = vpop.permute.xlu0 %732
      %vm734 = vcmask 1006592
      %v735 = vsel %vm734, %v727, %v729
      %v736 = vsel %vm734, %v729, %v731
      %v737 = vsel %vm734, %v731, %v733
      %742 = vst [vmem:[#allocation2 + $0xa0] sm:$0xf] %v735
      %743 = vst [vmem:[#allocation2 + $0xa8] sm:$0xf] %v736
      %744 = vst [vmem:[#allocation2 + $0xb0] sm:$0xf] %v737
      %vm745 = vcmask 84992
      %746 = vst.msk [vmem:[#allocation2 + $0xb8] sm:$0xf] %vm745, %v733
      %vm747 = vcmask 814840
      %748 = vst.msk [vmem:[#allocation2 + $0xa0] sm:$0xf] %vm747, 0
      %vm749 = vcmask 585240
      %750 = vst.msk [vmem:[#allocation2 + $0xa8] sm:$0xf] %vm749, 0
      %vm751 = vcmask 355640
      %752 = vst.msk [vmem:[#allocation2 + $0xb0] sm:$0xf] %vm751, 0
      %vm753 = vcmask 126040
      %754 = vst.msk [vmem:[#allocation2 + $0xb8] sm:$0xf] %vm753, 0
      %v755 = vld [vmem:[%s1] sm:$0xf]
      %v756 = vld [vmem:[#allocation2] sm:$0xff]
      %v757 = vld [vmem:[#allocation2 + $0x8] sm:$0xff]
      %v758 = vld [vmem:[#allocation2 + $0x10] sm:$0xff]
      %v759 = vld [vmem:[#allocation2 + $0x18] sm:$0xff]
      %v760 = vld [vmem:[#allocation2 + $0x20] sm:$0xff]
      %v761 = vld [vmem:[#allocation2 + $0x28] sm:$0xff]
      %v762 = vld [vmem:[#allocation2 + $0x30] sm:$0xff]
      %v763 = vld [vmem:[#allocation2 + $0x38] sm:$0xff]
      %v764 = vld [vmem:[#allocation2 + $0x40] sm:$0xff]
      %v765 = vld [vmem:[#allocation2 + $0x48] sm:$0xff]
      %v766 = vld [vmem:[#allocation2 + $0x50] sm:$0xff]
      %v767 = vld [vmem:[#allocation2 + $0x58] sm:$0xff]
      %v768 = vld [vmem:[#allocation2 + $0x60] sm:$0xff]
      %v769 = vld [vmem:[#allocation2 + $0x68] sm:$0xff]
      %v770 = vld [vmem:[#allocation2 + $0x70] sm:$0xff]
      %v771 = vld [vmem:[#allocation2 + $0x78] sm:$0xff]
      %v772 = vld [vmem:[#allocation2 + $0x80] sm:$0xff]
      %v773 = vld [vmem:[#allocation2 + $0x88] sm:$0xff]
      %v774 = vld [vmem:[#allocation2 + $0x90] sm:$0xff]
      %v775 = vld [vmem:[#allocation2 + $0x98] sm:$0xff]
      %v776 = vld [vmem:[#allocation2 + $0xa0] sm:$0xf]
      %v777 = vld [vmem:[#allocation2 + $0xa8] sm:$0xf]
      %v778 = vld [vmem:[#allocation2 + $0xb0] sm:$0xf]
      %v779 = vld [vmem:[#allocation2 + $0xb8] sm:$0xf]
      %781 = vset.pattern.permute.xlu0 0
      %782 = vperm.xlu0 %781, %v444
      %v783 = vpop.permute.xlu0 %782
      %vm785 = vcmask 719872
      %v787 = vsel %vm785, %v755, 0
      %vm789 = vcmask 1043456
      %v791 = vsel %vm789, %v776, 0
      %v794 = vsel %vm789, %v777, 0
      %v797 = vsel %vm789, %v778, 0
      %v800 = vsel %vm789, %v779, 0
      %802 = vmatprep.subr.bf16.mxu0 %v757
      %803 = vmatpush1.bf16.msra.mxu0 %v756
      %804 = vmatprep.subr.bf16.mxu0 %v761
      %805 = vmatpush1.bf16.msra.mxu0 %v760
      %806 = vmatprep.subr.bf16.mxu0 %v765
      %807 = vmatpush1.bf16.msra.mxu0 %v764
      %808 = vmatprep.subr.bf16.mxu0 %v769
      %809 = vmatpush1.bf16.msra.mxu0 %v768
      %810 = vmatprep.subr.bf16.mxu0 %v773
      %811 = vmatpush1.bf16.msra.mxu0 %v772
      %812 = vmatprep.subr.bf16.mxu0 %v794
      %813 = vmatpush1.bf16.msra.mxu0 %v791
      %814 = vmatprep.subr.bf16.mxu0 0
      %815 = vmatpush1.bf16.msra.mxu0 0
      %816 = vmatprep.subr.bf16.mxu0 0
      %817 = vmatpush1.bf16.msra.mxu0 0
      %818 = vmatprep.subr.bf16.mxu0 0
      %819 = vmatpush1.bf16.msra.mxu0 0
      %820 = vmatprep.subr.bf16.mxu0 0
      %821 = vmatpush1.bf16.msra.mxu0 0
      %822 = vmatprep.subr.bf16.mxu0 0
      %823 = vmatpush1.bf16.msra.mxu0 0
      %824 = vmatprep.subr.bf16.mxu0 0
      %825 = vmatpush1.bf16.msra.mxu0 0
      %826 = vmatprep.subr.bf16.mxu0 0
      %827 = vmatpush1.bf16.msra.mxu0 0
      %828 = vmatprep.subr.bf16.mxu0 0
      %829 = vmatpush1.bf16.msra.mxu0 0
      %830 = vmatprep.subr.bf16.mxu0 0
      %831 = vmatpush1.bf16.msra.mxu0 0
      %832 = vmatprep.subr.bf16.mxu0 0
      %833 = vmatpush1.bf16.msra.mxu0 0
      %834 = vmatprep.mubr.bf16.mxu0 0
      %835 = vmatmul.mubr.bf16.gmra.mrb[0].mxu0 %v787
      %v836 = vpop.f32.mrb[0].mxu0
      %v837 = vadd.f32 %v783, %v836
      %v838 = vpop.f32.mrb[0].mxu0
      %v839 = vadd.f32 %v783, %v838
      %v840 = vpop.f32.mrb[0].mxu0
      %v841 = vpop.f32.mrb[0].mxu0
      %842 = vdwg.mxu0
      %843 = vmatprep.subr.bf16.mxu0 %v759
      %844 = vmatpush1.bf16.msra.mxu0 %v758
      %845 = vmatprep.subr.bf16.mxu0 %v763
      %846 = vmatpush1.bf16.msra.mxu0 %v762
      %847 = vmatprep.subr.bf16.mxu0 %v767
      %848 = vmatpush1.bf16.msra.mxu0 %v766
      %849 = vmatprep.subr.bf16.mxu0 %v771
      %850 = vmatpush1.bf16.msra.mxu0 %v770
      %851 = vmatprep.subr.bf16.mxu0 %v775
      %852 = vmatpush1.bf16.msra.mxu0 %v774
      %853 = vmatprep.subr.bf16.mxu0 %v800
      %854 = vmatpush1.bf16.msra.mxu0 %v797
      %855 = vmatprep.subr.bf16.mxu0 0
      %856 = vmatpush1.bf16.msra.mxu0 0
      %857 = vmatprep.subr.bf16.mxu0 0
      %858 = vmatpush1.bf16.msra.mxu0 0
      %859 = vmatprep.subr.bf16.mxu0 0
      %860 = vmatpush1.bf16.msra.mxu0 0
      %861 = vmatprep.subr.bf16.mxu0 0
      %862 = vmatpush1.bf16.msra.mxu0 0
      %863 = vmatprep.subr.bf16.mxu0 0
      %864 = vmatpush1.bf16.msra.mxu0 0
      %865 = vmatprep.subr.bf16.mxu0 0
      %866 = vmatpush1.bf16.msra.mxu0 0
      %867 = vmatprep.subr.bf16.mxu0 0
      %868 = vmatpush1.bf16.msra.mxu0 0
      %869 = vmatprep.subr.bf16.mxu0 0
      %870 = vmatpush1.bf16.msra.mxu0 0
      %871 = vmatprep.subr.bf16.mxu0 0
      %872 = vmatpush1.bf16.msra.mxu0 0
      %873 = vmatprep.subr.bf16.mxu0 0
      %874 = vmatpush1.bf16.msra.mxu0 0
      %875 = vmatprep.mubr.bf16.mxu0 0
      %876 = vmatmul.mubr.bf16.gmra.mrb[0].mxu0 %v787
      %v877 = vpop.f32.mrb[0].mxu0
      %v878 = vadd.f32 %v783, %v877
      %v879 = vpop.f32.mrb[0].mxu0
      %v880 = vadd.f32 %v783, %v879
      %v881 = vpop.f32.mrb[0].mxu0
      %v882 = vpop.f32.mrb[0].mxu0
      %883 = vdwg.mxu0
      %v884 = vmax.f32 %v837, 0.0
      %v885 = vmax.f32 %v839, 0.0
      %v886 = vmax.f32 %v878, 0.0
      %v887 = vmax.f32 %v880, 0.0
      %892 = vrot.lane.b32.xlu0 %v884, 127
      %v893 = vpop.permute.xlu0 %892
      %894 = vrot.lane.b32.xlu0 %v885, 127
      %v895 = vpop.permute.xlu0 %894
      %896 = vrot.lane.b32.xlu0 %v886, 127
      %v897 = vpop.permute.xlu0 %896
      %898 = vrot.lane.b32.xlu0 %v887, 127
      %v899 = vpop.permute.xlu0 %898
      %vm900 = vcmask 1039360
      %v901 = vsel %vm900, %v893, %v895
      %v902 = vsel %vm900, %v895, %v897
      %v903 = vsel %vm900, %v897, %v899
      %v908 = vmax.f32 %v884, %v901
      %v909 = vmax.f32 %v885, %v902
      %v910 = vmax.f32 %v886, %v903
      %v911 = vmax.f32 %v887, %v899
      %912 = vrot.lane.b32.xlu0 %v884, 126
      %v913 = vpop.permute.xlu0 %912
      %914 = vrot.lane.b32.xlu0 %v885, 126
      %v915 = vpop.permute.xlu0 %914
      %916 = vrot.lane.b32.xlu0 %v886, 126
      %v917 = vpop.permute.xlu0 %916
      %918 = vrot.lane.b32.xlu0 %v887, 126
      %v919 = vpop.permute.xlu0 %918
      %vm920 = vcmask 1031168
      %v921 = vsel %vm920, %v913, %v915
      %v922 = vsel %vm920, %v915, %v917
      %v923 = vsel %vm920, %v917, %v919
      %v928 = vmax.f32 %v908, %v921
      %v929 = vmax.f32 %v909, %v922
      %v930 = vmax.f32 %v910, %v923
      %v931 = vmax.f32 %v911, %v919
      %932 = vrot.lane.b32.xlu0 %v884, 125
      %v933 = vpop.permute.xlu0 %932
      %934 = vrot.lane.b32.xlu0 %v885, 125
      %v935 = vpop.permute.xlu0 %934
      %936 = vrot.lane.b32.xlu0 %v886, 125
      %v937 = vpop.permute.xlu0 %936
      %938 = vrot.lane.b32.xlu0 %v887, 125
      %v939 = vpop.permute.xlu0 %938
      %vm940 = vcmask 1022976
      %v941 = vsel %vm940, %v933, %v935
      %v942 = vsel %vm940, %v935, %v937
      %v943 = vsel %vm940, %v937, %v939
      %v948 = vmax.f32 %v928, %v941
      %v949 = vmax.f32 %v929, %v942
      %v950 = vmax.f32 %v930, %v943
      %v951 = vmax.f32 %v931, %v939
      %952 = vrot.lane.b32.xlu0 %v884, 124
      %v953 = vpop.permute.xlu0 %952
      %954 = vrot.lane.b32.xlu0 %v885, 124
      %v955 = vpop.permute.xlu0 %954
      %956 = vrot.lane.b32.xlu0 %v886, 124
      %v957 = vpop.permute.xlu0 %956
      %958 = vrot.lane.b32.xlu0 %v887, 124
      %v959 = vpop.permute.xlu0 %958
      %vm960 = vcmask 1014784
      %v961 = vsel %vm960, %v953, %v955
      %v962 = vsel %vm960, %v955, %v957
      %v963 = vsel %vm960, %v957, %v959
      %v968 = vmax.f32 %v948, %v961
      %v969 = vmax.f32 %v949, %v962
      %v970 = vmax.f32 %v950, %v963
      %v971 = vmax.f32 %v951, %v959
      %v972 = vpack.c.bf16 %v968, %v968
      %v973 = vpack.c.bf16 %v969, %v969
      %v974 = vpack.c.bf16 %v970, %v970
      %v975 = vpack.c.bf16 %v971, %v971
      %v976 = vld [vmem:[%s11] sm:$0xf]
      %v977 = vld [vmem:[%s11 + $0x4] sm:$0xf]
      %v978 = vld [vmem:[%s11 + $0x8] sm:$0xf]
      %v979 = vld [vmem:[%s11 + $0xc] sm:$0xf]
      %v980 = vld [vmem:[%s11 + $0x10] sm:$0xf]
      %v981 = vld [vmem:[%s11 + $0x14] sm:$0xf]
      %v982 = vld [vmem:[%s11 + $0x18] sm:$0xf]
      %v983 = vld [vmem:[%s11 + $0x1c] sm:$0xf]
      %v984 = vld [vmem:[%s11 + $0x20] sm:$0xf]
      %v985 = vld [vmem:[%s11 + $0x24] sm:$0xf]
      %v986 = vld [vmem:[%s11 + $0x28] sm:$0xf]
      %v987 = vld [vmem:[%s11 + $0x2c] sm:$0xf]
      %v988 = vld [vmem:[%s11 + $0x30] sm:$0xf]
      %v989 = vld [vmem:[%s11 + $0x34] sm:$0xf]
      %v990 = vld [vmem:[%s11 + $0x38] sm:$0xf]
      %v991 = vld [vmem:[%s11 + $0x3c] sm:$0xf]
      %v992 = vld [vmem:[%s11 + $0x40] sm:$0xf]
      %v993 = vld [vmem:[%s11 + $0x44] sm:$0xf]
      %v994 = vld [vmem:[%s11 + $0x48] sm:$0xf]
      %v995 = vld [vmem:[%s11 + $0x4c] sm:$0xf]
      %v996 = vld [vmem:[%s11 + $0x50] sm:$0xf]
      %v997 = vld [vmem:[%s11 + $0x54] sm:$0xf]
      %v998 = vld [vmem:[%s11 + $0x58] sm:$0xf]
      %v999 = vld [vmem:[%s11 + $0x5c] sm:$0xf]
      %v1000 = vld [vmem:[%s11 + $0x60] sm:$0xf]
      %v1001 = vld [vmem:[%s11 + $0x64] sm:$0xf]
      %v1002 = vld [vmem:[%s11 + $0x68] sm:$0xf]
      %v1003 = vld [vmem:[%s11 + $0x6c] sm:$0xf]
      %v1004 = vld [vmem:[%s11 + $0x70] sm:$0xf]
      %v1005 = vld [vmem:[%s11 + $0x74] sm:$0xf]
      %v1006 = vld [vmem:[%s11 + $0x78] sm:$0xf]
      %v1007 = vld [vmem:[%s11 + $0x7c] sm:$0xf]
      %v1008 = vld [vmem:[%s11 + $0x80] sm:$0xf]
      %v1009 = vld [vmem:[%s11 + $0x84] sm:$0xf]
      %v1010 = vld [vmem:[%s11 + $0x88] sm:$0xf]
      %v1011 = vld [vmem:[%s11 + $0x8c] sm:$0xf]
      %v1012 = vld [vmem:[%s11 + $0x90] sm:$0xf]
      %v1013 = vld [vmem:[%s11 + $0x94] sm:$0xf]
      %v1014 = vld [vmem:[%s11 + $0x98] sm:$0xf]
      %v1015 = vld [vmem:[%s11 + $0x9c] sm:$0xf]
      %v1016 = vld [vmem:[%s11 + $0xa0] sm:$0xf]
      %v1017 = vld [vmem:[%s11 + $0xa4] sm:$0xf]
      %v1018 = vld [vmem:[%s11 + $0xa8] sm:$0xf]
      %v1019 = vld [vmem:[%s11 + $0xac] sm:$0xf]
      %v1020 = vld [vmem:[%s11 + $0xb0] sm:$0xf]
      %v1021 = vld [vmem:[%s11 + $0xb4] sm:$0xf]
      %v1022 = vld [vmem:[%s11 + $0xb8] sm:$0xf]
      %v1023 = vld [vmem:[%s11 + $0xbc] sm:$0xf]
      %v1024 = vld [vmem:[%s11 + $0xc0] sm:$0xf]
      %v1025 = vld [vmem:[%s11 + $0xc4] sm:$0x3]
      %v1076 = vunpack.c.l.b16 %v976
      %v1077 = vunpack.c.l.b16 %v977
      %v1078 = vunpack.c.l.b16 %v978
      %v1079 = vunpack.c.l.b16 %v979
      %v1080 = vunpack.c.l.b16 %v980
      %v1081 = vunpack.c.l.b16 %v981
      %v1082 = vunpack.c.l.b16 %v982
      %v1083 = vunpack.c.l.b16 %v983
      %v1084 = vunpack.c.l.b16 %v984
      %v1085 = vunpack.c.l.b16 %v985
      %v1086 = vunpack.c.l.b16 %v986
      %v1087 = vunpack.c.l.b16 %v987
      %v1088 = vunpack.c.l.b16 %v988
      %v1089 = vunpack.c.l.b16 %v989
      %v1090 = vunpack.c.l.b16 %v990
      %v1091 = vunpack.c.l.b16 %v991
      %v1092 = vunpack.c.l.b16 %v992
      %v1093 = vunpack.c.l.b16 %v993
      %v1094 = vunpack.c.l.b16 %v994
      %v1095 = vunpack.c.l.b16 %v995
      %v1096 = vunpack.c.l.b16 %v996
      %v1097 = vunpack.c.l.b16 %v997
      %v1098 = vunpack.c.l.b16 %v998
      %v1099 = vunpack.c.l.b16 %v999
      %v1100 = vunpack.c.l.b16 %v1000
      %v1101 = vunpack.c.l.b16 %v1001
      %v1102 = vunpack.c.l.b16 %v1002
      %v1103 = vunpack.c.l.b16 %v1003
      %v1104 = vunpack.c.l.b16 %v1004
      %v1105 = vunpack.c.l.b16 %v1005
      %v1106 = vunpack.c.l.b16 %v1006
      %v1107 = vunpack.c.l.b16 %v1007
      %v1108 = vunpack.c.l.b16 %v1008
      %v1109 = vunpack.c.l.b16 %v1009
      %v1110 = vunpack.c.l.b16 %v1010
      %v1111 = vunpack.c.l.b16 %v1011
      %v1112 = vunpack.c.l.b16 %v1012
      %v1113 = vunpack.c.l.b16 %v1013
      %v1114 = vunpack.c.l.b16 %v1014
      %v1115 = vunpack.c.l.b16 %v1015
      %v1116 = vunpack.c.l.b16 %v1016
      %v1117 = vunpack.c.l.b16 %v1017
      %v1118 = vunpack.c.l.b16 %v1018
      %v1119 = vunpack.c.l.b16 %v1019
      %v1120 = vunpack.c.l.b16 %v1020
      %v1121 = vunpack.c.l.b16 %v1021
      %v1122 = vunpack.c.l.b16 %v1022
      %v1123 = vunpack.c.l.b16 %v1023
      %v1124 = vunpack.c.l.b16 %v1024
      %v1125 = vunpack.c.l.b16 %v1025
      %v1126 = vpack.c.b16 %v1077, %v1076
      %v1127 = vpack.c.b16 %v1079, %v1078
      %v1128 = vpack.c.b16 %v1081, %v1080
      %v1129 = vpack.c.b16 %v1083, %v1082
      %v1130 = vpack.c.b16 %v1085, %v1084
      %v1131 = vpack.c.b16 %v1087, %v1086
      %v1132 = vpack.c.b16 %v1089, %v1088
      %v1133 = vpack.c.b16 %v1091, %v1090
      %v1134 = vpack.c.b16 %v1093, %v1092
      %v1135 = vpack.c.b16 %v1095, %v1094
      %v1136 = vpack.c.b16 %v1097, %v1096
      %v1137 = vpack.c.b16 %v1099, %v1098
      %v1138 = vpack.c.b16 %v1101, %v1100
      %v1139 = vpack.c.b16 %v1103, %v1102
      %v1140 = vpack.c.b16 %v1105, %v1104
      %v1141 = vpack.c.b16 %v1107, %v1106
      %v1142 = vpack.c.b16 %v1109, %v1108
      %v1143 = vpack.c.b16 %v1111, %v1110
      %v1144 = vpack.c.b16 %v1113, %v1112
      %v1145 = vpack.c.b16 %v1115, %v1114
      %v1146 = vpack.c.b16 %v1117, %v1116
      %v1147 = vpack.c.b16 %v1119, %v1118
      %v1148 = vpack.c.b16 %v1121, %v1120
      %v1149 = vpack.c.b16 %v1123, %v1122
      %v1150 = vpack.c.b16 %v1125, %v1124
      %vm1175 = vcmask 97280
      %v1177 = vsel %vm1175, %v975, 0
      %vm1179 = vcmask 1045504
      %v1181 = vsel %vm1179, %v1150, 0
      %1183 = vmatprep.subr.bf16.mxu0 0
      %1184 = vmatpush1.bf16.msra.mxu0 %v1126
      %1185 = vmatprep.subr.bf16.mxu0 0
      %1186 = vmatpush1.bf16.msra.mxu0 %v1127
      %1187 = vmatprep.subr.bf16.mxu0 0
      %1188 = vmatpush1.bf16.msra.mxu0 %v1128
      %1189 = vmatprep.subr.bf16.mxu0 0
      %1190 = vmatpush1.bf16.msra.mxu0 %v1129
      %1191 = vmatprep.subr.bf16.mxu0 0
      %1192 = vmatpush1.bf16.msra.mxu0 %v1130
      %1193 = vmatprep.subr.bf16.mxu0 0
      %1194 = vmatpush1.bf16.msra.mxu0 %v1131
      %1195 = vmatprep.subr.bf16.mxu0 0
      %1196 = vmatpush1.bf16.msra.mxu0 %v1132
      %1197 = vmatprep.subr.bf16.mxu0 0
      %1198 = vmatpush1.bf16.msra.mxu0 %v1133
      %1199 = vmatprep.subr.bf16.mxu0 0
      %1200 = vmatpush1.bf16.msra.mxu0 %v1134
      %1201 = vmatprep.subr.bf16.mxu0 0
      %1202 = vmatpush1.bf16.msra.mxu0 %v1135
      %1203 = vmatprep.subr.bf16.mxu0 0
      %1204 = vmatpush1.bf16.msra.mxu0 %v1136
      %1205 = vmatprep.subr.bf16.mxu0 0
      %1206 = vmatpush1.bf16.msra.mxu0 %v1137
      %1207 = vmatprep.subr.bf16.mxu0 0
      %1208 = vmatpush1.bf16.msra.mxu0 %v1138
      %1209 = vmatprep.subr.bf16.mxu0 0
      %1210 = vmatpush1.bf16.msra.mxu0 %v1139
      %1211 = vmatprep.subr.bf16.mxu0 0
      %1212 = vmatpush1.bf16.msra.mxu0 %v1140
      %1213 = vmatprep.subr.bf16.mxu0 0
      %1214 = vmatpush1.bf16.msra.mxu0 %v1141
      %1215 = vmatprep.mubr.bf16.mxu0 %v973
      %1216 = vmatmul.mubr.bf16.gmra.mrb[0].mxu0 %v972
      %v1217 = vpop.f32.mrb[0].mxu0
      %v1218 = vadd.f32 0.0, %v1217
      %v1219 = vpop.f32.mrb[0].mxu0
      %v1220 = vpop.f32.mrb[0].mxu0
      %v1221 = vpop.f32.mrb[0].mxu0
      %1222 = vdwg.mxu0
      %1223 = vmatprep.subr.bf16.mxu0 0
      %1224 = vmatpush1.bf16.msra.mxu0 %v1142
      %1225 = vmatprep.subr.bf16.mxu0 0
      %1226 = vmatpush1.bf16.msra.mxu0 %v1143
      %1227 = vmatprep.subr.bf16.mxu0 0
      %1228 = vmatpush1.bf16.msra.mxu0 %v1144
      %1229 = vmatprep.subr.bf16.mxu0 0
      %1230 = vmatpush1.bf16.msra.mxu0 %v1145
      %1231 = vmatprep.subr.bf16.mxu0 0
      %1232 = vmatpush1.bf16.msra.mxu0 %v1146
      %1233 = vmatprep.subr.bf16.mxu0 0
      %1234 = vmatpush1.bf16.msra.mxu0 %v1147
      %1235 = vmatprep.subr.bf16.mxu0 0
      %1236 = vmatpush1.bf16.msra.mxu0 %v1148
      %1237 = vmatprep.subr.bf16.mxu0 0
      %1238 = vmatpush1.bf16.msra.mxu0 %v1149
      %1239 = vmatprep.subr.bf16.mxu0 0
      %1240 = vmatpush1.bf16.msra.mxu0 %v1181
      %1241 = vmatprep.subr.bf16.mxu0 0
      %1242 = vmatpush1.bf16.msra.mxu0 0
      %1243 = vmatprep.subr.bf16.mxu0 0
      %1244 = vmatpush1.bf16.msra.mxu0 0
      %1245 = vmatprep.subr.bf16.mxu0 0
      %1246 = vmatpush1.bf16.msra.mxu0 0
      %1247 = vmatprep.subr.bf16.mxu0 0
      %1248 = vmatpush1.bf16.msra.mxu0 0
      %1249 = vmatprep.subr.bf16.mxu0 0
      %1250 = vmatpush1.bf16.msra.mxu0 0
      %1251 = vmatprep.subr.bf16.mxu0 0
      %1252 = vmatpush1.bf16.msra.mxu0 0
      %1253 = vmatprep.subr.bf16.mxu0 0
      %1254 = vmatpush1.bf16.msra.mxu0 0
      %1255 = vmatprep.mubr.bf16.mxu0 %v1177
      %1256 = vmatmul.mubr.bf16.gmra.mrb[0].mxu0 %v974
      %v1257 = vpop.f32.mrb[0].mxu0
      %v1258 = vadd.f32 %v1218, %v1257
      %v1259 = vpop.f32.mrb[0].mxu0
      %v1260 = vpop.f32.mrb[0].mxu0
      %v1261 = vpop.f32.mrb[0].mxu0
      %1262 = vdwg.mxu0
      %v1263 = vpack.c.bf16 %v1258, %v1258
      %v1264 = vld [vmem:[%s10 + $0x8] sm:$0xff]
      %v1265 = vld [vmem:[%s10 + $0x10] sm:$0xff]
      %v1266 = vld [vmem:[%s10 + $0x18] sm:$0xff]
      %v1267 = vld [vmem:[%s10 + $0x20] sm:$0xff]
      %1269 = vrot.lane.b32.xlu0 %v1263, 4
      %v1270 = vpop.permute.xlu0 %1269
      %vm1272 = vcmask 650272
      %1273 = vst.msk [vmem:[#allocation2] sm:$0xf] %vm1272, %v1270
      %vm1274 = vcmask 27648
      %1275 = vst.msk [vmem:[#allocation2] sm:$0xf] %vm1274, 0
      %vm1276 = vcmask 191648
      %1277 = vst.msk [vmem:[#allocation2] sm:$0xf] %vm1276, 0
      %vm1278 = vcmask 355648
      %1279 = vst.msk [vmem:[#allocation2] sm:$0xf] %vm1278, 0
      %vm1280 = vcmask 519648
      %1281 = vst.msk [vmem:[#allocation2] sm:$0xf] %vm1280, 0
      %v1282 = vrot.slane %v1263, 4
      %1283 = vrot.lane.b32.xlu0 %v1282, 3
      %v1284 = vpop.permute.xlu0 %1283
      %vm1286 = vcmask 654364
      %1287 = vst.msk [vmem:[#allocation2] sm:$0xf0] %vm1286, %v1284
      %vm1288 = vcmask 23556
      %1289 = vst.msk [vmem:[#allocation2] sm:$0xf0] %vm1288, 0
      %vm1290 = vcmask 187556
      %1291 = vst.msk [vmem:[#allocation2] sm:$0xf0] %vm1290, 0
      %vm1292 = vcmask 351556
      %1293 = vst.msk [vmem:[#allocation2] sm:$0xf0] %vm1292, 0
      %vm1294 = vcmask 515556
      %1295 = vst.msk [vmem:[#allocation2] sm:$0xf0] %vm1294, 0
      %1296 = vrot.lane.b32.xlu0 %v1263, 2
      %v1297 = vpop.permute.xlu0 %1296
      %vm1299 = vcmask 650256
      %1300 = vst.msk [vmem:[#allocation2 + $0x20] sm:$0xf] %vm1299, %v1297
      %vm1301 = vcmask 11264
      %1302 = vst.msk [vmem:[#allocation2 + $0x20] sm:$0xf] %vm1301, 0
      %vm1303 = vcmask 175264
      %1304 = vst.msk [vmem:[#allocation2 + $0x20] sm:$0xf] %vm1303, 0
      %vm1305 = vcmask 339264
      %1306 = vst.msk [vmem:[#allocation2 + $0x20] sm:$0xf] %vm1305, 0
      %vm1307 = vcmask 503264
      %1308 = vst.msk [vmem:[#allocation2 + $0x20] sm:$0xf] %vm1307, 0
      %1309 = vrot.lane.b32.xlu0 %v1282, 1
      %v1310 = vpop.permute.xlu0 %1309
      %vm1312 = vcmask 654348
      %1313 = vst.msk [vmem:[#allocation2 + $0x20] sm:$0xf0] %vm1312, %v1310
      %vm1314 = vcmask 7172
      %1315 = vst.msk [vmem:[#allocation2 + $0x20] sm:$0xf0] %vm1314, 0
      %vm1316 = vcmask 171172
      %1317 = vst.msk [vmem:[#allocation2 + $0x20] sm:$0xf0] %vm1316, 0
      %vm1318 = vcmask 335172
      %1319 = vst.msk [vmem:[#allocation2 + $0x20] sm:$0xf0] %vm1318, 0
      %vm1320 = vcmask 499172
      %1321 = vst.msk [vmem:[#allocation2 + $0x20] sm:$0xf0] %vm1320, 0
      %vm1322 = vcmask 650240
      %1323 = vst.msk [vmem:[#allocation2 + $0x40] sm:$0xf] %vm1322, %v1263
      %1324 = vrot.lane.b32.xlu0 %v1282, 127
      %v1325 = vpop.permute.xlu0 %1324
      %vm1327 = vcmask 646148
      %1328 = vst.msk [vmem:[#allocation2 + $0x40] sm:$0xf0] %vm1327, %v1325
      %vm1329 = vcmask 162972
      %1330 = vst.msk [vmem:[#allocation2 + $0x40] sm:$0xf0] %vm1329, 0
      %vm1331 = vcmask 326972
      %1332 = vst.msk [vmem:[#allocation2 + $0x40] sm:$0xf0] %vm1331, 0
      %vm1333 = vcmask 490972
      %1334 = vst.msk [vmem:[#allocation2 + $0x40] sm:$0xf0] %vm1333, 0
      %vm1335 = vcmask 654972
      %1336 = vst.msk [vmem:[#allocation2 + $0x40] sm:$0xf0] %vm1335, 0
      %1337 = vrot.lane.b32.xlu0 %v1263, 126
      %v1338 = vpop.permute.xlu0 %1337
      %vm1340 = vcmask 633856
      %1341 = vst.msk [vmem:[#allocation2 + $0x60] sm:$0xf] %vm1340, %v1338
      %vm1342 = vcmask 158864
      %1343 = vst.msk [vmem:[#allocation2 + $0x60] sm:$0xf] %vm1342, 0
      %vm1344 = vcmask 322864
      %1345 = vst.msk [vmem:[#allocation2 + $0x60] sm:$0xf] %vm1344, 0
      %vm1346 = vcmask 486864
      %1347 = vst.msk [vmem:[#allocation2 + $0x60] sm:$0xf] %vm1346, 0
      %vm1348 = vcmask 650864
      %1349 = vst.msk [vmem:[#allocation2 + $0x60] sm:$0xf] %vm1348, 0
      %1350 = vrot.lane.b32.xlu0 %v1282, 125
      %v1351 = vpop.permute.xlu0 %1350
      %vm1353 = vcmask 629764
      %1354 = vst.msk [vmem:[#allocation2 + $0x60] sm:$0xf0] %vm1353, %v1351
      %vm1355 = vcmask 162956
      %1356 = vst.msk [vmem:[#allocation2 + $0x60] sm:$0xf0] %vm1355, 0
      %vm1357 = vcmask 326956
      %1358 = vst.msk [vmem:[#allocation2 + $0x60] sm:$0xf0] %vm1357, 0
      %vm1359 = vcmask 490956
      %1360 = vst.msk [vmem:[#allocation2 + $0x60] sm:$0xf0] %vm1359, 0
      %vm1361 = vcmask 654956
      %1362 = vst.msk [vmem:[#allocation2 + $0x60] sm:$0xf0] %vm1361, 0
      %1363 = vrot.lane.b32.xlu0 %v1263, 124
      %v1364 = vpop.permute.xlu0 %1363
      %vm1366 = vcmask 617472
      %1367 = vst.msk [vmem:[#allocation2 + $0x80] sm:$0xf] %vm1366, %v1364
      %vm1368 = vcmask 158848
      %1369 = vst.msk [vmem:[#allocation2 + $0x80] sm:$0xf] %vm1368, 0
      %vm1370 = vcmask 322848
      %1371 = vst.msk [vmem:[#allocation2 + $0x80] sm:$0xf] %vm1370, 0
      %vm1372 = vcmask 486848
      %1373 = vst.msk [vmem:[#allocation2 + $0x80] sm:$0xf] %vm1372, 0
      %vm1374 = vcmask 650848
      %1375 = vst.msk [vmem:[#allocation2 + $0x80] sm:$0xf] %vm1374, 0
      %v1376 = vld [vmem:[%s2] sm:$0xf]
      %v1377 = vld [vmem:[%s2 + $0x4] sm:$0xf]
      %v1378 = vld [vmem:[%s2 + $0x8] sm:$0xf]
      %v1379 = vld [vmem:[%s2 + $0xc] sm:$0xf]
      %v1380 = vld [vmem:[#allocation2] sm:$0xff]
      %v1381 = vld [vmem:[#allocation2 + $0x20] sm:$0xff]
      %v1382 = vld [vmem:[#allocation2 + $0x40] sm:$0xff]
      %v1383 = vld [vmem:[#allocation2 + $0x60] sm:$0xff]
      %v1384 = vld [vmem:[#allocation2 + $0x80] sm:$0xf]
      %1386 = vset.pattern.permute.xlu0 0
      %1387 = vperm.xlu0 %1386, %v1264
      %v1388 = vpop.permute.xlu0 %1387
      %1391 = vset.pattern.permute.xlu0 0
      %1392 = vperm.xlu0 %1391, %v1265
      %v1393 = vpop.permute.xlu0 %1392
      %1396 = vset.pattern.permute.xlu0 0
      %1397 = vperm.xlu0 %1396, %v1266
      %v1398 = vpop.permute.xlu0 %1397
      %1401 = vset.pattern.permute.xlu0 0
      %1402 = vperm.xlu0 %1401, %v1267
      %v1403 = vpop.permute.xlu0 %1402
      %v1409 = vunpack.c.l.b16 %v1376
      %v1410 = vunpack.c.l.b16 %v1377
      %v1411 = vunpack.c.l.b16 %v1378
      %v1412 = vunpack.c.l.b16 %v1379
      %v1413 = vpack.c.b16 %v1410, %v1409
      %v1414 = vpack.c.b16 %v1412, %v1411
      %vm1415 = vcmask 588800
      %v1417 = vsel %vm1415, %v1413, 0
      %v1420 = vsel %vm1415, %v1414, 0
      %v1423 = vsel %vm789, %v1384, 0
      %1425 = vmatprep.subr.bf16.mxu0 0
      %1426 = vmatpush1.bf16.msra.mxu0 %v1380
      %1427 = vmatprep.subr.bf16.mxu0 0
      %1428 = vmatpush1.bf16.msra.mxu0 %v1381
      %1429 = vmatprep.subr.bf16.mxu0 0
      %1430 = vmatpush1.bf16.msra.mxu0 %v1382
      %1431 = vmatprep.subr.bf16.mxu0 0
      %1432 = vmatpush1.bf16.msra.mxu0 %v1383
      %1433 = vmatprep.subr.bf16.mxu0 0
      %1434 = vmatpush1.bf16.msra.mxu0 %v1423
      %1435 = vmatprep.subr.bf16.mxu0 0
      %1436 = vmatpush1.bf16.msra.mxu0 0
      %1437 = vmatprep.subr.bf16.mxu0 0
      %1438 = vmatpush1.bf16.msra.mxu0 0
      %1439 = vmatprep.subr.bf16.mxu0 0
      %1440 = vmatpush1.bf16.msra.mxu0 0
      %1441 = vmatprep.subr.bf16.mxu0 0
      %1442 = vmatpush1.bf16.msra.mxu0 0
      %1443 = vmatprep.subr.bf16.mxu0 0
      %1444 = vmatpush1.bf16.msra.mxu0 0
      %1445 = vmatprep.subr.bf16.mxu0 0
      %1446 = vmatpush1.bf16.msra.mxu0 0
      %1447 = vmatprep.subr.bf16.mxu0 0
      %1448 = vmatpush1.bf16.msra.mxu0 0
      %1449 = vmatprep.subr.bf16.mxu0 0
      %1450 = vmatpush1.bf16.msra.mxu0 0
      %1451 = vmatprep.subr.bf16.mxu0 0
      %1452 = vmatpush1.bf16.msra.mxu0 0
      %1453 = vmatprep.subr.bf16.mxu0 0
      %1454 = vmatpush1.bf16.msra.mxu0 0
      %1455 = vmatprep.subr.bf16.mxu0 0
      %1456 = vmatpush1.bf16.msra.mxu0 0
      %1457 = vmatprep.mubr.bf16.mxu0 0
      %1458 = vmatmul.mubr.bf16.gmra.mrb[0].mxu0 %v1417
      %v1459 = vpop.f32.mrb[0].mxu0
      %v1460 = vadd.f32 %v1388, %v1459
      %v1461 = vpop.f32.mrb[0].mxu0
      %v1462 = vpop.f32.mrb[0].mxu0
      %v1463 = vadd.f32 %v1393, %v1462
      %v1464 = vpop.f32.mrb[0].mxu0
      %1465 = vmatprep.mubr.bf16.mxu0 0
      %1466 = vmatmul.mubr.bf16.gmra.mrb[0].mxu0 %v1420
      %v1467 = vpop.f32.mrb[0].mxu0
      %v1468 = vadd.f32 %v1398, %v1467
      %v1469 = vpop.f32.mrb[0].mxu0
      %v1470 = vpop.f32.mrb[0].mxu0
      %v1471 = vadd.f32 %v1403, %v1470
      %v1472 = vpop.f32.mrb[0].mxu0
      %1473 = vdwg.mxu0
      %v1474 = vld [vmem:[%s10 + $0x28] sm:$0xff]
      %1475 = vrot.lane.b32.xlu0 %v1263, 1
      %v1476 = vpop.permute.xlu0 %1475
      %vm1478 = vcmask 650248
      %1479 = vst.msk [vmem:[#allocation2] sm:$0xf] %vm1478, %v1476
      %1480 = vst.msk [vmem:[#allocation2] sm:$0xf] %vm594, 0
      %vm1481 = vcmask 167072
      %1482 = vst.msk [vmem:[#allocation2] sm:$0xf] %vm1481, 0
      %vm1483 = vcmask 331072
      %1484 = vst.msk [vmem:[#allocation2] sm:$0xf] %vm1483, 0
      %vm1485 = vcmask 495072
      %1486 = vst.msk [vmem:[#allocation2] sm:$0xf] %vm1485, 0
      %vm1488 = vcmask 654340
      %1489 = vst.msk [vmem:[#allocation2] sm:$0xf0] %vm1488, %v1282
      %1490 = vrot.lane.b32.xlu0 %v1263, 127
      %v1491 = vpop.permute.xlu0 %1490
      %vm1493 = vcmask 642048
      %1494 = vst.msk [vmem:[#allocation2 + $0x20] sm:$0xf] %vm1493, %v1491
      %vm1495 = vcmask 158872
      %1496 = vst.msk [vmem:[#allocation2 + $0x20] sm:$0xf] %vm1495, 0
      %vm1497 = vcmask 322872
      %1498 = vst.msk [vmem:[#allocation2 + $0x20] sm:$0xf] %vm1497, 0
      %vm1499 = vcmask 486872
      %1500 = vst.msk [vmem:[#allocation2 + $0x20] sm:$0xf] %vm1499, 0
      %vm1501 = vcmask 650872
      %1502 = vst.msk [vmem:[#allocation2 + $0x20] sm:$0xf] %vm1501, 0
      %v1503 = vld [vmem:[%s3] sm:$0xf]
      %v1504 = vld [vmem:[#allocation2] sm:$0xff]
      %v1505 = vld [vmem:[#allocation2 + $0x20] sm:$0xf]
      %1507 = vset.pattern.permute.xlu0 0
      %1508 = vperm.xlu0 %1507, %v1474
      %v1509 = vpop.permute.xlu0 %1508
      %vm1511 = vcmask 195584
      %v1513 = vsel %vm1511, %v1503, 0
      %v1516 = vsel %vm789, %v1505, 0
      %1518 = vmatprep.subr.bf16.mxu0 0
      %1519 = vmatpush1.bf16.msra.mxu0 %v1504
      %1520 = vmatprep.subr.bf16.mxu0 0
      %1521 = vmatpush1.bf16.msra.mxu0 %v1516
      %1522 = vmatprep.subr.bf16.mxu0 0
      %1523 = vmatpush1.bf16.msra.mxu0 0
      %1524 = vmatprep.subr.bf16.mxu0 0
      %1525 = vmatpush1.bf16.msra.mxu0 0
      %1526 = vmatprep.subr.bf16.mxu0 0
      %1527 = vmatpush1.bf16.msra.mxu0 0
      %1528 = vmatprep.subr.bf16.mxu0 0
      %1529 = vmatpush1.bf16.msra.mxu0 0
      %1530 = vmatprep.subr.bf16.mxu0 0
      %1531 = vmatpush1.bf16.msra.mxu0 0
      %1532 = vmatprep.subr.bf16.mxu0 0
      %1533 = vmatpush1.bf16.msra.mxu0 0
      %1534 = vmatprep.subr.bf16.mxu0 0
      %1535 = vmatpush1.bf16.msra.mxu0 0
      %1536 = vmatprep.subr.bf16.mxu0 0
      %1537 = vmatpush1.bf16.msra.mxu0 0
      %1538 = vmatprep.subr.bf16.mxu0 0
      %1539 = vmatpush1.bf16.msra.mxu0 0
      %1540 = vmatprep.subr.bf16.mxu0 0
      %1541 = vmatpush1.bf16.msra.mxu0 0
      %1542 = vmatprep.subr.bf16.mxu0 0
      %1543 = vmatpush1.bf16.msra.mxu0 0
      %1544 = vmatprep.subr.bf16.mxu0 0
      %1545 = vmatpush1.bf16.msra.mxu0 0
      %1546 = vmatprep.subr.bf16.mxu0 0
      %1547 = vmatpush1.bf16.msra.mxu0 0
      %1548 = vmatprep.subr.bf16.mxu0 0
      %1549 = vmatpush1.bf16.msra.mxu0 0
      %1550 = vmatprep.mubr.bf16.mxu0 0
      %1551 = vmatmul.mubr.bf16.gmra.mrb[0].mxu0 %v1513
      %v1552 = vpop.f32.mrb[0].mxu0
      %v1553 = vadd.f32 %v1509, %v1552
      %v1554 = vpop.f32.mrb[0].mxu0
      %v1555 = vpop.f32.mrb[0].mxu0
      %v1556 = vpop.f32.mrb[0].mxu0
      %1557 = vdwg.mxu0
      %v1558 = vmax.f32 %v1553, 0.0
      %v1559 = vld [vmem:[%s10 + $0x30] sm:$0xff]
      %v1560 = vpack.c.bf16 %v1558, %v1558
      %1562 = vrot.lane.b32.xlu0 %v1560, 3
      %v1563 = vpop.permute.xlu0 %1562
      %vm1565 = vcmask 650264
      %1566 = vst.msk [vmem:[#allocation2] sm:$0xf] %vm1565, %v1563
      %1567 = vst.msk [vmem:[#allocation2] sm:$0xf] %vm536, 0
      %vm1568 = vcmask 183456
      %1569 = vst.msk [vmem:[#allocation2] sm:$0xf] %vm1568, 0
      %vm1570 = vcmask 347456
      %1571 = vst.msk [vmem:[#allocation2] sm:$0xf] %vm1570, 0
      %vm1572 = vcmask 511456
      %1573 = vst.msk [vmem:[#allocation2] sm:$0xf] %vm1572, 0
      %v1574 = vrot.slane %v1560, 4
      %1575 = vrot.lane.b32.xlu0 %v1574, 2
      %v1576 = vpop.permute.xlu0 %1575
      %vm1578 = vcmask 654356
      %1579 = vst.msk [vmem:[#allocation2] sm:$0xf0] %vm1578, %v1576
      %1580 = vst.msk [vmem:[#allocation2] sm:$0xf0] %vm565, 0
      %vm1581 = vcmask 179364
      %1582 = vst.msk [vmem:[#allocation2] sm:$0xf0] %vm1581, 0
      %vm1583 = vcmask 343364
      %1584 = vst.msk [vmem:[#allocation2] sm:$0xf0] %vm1583, 0
      %vm1585 = vcmask 507364
      %1586 = vst.msk [vmem:[#allocation2] sm:$0xf0] %vm1585, 0
      %1587 = vrot.lane.b32.xlu0 %v1560, 1
      %v1588 = vpop.permute.xlu0 %1587
      %1590 = vst.msk [vmem:[#allocation2 + $0x20] sm:$0xf] %vm1478, %v1588
      %1591 = vst.msk [vmem:[#allocation2 + $0x20] sm:$0xf] %vm594, 0
      %1592 = vst.msk [vmem:[#allocation2 + $0x20] sm:$0xf] %vm1481, 0
      %1593 = vst.msk [vmem:[#allocation2 + $0x20] sm:$0xf] %vm1483, 0
      %1594 = vst.msk [vmem:[#allocation2 + $0x20] sm:$0xf] %vm1485, 0
      %1596 = vst.msk [vmem:[#allocation2 + $0x20] sm:$0xf0] %vm1488, %v1574
      %1597 = vrot.lane.b32.xlu0 %v1560, 127
      %v1598 = vpop.permute.xlu0 %1597
      %1600 = vst.msk [vmem:[#allocation2 + $0x40] sm:$0xf] %vm1493, %v1598
      %1601 = vst.msk [vmem:[#allocation2 + $0x40] sm:$0xf] %vm1495, 0
      %1602 = vst.msk [vmem:[#allocation2 + $0x40] sm:$0xf] %vm1497, 0
      %1603 = vst.msk [vmem:[#allocation2 + $0x40] sm:$0xf] %vm1499, 0
      %1604 = vst.msk [vmem:[#allocation2 + $0x40] sm:$0xf] %vm1501, 0
      %1605 = vrot.lane.b32.xlu0 %v1574, 126
      %v1606 = vpop.permute.xlu0 %1605
      %vm1608 = vcmask 637956
      %1609 = vst.msk [vmem:[#allocation2 + $0x40] sm:$0xf0] %vm1608, %v1606
      %vm1610 = vcmask 162964
      %1611 = vst.msk [vmem:[#allocation2 + $0x40] sm:$0xf0] %vm1610, 0
      %vm1612 = vcmask 326964
      %1613 = vst.msk [vmem:[#allocation2 + $0x40] sm:$0xf0] %vm1612, 0
      %vm1614 = vcmask 490964
      %1615 = vst.msk [vmem:[#allocation2 + $0x40] sm:$0xf0] %vm1614, 0
      %vm1616 = vcmask 654964
      %1617 = vst.msk [vmem:[#allocation2 + $0x40] sm:$0xf0] %vm1616, 0
      %1618 = vrot.lane.b32.xlu0 %v1560, 125
      %v1619 = vpop.permute.xlu0 %1618
      %vm1621 = vcmask 625664
      %1622 = vst.msk [vmem:[#allocation2 + $0x60] sm:$0xf] %vm1621, %v1619
      %vm1623 = vcmask 158856
      %1624 = vst.msk [vmem:[#allocation2 + $0x60] sm:$0xf] %vm1623, 0
      %vm1625 = vcmask 322856
      %1626 = vst.msk [vmem:[#allocation2 + $0x60] sm:$0xf] %vm1625, 0
      %vm1627 = vcmask 486856
      %1628 = vst.msk [vmem:[#allocation2 + $0x60] sm:$0xf] %vm1627, 0
      %vm1629 = vcmask 650856
      %1630 = vst.msk [vmem:[#allocation2 + $0x60] sm:$0xf] %vm1629, 0
      %v1631 = vld [vmem:[%s4] sm:$0xf]
      %v1632 = vld [vmem:[#allocation2] sm:$0xff]
      %v1633 = vld [vmem:[#allocation2 + $0x20] sm:$0xff]
      %v1634 = vld [vmem:[#allocation2 + $0x40] sm:$0xff]
      %v1635 = vld [vmem:[#allocation2 + $0x60] sm:$0xf]
      %1637 = vset.pattern.permute.xlu0 0
      %1638 = vperm.xlu0 %1637, %v1559
      %v1639 = vpop.permute.xlu0 %1638
      %vm1641 = vcmask 457728
      %v1643 = vsel %vm1641, %v1631, 0
      %v1646 = vsel %vm789, %v1635, 0
      %1648 = vmatprep.subr.bf16.mxu0 0
      %1649 = vmatpush1.bf16.msra.mxu0 %v1632
      %1650 = vmatprep.subr.bf16.mxu0 0
      %1651 = vmatpush1.bf16.msra.mxu0 %v1633
      %1652 = vmatprep.subr.bf16.mxu0 0
      %1653 = vmatpush1.bf16.msra.mxu0 %v1634
      %1654 = vmatprep.subr.bf16.mxu0 0
      %1655 = vmatpush1.bf16.msra.mxu0 %v1646
      %1656 = vmatprep.subr.bf16.mxu0 0
      %1657 = vmatpush1.bf16.msra.mxu0 0
      %1658 = vmatprep.subr.bf16.mxu0 0
      %1659 = vmatpush1.bf16.msra.mxu0 0
      %1660 = vmatprep.subr.bf16.mxu0 0
      %1661 = vmatpush1.bf16.msra.mxu0 0
      %1662 = vmatprep.subr.bf16.mxu0 0
      %1663 = vmatpush1.bf16.msra.mxu0 0
      %1664 = vmatprep.subr.bf16.mxu0 0
      %1665 = vmatpush1.bf16.msra.mxu0 0
      %1666 = vmatprep.subr.bf16.mxu0 0
      %1667 = vmatpush1.bf16.msra.mxu0 0
      %1668 = vmatprep.subr.bf16.mxu0 0
      %1669 = vmatpush1.bf16.msra.mxu0 0
      %1670 = vmatprep.subr.bf16.mxu0 0
      %1671 = vmatpush1.bf16.msra.mxu0 0
      %1672 = vmatprep.subr.bf16.mxu0 0
      %1673 = vmatpush1.bf16.msra.mxu0 0
      %1674 = vmatprep.subr.bf16.mxu0 0
      %1675 = vmatpush1.bf16.msra.mxu0 0
      %1676 = vmatprep.subr.bf16.mxu0 0
      %1677 = vmatpush1.bf16.msra.mxu0 0
      %1678 = vmatprep.subr.bf16.mxu0 0
      %1679 = vmatpush1.bf16.msra.mxu0 0
      %1680 = vmatprep.mubr.bf16.mxu0 0
      %1681 = vmatmul.mubr.bf16.gmra.mrb[0].mxu0 %v1643
      %v1682 = vpop.f32.mrb[0].mxu0
      %v1683 = vadd.f32 %v1639, %v1682
      %v1684 = vpop.f32.mrb[0].mxu0
      %v1685 = vpop.f32.mrb[0].mxu0
      %v1686 = vpop.f32.mrb[0].mxu0
      %1687 = vdwg.mxu0
      %v1688 = vmax.f32 %v1683, 0.0
      %v1689 = vld [vmem:[%s10 + $0x38] sm:$0xff]
      %v1690 = vld [vmem:[%s10 + $0x40] sm:$0xff]
      %v1691 = vld [vmem:[%s10 + $0x48] sm:$0xff]
      %v1692 = vld [vmem:[%s10 + $0x50] sm:$0xff]
      %v1693 = vpack.c.bf16 %v1688, %v1688
      %1695 = vrot.lane.b32.xlu0 %v1693, 1
      %v1696 = vpop.permute.xlu0 %1695
      %1698 = vst.msk [vmem:[#allocation2] sm:$0xf] %vm1478, %v1696
      %1699 = vst.msk [vmem:[#allocation2] sm:$0xf] %vm594, 0
      %1700 = vst.msk [vmem:[#allocation2] sm:$0xf] %vm1481, 0
      %1701 = vst.msk [vmem:[#allocation2] sm:$0xf] %vm1483, 0
      %1702 = vst.msk [vmem:[#allocation2] sm:$0xf] %vm1485, 0
      %v1703 = vrot.slane %v1693, 4
      %1705 = vst.msk [vmem:[#allocation2] sm:$0xf0] %vm1488, %v1703
      %1706 = vrot.lane.b32.xlu0 %v1693, 127
      %v1707 = vpop.permute.xlu0 %1706
      %1709 = vst.msk [vmem:[#allocation2 + $0x20] sm:$0xf] %vm1493, %v1707
      %1710 = vst.msk [vmem:[#allocation2 + $0x20] sm:$0xf] %vm1495, 0
      %1711 = vst.msk [vmem:[#allocation2 + $0x20] sm:$0xf] %vm1497, 0
      %1712 = vst.msk [vmem:[#allocation2 + $0x20] sm:$0xf] %vm1499, 0
      %1713 = vst.msk [vmem:[#allocation2 + $0x20] sm:$0xf] %vm1501, 0
      %v1714 = vld [vmem:[%s5] sm:$0xf]
      %v1715 = vld [vmem:[%s5 + $0x4] sm:$0xf]
      %v1716 = vld [vmem:[%s5 + $0x8] sm:$0xf]
      %v1717 = vld [vmem:[%s5 + $0xc] sm:$0xf]
      %v1718 = vld [vmem:[#allocation2] sm:$0xff]
      %v1719 = vld [vmem:[#allocation2 + $0x20] sm:$0xf]
      %1721 = vset.pattern.permute.xlu0 0
      %1722 = vperm.xlu0 %1721, %v1689
      %v1723 = vpop.permute.xlu0 %1722
      %1726 = vset.pattern.permute.xlu0 0
      %1727 = vperm.xlu0 %1726, %v1690
      %v1728 = vpop.permute.xlu0 %1727
      %1731 = vset.pattern.permute.xlu0 0
      %1732 = vperm.xlu0 %1731, %v1691
      %v1733 = vpop.permute.xlu0 %1732
      %1736 = vset.pattern.permute.xlu0 0
      %1737 = vperm.xlu0 %1736, %v1692
      %v1738 = vpop.permute.xlu0 %1737
      %v1744 = vunpack.c.l.b16 %v1714
      %v1745 = vunpack.c.l.b16 %v1715
      %v1746 = vunpack.c.l.b16 %v1716
      %v1747 = vunpack.c.l.b16 %v1717
      %v1748 = vpack.c.b16 %v1745, %v1744
      %v1749 = vpack.c.b16 %v1747, %v1746
      %v1751 = vsel %vm1511, %v1748, 0
      %v1754 = vsel %vm1511, %v1749, 0
      %v1757 = vsel %vm789, %v1719, 0
      %1759 = vmatprep.subr.bf16.mxu0 0
      %1760 = vmatpush1.bf16.msra.mxu0 %v1718
      %1761 = vmatprep.subr.bf16.mxu0 0
      %1762 = vmatpush1.bf16.msra.mxu0 %v1757
      %1763 = vmatprep.subr.bf16.mxu0 0
      %1764 = vmatpush1.bf16.msra.mxu0 0
      %1765 = vmatprep.subr.bf16.mxu0 0
      %1766 = vmatpush1.bf16.msra.mxu0 0
      %1767 = vmatprep.subr.bf16.mxu0 0
      %1768 = vmatpush1.bf16.msra.mxu0 0
      %1769 = vmatprep.subr.bf16.mxu0 0
      %1770 = vmatpush1.bf16.msra.mxu0 0
      %1771 = vmatprep.subr.bf16.mxu0 0
      %1772 = vmatpush1.bf16.msra.mxu0 0
      %1773 = vmatprep.subr.bf16.mxu0 0
      %1774 = vmatpush1.bf16.msra.mxu0 0
      %1775 = vmatprep.subr.bf16.mxu0 0
      %1776 = vmatpush1.bf16.msra.mxu0 0
      %1777 = vmatprep.subr.bf16.mxu0 0
      %1778 = vmatpush1.bf16.msra.mxu0 0
      %1779 = vmatprep.subr.bf16.mxu0 0
      %1780 = vmatpush1.bf16.msra.mxu0 0
      %1781 = vmatprep.subr.bf16.mxu0 0
      %1782 = vmatpush1.bf16.msra.mxu0 0
      %1783 = vmatprep.subr.bf16.mxu0 0
      %1784 = vmatpush1.bf16.msra.mxu0 0
      %1785 = vmatprep.subr.bf16.mxu0 0
      %1786 = vmatpush1.bf16.msra.mxu0 0
      %1787 = vmatprep.subr.bf16.mxu0 0
      %1788 = vmatpush1.bf16.msra.mxu0 0
      %1789 = vmatprep.subr.bf16.mxu0 0
      %1790 = vmatpush1.bf16.msra.mxu0 0
      %1791 = vmatprep.mubr.bf16.mxu0 0
      %1792 = vmatmul.mubr.bf16.gmra.mrb[0].mxu0 %v1751
      %v1793 = vpop.f32.mrb[0].mxu0
      %v1794 = vadd.f32 %v1723, %v1793
      %v1795 = vpop.f32.mrb[0].mxu0
      %v1796 = vpop.f32.mrb[0].mxu0
      %v1797 = vadd.f32 %v1728, %v1796
      %v1798 = vpop.f32.mrb[0].mxu0
      %1799 = vmatprep.mubr.bf16.mxu0 0
      %1800 = vmatmul.mubr.bf16.gmra.mrb[0].mxu0 %v1754
      %v1801 = vpop.f32.mrb[0].mxu0
      %v1802 = vadd.f32 %v1733, %v1801
      %v1803 = vpop.f32.mrb[0].mxu0
      %v1804 = vpop.f32.mrb[0].mxu0
      %v1805 = vadd.f32 %v1738, %v1804
      %v1806 = vpop.f32.mrb[0].mxu0
      %1807 = vdwg.mxu0
      %v1808 = vmax.f32 %v1794, 0.0
      %v1809 = vmax.f32 %v1797, 0.0
      %v1810 = vmax.f32 %v1802, 0.0
      %v1811 = vmax.f32 %v1805, 0.0
      %v1812 = vadd.f32 %v1808, %v1460
      %v1813 = vadd.f32 %v1809, %v1463
      %v1814 = vadd.f32 %v1810, %v1468
      %v1815 = vadd.f32 %v1811, %v1471
      %1820 = vrot.lane.b32.xlu0 %v1812, 127
      %v1821 = vpop.permute.xlu0 %1820
      %1822 = vrot.lane.b32.xlu0 %v1813, 127
      %v1823 = vpop.permute.xlu0 %1822
      %1824 = vrot.lane.b32.xlu0 %v1814, 127
      %v1825 = vpop.permute.xlu0 %1824
      %1826 = vrot.lane.b32.xlu0 %v1815, 127
      %v1827 = vpop.permute.xlu0 %1826
      %v1832 = vmax.f32 %v1812, %v1821
      %v1833 = vmax.f32 %v1813, %v1823
      %v1834 = vmax.f32 %v1814, %v1825
      %v1835 = vmax.f32 %v1815, %v1827
      %1836 = vrot.lane.b32.xlu0 %v1812, 126
      %v1837 = vpop.permute.xlu0 %1836
      %1838 = vrot.lane.b32.xlu0 %v1813, 126
      %v1839 = vpop.permute.xlu0 %1838
      %1840 = vrot.lane.b32.xlu0 %v1814, 126
      %v1841 = vpop.permute.xlu0 %1840
      %1842 = vrot.lane.b32.xlu0 %v1815, 126
      %v1843 = vpop.permute.xlu0 %1842
      %v1848 = vmax.f32 %v1832, %v1837
      %v1849 = vmax.f32 %v1833, %v1839
      %v1850 = vmax.f32 %v1834, %v1841
      %v1851 = vmax.f32 %v1835, %v1843
      %1852 = vrot.lane.b32.xlu0 %v1812, 125
      %v1853 = vpop.permute.xlu0 %1852
      %1854 = vrot.lane.b32.xlu0 %v1813, 125
      %v1855 = vpop.permute.xlu0 %1854
      %1856 = vrot.lane.b32.xlu0 %v1814, 125
      %v1857 = vpop.permute.xlu0 %1856
      %1858 = vrot.lane.b32.xlu0 %v1815, 125
      %v1859 = vpop.permute.xlu0 %1858
      %v1864 = vmax.f32 %v1848, %v1853
      %v1865 = vmax.f32 %v1849, %v1855
      %v1866 = vmax.f32 %v1850, %v1857
      %v1867 = vmax.f32 %v1851, %v1859
      %1868 = vrot.lane.b32.xlu0 %v1812, 124
      %v1869 = vpop.permute.xlu0 %1868
      %1870 = vrot.lane.b32.xlu0 %v1813, 124
      %v1871 = vpop.permute.xlu0 %1870
      %1872 = vrot.lane.b32.xlu0 %v1814, 124
      %v1873 = vpop.permute.xlu0 %1872
      %1874 = vrot.lane.b32.xlu0 %v1815, 124
      %v1875 = vpop.permute.xlu0 %1874
      %v1880 = vmax.f32 %v1864, %v1869
      %v1881 = vmax.f32 %v1865, %v1871
      %v1882 = vmax.f32 %v1866, %v1873
      %v1883 = vmax.f32 %v1867, %v1875
      %v1884 = vpack.c.bf16 %v1881, %v1880
      %v1885 = vpack.c.bf16 %v1883, %v1882
      %v1886 = vld [vmem:[%s12] sm:$0xf]
      %v1887 = vld [vmem:[%s12 + $0x4] sm:$0xf]
      %v1888 = vld [vmem:[%s12 + $0x8] sm:$0xf]
      %v1889 = vld [vmem:[%s12 + $0xc] sm:$0xf]
      %v1890 = vld [vmem:[%s12 + $0x10] sm:$0xf]
      %v1891 = vld [vmem:[%s12 + $0x14] sm:$0xf]
      %v1892 = vld [vmem:[%s12 + $0x18] sm:$0xf]
      %v1893 = vld [vmem:[%s12 + $0x1c] sm:$0xf]
      %v1894 = vld [vmem:[%s12 + $0x20] sm:$0xf]
      %v1895 = vld [vmem:[%s12 + $0x24] sm:$0x3]
      %v1906 = vunpack.c.l.b16 %v1886
      %v1907 = vunpack.c.l.b16 %v1887
      %v1908 = vunpack.c.l.b16 %v1888
      %v1909 = vunpack.c.l.b16 %v1889
      %v1910 = vunpack.c.l.b16 %v1890
      %v1911 = vunpack.c.l.b16 %v1891
      %v1912 = vunpack.c.l.b16 %v1892
      %v1913 = vunpack.c.l.b16 %v1893
      %v1914 = vunpack.c.l.b16 %v1894
      %v1915 = vunpack.c.l.b16 %v1895
      %v1916 = vpack.c.b16 %v1907, %v1906
      %v1917 = vpack.c.b16 %v1909, %v1908
      %v1918 = vpack.c.b16 %v1911, %v1910
      %v1919 = vpack.c.b16 %v1913, %v1912
      %v1920 = vpack.c.b16 %v1915, %v1914
      %vm1925 = vcmask 621568
      %v1927 = vsel %vm1925, %v1884, 0
      %v1930 = vsel %vm1925, %v1885, 0
      %v1933 = vsel %vm1179, %v1920, 0
      %1935 = vmatprep.subr.bf16.mxu0 0
      %1936 = vmatpush1.bf16.msra.mxu0 %v1916
      %1937 = vmatprep.subr.bf16.mxu0 0
      %1938 = vmatpush1.bf16.msra.mxu0 %v1917
      %1939 = vmatprep.subr.bf16.mxu0 0
      %1940 = vmatpush1.bf16.msra.mxu0 %v1918
      %1941 = vmatprep.subr.bf16.mxu0 0
      %1942 = vmatpush1.bf16.msra.mxu0 %v1919
      %1943 = vmatprep.subr.bf16.mxu0 0
      %1944 = vmatpush1.bf16.msra.mxu0 %v1933
      %1945 = vmatprep.subr.bf16.mxu0 0
      %1946 = vmatpush1.bf16.msra.mxu0 0
      %1947 = vmatprep.subr.bf16.mxu0 0
      %1948 = vmatpush1.bf16.msra.mxu0 0
      %1949 = vmatprep.subr.bf16.mxu0 0
      %1950 = vmatpush1.bf16.msra.mxu0 0
      %1951 = vmatprep.subr.bf16.mxu0 0
      %1952 = vmatpush1.bf16.msra.mxu0 0
      %1953 = vmatprep.subr.bf16.mxu0 0
      %1954 = vmatpush1.bf16.msra.mxu0 0
      %1955 = vmatprep.subr.bf16.mxu0 0
      %1956 = vmatpush1.bf16.msra.mxu0 0
      %1957 = vmatprep.subr.bf16.mxu0 0
      %1958 = vmatpush1.bf16.msra.mxu0 0
      %1959 = vmatprep.subr.bf16.mxu0 0
      %1960 = vmatpush1.bf16.msra.mxu0 0
      %1961 = vmatprep.subr.bf16.mxu0 0
      %1962 = vmatpush1.bf16.msra.mxu0 0
      %1963 = vmatprep.subr.bf16.mxu0 0
      %1964 = vmatpush1.bf16.msra.mxu0 0
      %1965 = vmatprep.subr.bf16.mxu0 0
      %1966 = vmatpush1.bf16.msra.mxu0 0
      %1967 = vmatprep.mubr.bf16.mxu0 0
      %1968 = vmatmul.mubr.bf16.gmra.mrb[0].mxu0 %v1927
      %v1969 = vpop.f32.mrb[0].mxu0
      %v1970 = vadd.f32 0.0, %v1969
      %v1971 = vpop.f32.mrb[0].mxu0
      %v1972 = vpop.f32.mrb[0].mxu0
      %v1973 = vadd.f32 0.0, %v1972
      %v1974 = vpop.f32.mrb[0].mxu0
      %1975 = vmatprep.mubr.bf16.mxu0 0
      %1976 = vmatmul.mubr.bf16.gmra.mrb[0].mxu0 %v1930
      %v1977 = vpop.f32.mrb[0].mxu0
      %v1978 = vadd.f32 0.0, %v1977
      %v1979 = vpop.f32.mrb[0].mxu0
      %v1980 = vpop.f32.mrb[0].mxu0
      %v1981 = vadd.f32 0.0, %v1980
      %v1982 = vpop.f32.mrb[0].mxu0
      %1983 = vdwg.mxu0
      %v1984 = vpack.c.bf16 %v1973, %v1970
      %v1985 = vpack.c.bf16 %v1981, %v1978
      %v1986 = vld [vmem:[%s10 + $0x58] sm:$0xff]
      %v1987 = vld [vmem:[%s10 + $0x60] sm:$0xff]
      %v1988 = vld [vmem:[%s10 + $0x68] sm:$0xff]
      %v1989 = vld [vmem:[%s10 + $0x70] sm:$0xff]
      %vm1990 = vcmask 130048
      %1991 = vst.msk [vmem:[#allocation2] sm:$0xff] %vm1990, 0
      %1992 = vst.msk [vmem:[#allocation2 + $0x20] sm:$0xff] %vm1990, 0
      %1995 = vrot.lane.b32.xlu0 %v1984, 2
      %v1996 = vpop.permute.xlu0 %1995
      %1997 = vrot.lane.b32.xlu0 %v1985, 2
      %v1998 = vpop.permute.xlu0 %1997
      %vm2001 = vcmask 130064
      %2002 = vst.msk [vmem:[#allocation2 + $0x40] sm:$0xff] %vm2001, %v1996
      %2003 = vst.msk [vmem:[#allocation2 + $0x60] sm:$0xff] %vm2001, %v1998
      %vm2004 = vcmask 15360
      %2005 = vst.msk [vmem:[#allocation2 + $0x40] sm:$0xff] %vm2004, 0
      %2006 = vst.msk [vmem:[#allocation2 + $0x60] sm:$0xff] %vm2004, 0
      %vm2007 = vcmask 48160
      %2008 = vst.msk [vmem:[#allocation2 + $0x40] sm:$0xff] %vm2007, 0
      %2009 = vst.msk [vmem:[#allocation2 + $0x60] sm:$0xff] %vm2007, 0
      %vm2010 = vcmask 80960
      %2011 = vst.msk [vmem:[#allocation2 + $0x40] sm:$0xff] %vm2010, 0
      %2012 = vst.msk [vmem:[#allocation2 + $0x60] sm:$0xff] %vm2010, 0
      %vm2013 = vcmask 113760
      %2014 = vst.msk [vmem:[#allocation2 + $0x40] sm:$0xff] %vm2013, 0
      %2015 = vst.msk [vmem:[#allocation2 + $0x60] sm:$0xff] %vm2013, 0
      %2016 = vst.msk [vmem:[#allocation2 + $0x80] sm:$0xff] %vm1990, %v1984
      %2017 = vst.msk [vmem:[#allocation2 + $0xa0] sm:$0xff] %vm1990, %v1985
      %2018 = vrot.lane.b32.xlu0 %v1984, 126
      %v2019 = vpop.permute.xlu0 %2018
      %2020 = vrot.lane.b32.xlu0 %v1985, 126
      %v2021 = vpop.permute.xlu0 %2020
      %vm2024 = vcmask 113664
      %2025 = vst.msk [vmem:[#allocation2 + $0xc0] sm:$0xff] %vm2024, %v2019
      %2026 = vst.msk [vmem:[#allocation2 + $0xe0] sm:$0xff] %vm2024, %v2021
      %vm2027 = vcmask 31760
      %2028 = vst.msk [vmem:[#allocation2 + $0xc0] sm:$0xff] %vm2027, 0
      %2029 = vst.msk [vmem:[#allocation2 + $0xe0] sm:$0xff] %vm2027, 0
      %vm2030 = vcmask 64560
      %2031 = vst.msk [vmem:[#allocation2 + $0xc0] sm:$0xff] %vm2030, 0
      %2032 = vst.msk [vmem:[#allocation2 + $0xe0] sm:$0xff] %vm2030, 0
      %vm2033 = vcmask 97360
      %2034 = vst.msk [vmem:[#allocation2 + $0xc0] sm:$0xff] %vm2033, 0
      %2035 = vst.msk [vmem:[#allocation2 + $0xe0] sm:$0xff] %vm2033, 0
      %vm2036 = vcmask 130160
      %2037 = vst.msk [vmem:[#allocation2 + $0xc0] sm:$0xff] %vm2036, 0
      %2038 = vst.msk [vmem:[#allocation2 + $0xe0] sm:$0xff] %vm2036, 0
      %2039 = vst.msk [vmem:[#allocation2 + $0x100] sm:$0xff] %vm1990, 0
      %2040 = vst.msk [vmem:[#allocation2 + $0x120] sm:$0xff] %vm1990, 0
      %v2041 = vld [vmem:[%s6] sm:$0xff]
      %v2042 = vld [vmem:[%s6 + $0x8] sm:$0xff]
      %v2043 = vld [vmem:[%s6 + $0x10] sm:$0xff]
      %v2044 = vld [vmem:[%s6 + $0x18] sm:$0xff]
      %v2045 = vld [vmem:[#allocation2] sm:$0xff]
      %v2046 = vld [vmem:[#allocation2 + $0x20] sm:$0xff]
      %v2047 = vld [vmem:[#allocation2 + $0x40] sm:$0xff]
      %v2048 = vld [vmem:[#allocation2 + $0x60] sm:$0xff]
      %v2049 = vld [vmem:[#allocation2 + $0x80] sm:$0xff]
      %v2050 = vld [vmem:[#allocation2 + $0xa0] sm:$0xff]
      %v2051 = vld [vmem:[#allocation2 + $0xc0] sm:$0xff]
      %v2052 = vld [vmem:[#allocation2 + $0xe0] sm:$0xff]
      %v2053 = vld [vmem:[#allocation2 + $0x100] sm:$0xff]
      %v2054 = vld [vmem:[#allocation2 + $0x120] sm:$0xff]
      %2056 = vset.pattern.permute.xlu0 0
      %2057 = vperm.xlu0 %2056, %v1986
      %v2058 = vpop.permute.xlu0 %2057
      %2061 = vset.pattern.permute.xlu0 0
      %2062 = vperm.xlu0 %2061, %v1987
      %v2063 = vpop.permute.xlu0 %2062
      %2066 = vset.pattern.permute.xlu0 0
      %2067 = vperm.xlu0 %2066, %v1988
      %v2068 = vpop.permute.xlu0 %2067
      %2071 = vset.pattern.permute.xlu0 0
      %2072 = vperm.xlu0 %2071, %v1989
      %v2073 = vpop.permute.xlu0 %2072
      %v2079 = vunpack.c.l.b16 %v2041
      %v2080 = vunpack.c.h.b16 %v2041
      %v2081 = vunpack.c.l.b16 %v2042
      %v2082 = vunpack.c.h.b16 %v2042
      %v2083 = vunpack.c.l.b16 %v2043
      %v2084 = vunpack.c.h.b16 %v2043
      %v2085 = vunpack.c.l.b16 %v2044
      %v2086 = vunpack.c.h.b16 %v2044
      %v2087 = vpack.c.b16 %v2081, %v2079
      %v2088 = vpack.c.b16 %v2082, %v2080
      %v2089 = vpack.c.b16 %v2085, %v2083
      %v2090 = vpack.c.b16 %v2086, %v2084
      %vm2093 = vcmask 261120
      %v2095 = vsel %vm2093, %v2088, 0
      %v2098 = vsel %vm2093, %v2090, 0
      %2100 = vmatprep.subr.bf16.mxu0 0
      %2101 = vmatpush1.bf16.msra.mxu0 %v2045
      %2102 = vmatprep.subr.bf16.mxu0 0
      %2103 = vmatpush1.bf16.msra.mxu0 %v2046
      %2104 = vmatprep.subr.bf16.mxu0 0
      %2105 = vmatpush1.bf16.msra.mxu0 %v2047
      %2106 = vmatprep.subr.bf16.mxu0 0
      %2107 = vmatpush1.bf16.msra.mxu0 %v2048
      %2108 = vmatprep.subr.bf16.mxu0 0
      %2109 = vmatpush1.bf16.msra.mxu0 %v2049
      %2110 = vmatprep.subr.bf16.mxu0 0
      %2111 = vmatpush1.bf16.msra.mxu0 %v2050
      %2112 = vmatprep.subr.bf16.mxu0 0
      %2113 = vmatpush1.bf16.msra.mxu0 %v2051
      %2114 = vmatprep.subr.bf16.mxu0 0
      %2115 = vmatpush1.bf16.msra.mxu0 %v2052
      %2116 = vmatprep.subr.bf16.mxu0 0
      %2117 = vmatpush1.bf16.msra.mxu0 %v2053
      %2118 = vmatprep.subr.bf16.mxu0 0
      %2119 = vmatpush1.bf16.msra.mxu0 %v2054
      %2120 = vmatprep.subr.bf16.mxu0 0
      %2121 = vmatpush1.bf16.msra.mxu0 0
      %2122 = vmatprep.subr.bf16.mxu0 0
      %2123 = vmatpush1.bf16.msra.mxu0 0
      %2124 = vmatprep.subr.bf16.mxu0 0
      %2125 = vmatpush1.bf16.msra.mxu0 0
      %2126 = vmatprep.subr.bf16.mxu0 0
      %2127 = vmatpush1.bf16.msra.mxu0 0
      %2128 = vmatprep.subr.bf16.mxu0 0
      %2129 = vmatpush1.bf16.msra.mxu0 0
      %2130 = vmatprep.subr.bf16.mxu0 0
      %2131 = vmatpush1.bf16.msra.mxu0 0
      %2132 = vmatprep.mubr.bf16.mxu0 %v2095
      %2133 = vmatmul.mubr.bf16.gmra.mrb[0].mxu0 %v2087
      %v2134 = vpop.f32.mrb[0].mxu0
      %v2135 = vadd.f32 %v2058, %v2134
      %v2136 = vpop.f32.mrb[0].mxu0
      %v2137 = vpop.f32.mrb[0].mxu0
      %v2138 = vadd.f32 %v2063, %v2137
      %v2139 = vpop.f32.mrb[0].mxu0
      %2140 = vmatprep.mubr.bf16.mxu0 %v2098
      %2141 = vmatmul.mubr.bf16.gmra.mrb[0].mxu0 %v2089
      %v2142 = vpop.f32.mrb[0].mxu0
      %v2143 = vadd.f32 %v2068, %v2142
      %v2144 = vpop.f32.mrb[0].mxu0
      %v2145 = vpop.f32.mrb[0].mxu0
      %v2146 = vadd.f32 %v2073, %v2145
      %v2147 = vpop.f32.mrb[0].mxu0
      %2148 = vdwg.mxu0
      %v2149 = vld [vmem:[%s10 + $0x78] sm:$0xff]
      %v2150 = vld [vmem:[%s10 + $0x80] sm:$0xff]
      %2151 = vrot.lane.b32.xlu0 %v1984, 1
      %v2152 = vpop.permute.xlu0 %2151
      %2153 = vrot.lane.b32.xlu0 %v1985, 1
      %v2154 = vpop.permute.xlu0 %2153
      %vm2157 = vcmask 130056
      %2158 = vst.msk [vmem:[#allocation2] sm:$0xff] %vm2157, %v2152
      %2159 = vst.msk [vmem:[#allocation2 + $0x20] sm:$0xff] %vm2157, %v2154
      %vm2160 = vcmask 7168
      %2161 = vst.msk [vmem:[#allocation2] sm:$0xff] %vm2160, 0
      %2162 = vst.msk [vmem:[#allocation2 + $0x20] sm:$0xff] %vm2160, 0
      %vm2163 = vcmask 39968
      %2164 = vst.msk [vmem:[#allocation2] sm:$0xff] %vm2163, 0
      %2165 = vst.msk [vmem:[#allocation2 + $0x20] sm:$0xff] %vm2163, 0
      %vm2166 = vcmask 72768
      %2167 = vst.msk [vmem:[#allocation2] sm:$0xff] %vm2166, 0
      %2168 = vst.msk [vmem:[#allocation2 + $0x20] sm:$0xff] %vm2166, 0
      %vm2169 = vcmask 105568
      %2170 = vst.msk [vmem:[#allocation2] sm:$0xff] %vm2169, 0
      %2171 = vst.msk [vmem:[#allocation2 + $0x20] sm:$0xff] %vm2169, 0
      %2172 = vst.msk [vmem:[#allocation2 + $0x40] sm:$0xff] %vm1990, %v1984
      %2173 = vst.msk [vmem:[#allocation2 + $0x60] sm:$0xff] %vm1990, %v1985
      %2174 = vrot.lane.b32.xlu0 %v1984, 127
      %v2175 = vpop.permute.xlu0 %2174
      %2176 = vrot.lane.b32.xlu0 %v1985, 127
      %v2177 = vpop.permute.xlu0 %2176
      %vm2180 = vcmask 121856
      %2181 = vst.msk [vmem:[#allocation2 + $0x80] sm:$0xff] %vm2180, %v2175
      %2182 = vst.msk [vmem:[#allocation2 + $0xa0] sm:$0xff] %vm2180, %v2177
      %vm2183 = vcmask 31768
      %2184 = vst.msk [vmem:[#allocation2 + $0x80] sm:$0xff] %vm2183, 0
      %2185 = vst.msk [vmem:[#allocation2 + $0xa0] sm:$0xff] %vm2183, 0
      %vm2186 = vcmask 64568
      %2187 = vst.msk [vmem:[#allocation2 + $0x80] sm:$0xff] %vm2186, 0
      %2188 = vst.msk [vmem:[#allocation2 + $0xa0] sm:$0xff] %vm2186, 0
      %vm2189 = vcmask 97368
      %2190 = vst.msk [vmem:[#allocation2 + $0x80] sm:$0xff] %vm2189, 0
      %2191 = vst.msk [vmem:[#allocation2 + $0xa0] sm:$0xff] %vm2189, 0
      %vm2192 = vcmask 130168
      %2193 = vst.msk [vmem:[#allocation2 + $0x80] sm:$0xff] %vm2192, 0
      %2194 = vst.msk [vmem:[#allocation2 + $0xa0] sm:$0xff] %vm2192, 0
      %v2195 = vld [vmem:[%s7] sm:$0xf]
      %v2196 = vld [vmem:[%s7 + $0x4] sm:$0xf]
      %v2197 = vld [vmem:[#allocation2] sm:$0xff]
      %v2198 = vld [vmem:[#allocation2 + $0x20] sm:$0xff]
      %v2199 = vld [vmem:[#allocation2 + $0x40] sm:$0xff]
      %v2200 = vld [vmem:[#allocation2 + $0x60] sm:$0xff]
      %v2201 = vld [vmem:[#allocation2 + $0x80] sm:$0xff]
      %v2202 = vld [vmem:[#allocation2 + $0xa0] sm:$0xff]
      %2204 = vset.pattern.permute.xlu0 0
      %2205 = vperm.xlu0 %2204, %v2149
      %v2206 = vpop.permute.xlu0 %2205
      %2209 = vset.pattern.permute.xlu0 0
      %2210 = vperm.xlu0 %2209, %v2150
      %v2211 = vpop.permute.xlu0 %2210
      %v2215 = vunpack.c.l.b16 %v2195
      %v2216 = vunpack.c.l.b16 %v2196
      %v2217 = vpack.c.b16 %v2216, %v2215
      %vm2218 = vcmask 785408
      %v2220 = vsel %vm2218, %v2217, 0
      %2222 = vmatprep.subr.bf16.mxu0 0
      %2223 = vmatpush1.bf16.msra.mxu0 %v2197
      %2224 = vmatprep.subr.bf16.mxu0 0
      %2225 = vmatpush1.bf16.msra.mxu0 %v2198
      %2226 = vmatprep.subr.bf16.mxu0 0
      %2227 = vmatpush1.bf16.msra.mxu0 %v2199
      %2228 = vmatprep.subr.bf16.mxu0 0
      %2229 = vmatpush1.bf16.msra.mxu0 %v2200
      %2230 = vmatprep.subr.bf16.mxu0 0
      %2231 = vmatpush1.bf16.msra.mxu0 %v2201
      %2232 = vmatprep.subr.bf16.mxu0 0
      %2233 = vmatpush1.bf16.msra.mxu0 %v2202
      %2234 = vmatprep.subr.bf16.mxu0 0
      %2235 = vmatpush1.bf16.msra.mxu0 0
      %2236 = vmatprep.subr.bf16.mxu0 0
      %2237 = vmatpush1.bf16.msra.mxu0 0
      %2238 = vmatprep.subr.bf16.mxu0 0
      %2239 = vmatpush1.bf16.msra.mxu0 0
      %2240 = vmatprep.subr.bf16.mxu0 0
      %2241 = vmatpush1.bf16.msra.mxu0 0
      %2242 = vmatprep.subr.bf16.mxu0 0
      %2243 = vmatpush1.bf16.msra.mxu0 0
      %2244 = vmatprep.subr.bf16.mxu0 0
      %2245 = vmatpush1.bf16.msra.mxu0 0
      %2246 = vmatprep.subr.bf16.mxu0 0
      %2247 = vmatpush1.bf16.msra.mxu0 0
      %2248 = vmatprep.subr.bf16.mxu0 0
      %2249 = vmatpush1.bf16.msra.mxu0 0
      %2250 = vmatprep.subr.bf16.mxu0 0
      %2251 = vmatpush1.bf16.msra.mxu0 0
      %2252 = vmatprep.subr.bf16.mxu0 0
      %2253 = vmatpush1.bf16.msra.mxu0 0
      %2254 = vmatprep.mubr.bf16.mxu0 0
      %2255 = vmatmul.mubr.bf16.gmra.mrb[0].mxu0 %v2220
      %v2256 = vpop.f32.mrb[0].mxu0
      %v2257 = vadd.f32 %v2206, %v2256
      %v2258 = vpop.f32.mrb[0].mxu0
      %v2259 = vpop.f32.mrb[0].mxu0
      %v2260 = vadd.f32 %v2211, %v2259
      %v2261 = vpop.f32.mrb[0].mxu0
      %2262 = vdwg.mxu0
      %v2263 = vmax.f32 %v2257, 0.0
      %v2264 = vmax.f32 %v2260, 0.0
      %v2265 = vld [vmem:[%s10 + $0x88] sm:$0xff]
      %v2266 = vld [vmem:[%s10 + $0x90] sm:$0xff]
      %v2267 = vpack.c.bf16 %v2264, %v2263
      %2269 = vrot.lane.b32.xlu0 %v2267, 3
      %v2270 = vpop.permute.xlu0 %2269
      %vm2272 = vcmask 130072
      %2273 = vst.msk [vmem:[#allocation2] sm:$0xff] %vm2272, %v2270
      %vm2274 = vcmask 23552
      %2275 = vst.msk [vmem:[#allocation2] sm:$0xff] %vm2274, 0
      %vm2276 = vcmask 56352
      %2277 = vst.msk [vmem:[#allocation2] sm:$0xff] %vm2276, 0
      %vm2278 = vcmask 89152
      %2279 = vst.msk [vmem:[#allocation2] sm:$0xff] %vm2278, 0
      %vm2280 = vcmask 121952
      %2281 = vst.msk [vmem:[#allocation2] sm:$0xff] %vm2280, 0
      %2282 = vrot.lane.b32.xlu0 %v2267, 2
      %v2283 = vpop.permute.xlu0 %2282
      %2285 = vst.msk [vmem:[#allocation2 + $0x20] sm:$0xff] %vm2001, %v2283
      %2286 = vst.msk [vmem:[#allocation2 + $0x20] sm:$0xff] %vm2004, 0
      %2287 = vst.msk [vmem:[#allocation2 + $0x20] sm:$0xff] %vm2007, 0
      %2288 = vst.msk [vmem:[#allocation2 + $0x20] sm:$0xff] %vm2010, 0
      %2289 = vst.msk [vmem:[#allocation2 + $0x20] sm:$0xff] %vm2013, 0
      %2290 = vrot.lane.b32.xlu0 %v2267, 1
      %v2291 = vpop.permute.xlu0 %2290
      %2293 = vst.msk [vmem:[#allocation2 + $0x40] sm:$0xff] %vm2157, %v2291
      %2294 = vst.msk [vmem:[#allocation2 + $0x40] sm:$0xff] %vm2160, 0
      %2295 = vst.msk [vmem:[#allocation2 + $0x40] sm:$0xff] %vm2163, 0
      %2296 = vst.msk [vmem:[#allocation2 + $0x40] sm:$0xff] %vm2166, 0
      %2297 = vst.msk [vmem:[#allocation2 + $0x40] sm:$0xff] %vm2169, 0
      %2298 = vst.msk [vmem:[#allocation2 + $0x60] sm:$0xff] %vm1990, %v2267
      %2299 = vrot.lane.b32.xlu0 %v2267, 127
      %v2300 = vpop.permute.xlu0 %2299
      %2302 = vst.msk [vmem:[#allocation2 + $0x80] sm:$0xff] %vm2180, %v2300
      %2303 = vst.msk [vmem:[#allocation2 + $0x80] sm:$0xff] %vm2183, 0
      %2304 = vst.msk [vmem:[#allocation2 + $0x80] sm:$0xff] %vm2186, 0
      %2305 = vst.msk [vmem:[#allocation2 + $0x80] sm:$0xff] %vm2189, 0
      %2306 = vst.msk [vmem:[#allocation2 + $0x80] sm:$0xff] %vm2192, 0
      %2307 = vrot.lane.b32.xlu0 %v2267, 126
      %v2308 = vpop.permute.xlu0 %2307
      %2310 = vst.msk [vmem:[#allocation2 + $0xa0] sm:$0xff] %vm2024, %v2308
      %2311 = vst.msk [vmem:[#allocation2 + $0xa0] sm:$0xff] %vm2027, 0
      %2312 = vst.msk [vmem:[#allocation2 + $0xa0] sm:$0xff] %vm2030, 0
      %2313 = vst.msk [vmem:[#allocation2 + $0xa0] sm:$0xff] %vm2033, 0
      %2314 = vst.msk [vmem:[#allocation2 + $0xa0] sm:$0xff] %vm2036, 0
      %2315 = vrot.lane.b32.xlu0 %v2267, 125
      %v2316 = vpop.permute.xlu0 %2315
      %vm2318 = vcmask 105472
      %2319 = vst.msk [vmem:[#allocation2 + $0xc0] sm:$0xff] %vm2318, %v2316
      %vm2320 = vcmask 31752
      %2321 = vst.msk [vmem:[#allocation2 + $0xc0] sm:$0xff] %vm2320, 0
      %vm2322 = vcmask 64552
      %2323 = vst.msk [vmem:[#allocation2 + $0xc0] sm:$0xff] %vm2322, 0
      %vm2324 = vcmask 97352
      %2325 = vst.msk [vmem:[#allocation2 + $0xc0] sm:$0xff] %vm2324, 0
      %vm2326 = vcmask 130152
      %2327 = vst.msk [vmem:[#allocation2 + $0xc0] sm:$0xff] %vm2326, 0
      %v2328 = vld [vmem:[%s8] sm:$0xf]
      %v2329 = vld [vmem:[%s8 + $0x4] sm:$0xf]
      %v2330 = vld [vmem:[#allocation2] sm:$0xff]
      %v2331 = vld [vmem:[#allocation2 + $0x20] sm:$0xff]
      %v2332 = vld [vmem:[#allocation2 + $0x40] sm:$0xff]
      %v2333 = vld [vmem:[#allocation2 + $0x60] sm:$0xff]
      %v2334 = vld [vmem:[#allocation2 + $0x80] sm:$0xff]
      %v2335 = vld [vmem:[#allocation2 + $0xa0] sm:$0xff]
      %v2336 = vld [vmem:[#allocation2 + $0xc0] sm:$0xff]
      %2338 = vset.pattern.permute.xlu0 0
      %2339 = vperm.xlu0 %2338, %v2265
      %v2340 = vpop.permute.xlu0 %2339
      %2343 = vset.pattern.permute.xlu0 0
      %2344 = vperm.xlu0 %2343, %v2266
      %v2345 = vpop.permute.xlu0 %2344
      %v2349 = vunpack.c.l.b16 %v2328
      %v2350 = vunpack.c.l.b16 %v2329
      %v2351 = vpack.c.b16 %v2350, %v2349
      %vm2352 = vcmask 916480
      %v2354 = vsel %vm2352, %v2351, 0
      %2356 = vmatprep.subr.bf16.mxu0 0
      %2357 = vmatpush1.bf16.msra.mxu0 %v2330
      %2358 = vmatprep.subr.bf16.mxu0 0
      %2359 = vmatpush1.bf16.msra.mxu0 %v2331
      %2360 = vmatprep.subr.bf16.mxu0 0
      %2361 = vmatpush1.bf16.msra.mxu0 %v2332
      %2362 = vmatprep.subr.bf16.mxu0 0
      %2363 = vmatpush1.bf16.msra.mxu0 %v2333
      %2364 = vmatprep.subr.bf16.mxu0 0
      %2365 = vmatpush1.bf16.msra.mxu0 %v2334
      %2366 = vmatprep.subr.bf16.mxu0 0
      %2367 = vmatpush1.bf16.msra.mxu0 %v2335
      %2368 = vmatprep.subr.bf16.mxu0 0
      %2369 = vmatpush1.bf16.msra.mxu0 %v2336
      %2370 = vmatprep.subr.bf16.mxu0 0
      %2371 = vmatpush1.bf16.msra.mxu0 0
      %2372 = vmatprep.subr.bf16.mxu0 0
      %2373 = vmatpush1.bf16.msra.mxu0 0
      %2374 = vmatprep.subr.bf16.mxu0 0
      %2375 = vmatpush1.bf16.msra.mxu0 0
      %2376 = vmatprep.subr.bf16.mxu0 0
      %2377 = vmatpush1.bf16.msra.mxu0 0
      %2378 = vmatprep.subr.bf16.mxu0 0
      %2379 = vmatpush1.bf16.msra.mxu0 0
      %2380 = vmatprep.subr.bf16.mxu0 0
      %2381 = vmatpush1.bf16.msra.mxu0 0
      %2382 = vmatprep.subr.bf16.mxu0 0
      %2383 = vmatpush1.bf16.msra.mxu0 0
      %2384 = vmatprep.subr.bf16.mxu0 0
      %2385 = vmatpush1.bf16.msra.mxu0 0
      %2386 = vmatprep.subr.bf16.mxu0 0
      %2387 = vmatpush1.bf16.msra.mxu0 0
      %2388 = vmatprep.mubr.bf16.mxu0 0
      %2389 = vmatmul.mubr.bf16.gmra.mrb[0].mxu0 %v2354
      %v2390 = vpop.f32.mrb[0].mxu0
      %v2391 = vadd.f32 %v2340, %v2390
      %v2392 = vpop.f32.mrb[0].mxu0
      %v2393 = vpop.f32.mrb[0].mxu0
      %v2394 = vadd.f32 %v2345, %v2393
      %v2395 = vpop.f32.mrb[0].mxu0
      %2396 = vdwg.mxu0
      %v2397 = vmax.f32 %v2391, 0.0
      %v2398 = vmax.f32 %v2394, 0.0
      %v2399 = vld [vmem:[%s10 + $0x98] sm:$0xff]
      %v2400 = vld [vmem:[%s10 + $0xa0] sm:$0xff]
      %v2401 = vld [vmem:[%s10 + $0xa8] sm:$0xff]
      %v2402 = vld [vmem:[%s10 + $0xb0] sm:$0xff]
      %v2403 = vpack.c.bf16 %v2398, %v2397
      %2405 = vrot.lane.b32.xlu0 %v2403, 1
      %v2406 = vpop.permute.xlu0 %2405
      %2408 = vst.msk [vmem:[#allocation2] sm:$0xff] %vm2157, %v2406
      %2409 = vst.msk [vmem:[#allocation2] sm:$0xff] %vm2160, 0
      %2410 = vst.msk [vmem:[#allocation2] sm:$0xff] %vm2163, 0
      %2411 = vst.msk [vmem:[#allocation2] sm:$0xff] %vm2166, 0
      %2412 = vst.msk [vmem:[#allocation2] sm:$0xff] %vm2169, 0
      %2413 = vst.msk [vmem:[#allocation2 + $0x20] sm:$0xff] %vm1990, %v2403
      %2414 = vrot.lane.b32.xlu0 %v2403, 127
      %v2415 = vpop.permute.xlu0 %2414
      %2417 = vst.msk [vmem:[#allocation2 + $0x40] sm:$0xff] %vm2180, %v2415
      %2418 = vst.msk [vmem:[#allocation2 + $0x40] sm:$0xff] %vm2183, 0
      %2419 = vst.msk [vmem:[#allocation2 + $0x40] sm:$0xff] %vm2186, 0
      %2420 = vst.msk [vmem:[#allocation2 + $0x40] sm:$0xff] %vm2189, 0
      %2421 = vst.msk [vmem:[#allocation2 + $0x40] sm:$0xff] %vm2192, 0
      %v2422 = vld [vmem:[%s9] sm:$0xf]
      %v2423 = vld [vmem:[%s9 + $0x4] sm:$0xf]
      %v2424 = vld [vmem:[%s9 + $0x8] sm:$0xf]
      %v2425 = vld [vmem:[%s9 + $0xc] sm:$0xf]
      %v2426 = vld [vmem:[#allocation2] sm:$0xff]
      %v2427 = vld [vmem:[#allocation2 + $0x20] sm:$0xff]
      %v2428 = vld [vmem:[#allocation2 + $0x40] sm:$0xff]
      %2430 = vset.pattern.permute.xlu0 0
      %2431 = vperm.xlu0 %2430, %v2399
      %v2432 = vpop.permute.xlu0 %2431
      %2435 = vset.pattern.permute.xlu0 0
      %2436 = vperm.xlu0 %2435, %v2400
      %v2437 = vpop.permute.xlu0 %2436
      %2440 = vset.pattern.permute.xlu0 0
      %2441 = vperm.xlu0 %2440, %v2401
      %v2442 = vpop.permute.xlu0 %2441
      %2445 = vset.pattern.permute.xlu0 0
      %2446 = vperm.xlu0 %2445, %v2402
      %v2447 = vpop.permute.xlu0 %2446
      %v2453 = vunpack.c.l.b16 %v2422
      %v2454 = vunpack.c.l.b16 %v2423
      %v2455 = vunpack.c.l.b16 %v2424
      %v2456 = vunpack.c.l.b16 %v2425
      %v2457 = vpack.c.b16 %v2454, %v2453
      %v2458 = vpack.c.b16 %v2456, %v2455
      %vm2459 = vcmask 392192
      %v2461 = vsel %vm2459, %v2457, 0
      %v2464 = vsel %vm2459, %v2458, 0
      %2466 = vmatprep.subr.bf16.mxu0 0
      %2467 = vmatpush1.bf16.msra.mxu0 %v2426
      %2468 = vmatprep.subr.bf16.mxu0 0
      %2469 = vmatpush1.bf16.msra.mxu0 %v2427
      %2470 = vmatprep.subr.bf16.mxu0 0
      %2471 = vmatpush1.bf16.msra.mxu0 %v2428
      %2472 = vmatprep.subr.bf16.mxu0 0
      %2473 = vmatpush1.bf16.msra.mxu0 0
      %2474 = vmatprep.subr.bf16.mxu0 0
      %2475 = vmatpush1.bf16.msra.mxu0 0
      %2476 = vmatprep.subr.bf16.mxu0 0
      %2477 = vmatpush1.bf16.msra.mxu0 0
      %2478 = vmatprep.subr.bf16.mxu0 0
      %2479 = vmatpush1.bf16.msra.mxu0 0
      %2480 = vmatprep.subr.bf16.mxu0 0
      %2481 = vmatpush1.bf16.msra.mxu0 0
      %2482 = vmatprep.subr.bf16.mxu0 0
      %2483 = vmatpush1.bf16.msra.mxu0 0
      %2484 = vmatprep.subr.bf16.mxu0 0
      %2485 = vmatpush1.bf16.msra.mxu0 0
      %2486 = vmatprep.subr.bf16.mxu0 0
      %2487 = vmatpush1.bf16.msra.mxu0 0
      %2488 = vmatprep.subr.bf16.mxu0 0
      %2489 = vmatpush1.bf16.msra.mxu0 0
      %2490 = vmatprep.subr.bf16.mxu0 0
      %2491 = vmatpush1.bf16.msra.mxu0 0
      %2492 = vmatprep.subr.bf16.mxu0 0
      %2493 = vmatpush1.bf16.msra.mxu0 0
      %2494 = vmatprep.subr.bf16.mxu0 0
      %2495 = vmatpush1.bf16.msra.mxu0 0
      %2496 = vmatprep.subr.bf16.mxu0 0
      %2497 = vmatpush1.bf16.msra.mxu0 0
      %2498 = vmatprep.mubr.bf16.mxu0 0
      %2499 = vmatmul.mubr.bf16.gmra.mrb[0].mxu0 %v2461
      %v2500 = vpop.f32.mrb[0].mxu0
      %v2501 = vadd.f32 %v2432, %v2500
      %v2502 = vpop.f32.mrb[0].mxu0
      %v2503 = vpop.f32.mrb[0].mxu0
      %v2504 = vadd.f32 %v2437, %v2503
      %v2505 = vpop.f32.mrb[0].mxu0
      %2506 = vmatprep.mubr.bf16.mxu0 0
      %2507 = vmatmul.mubr.bf16.gmra.mrb[0].mxu0 %v2464
      %v2508 = vpop.f32.mrb[0].mxu0
      %v2509 = vadd.f32 %v2442, %v2508
      %v2510 = vpop.f32.mrb[0].mxu0
      %v2511 = vpop.f32.mrb[0].mxu0
      %v2512 = vadd.f32 %v2447, %v2511
      %v2513 = vpop.f32.mrb[0].mxu0
      %2514 = vdwg.mxu0
      %v2515 = vmax.f32 %v2501, 0.0
      %v2516 = vmax.f32 %v2504, 0.0
      %v2517 = vmax.f32 %v2509, 0.0
      %v2518 = vmax.f32 %v2512, 0.0
      %v2519 = vadd.f32 %v2515, %v2135
      %v2520 = vadd.f32 %v2516, %v2138
      %v2521 = vadd.f32 %v2517, %v2143
      %v2522 = vadd.f32 %v2518, %v2146
      %2523 = vst.msk [vmem:[%s440] sm:$0xff] %vm1990, %v2519
      %2524 = vst.msk [vmem:[%s440 + $0x8] sm:$0xff] %vm1990, %v2520
      %2525 = vst.msk [vmem:[%s440 + $0x10] sm:$0xff] %vm1990, %v2521
      %2526 = vst.msk [vmem:[%s440 + $0x18] sm:$0xff] %vm1990, %v2522
      %p2527 = scmp.lt.s32.totalorder %s24, 1
      %s2528 = scalar_select %p2527, %s24, 1
      %s2529 = smul.addr %s2528, 4
      %s2530 = smul.addr %s2529, 8
      %s2531 = scalar_lea.vmem %s13, %s2530
      // Predicated region
      $region73: #{tpu_custom_call.1} parent=71 // pred_check
        %p2532 = pneg %p320
      $region74: #{tpu_custom_call.1} parent=71 // pred_check_branch
        %2534 = sbr.rel (%p2532) target = $region76
      $region75: #{tpu_custom_call.1} parent=71 // pred_region
        _
      $region76: #{tpu_custom_call.1} parent=71 // pred_fallthru
        _
    $region72: #{tpu_custom_call.1} parent=5 // pred_fallthru
      _
    %p2535 = scmp.le.s32.totalorder 2, %s19
    // Predicated region
    $region77: #{tpu_custom_call.1} parent=5 // pred_check
      %p2536 = pneg %p2535
    $region78: #{tpu_custom_call.1} parent=5 // pred_check_branch
      %2538 = sbr.rel (%p2536) target = $region80
    $region79: #{tpu_custom_call.1} parent=5 // pred_region
      %s2539 = ssub.s32 %s19, 2
      // Predicated region
      $region81: #{tpu_custom_call.1} parent=79 // pred_check
        %p2540 = pneg %p326
      $region82: #{tpu_custom_call.1} parent=79 // pred_check_branch
        %2542 = sbr.rel (%p2540) target = $region84
      $region83: #{tpu_custom_call.1} parent=79 // pred_region
        %p2543 = scmp.lt.s32.totalorder %s25, 1
        %s2544 = scalar_select %p2543, %s25, 1
        %s2545 = smul.addr %s2544, 4
        %s2546 = smul.addr %s2545, 8
        %s2547 = scalar_lea.vmem %s13, %s2546
      $region84: #{tpu_custom_call.1} parent=79 // pred_fallthru
        _
    $region80: #{tpu_custom_call.1} parent=5 // pred_fallthru
      _
  $region6: #{tpu_custom_call.1} parent=0 // loop_footer
    %s23 = sadd.s32 1, %s19
  $region7: #{tpu_custom_call.1} parent=0 // loop_footer_branch
    %18 = sbr.rel target = $region3
  $region8: #{tpu_custom_call.1} parent=0 // loop_exit
    _

</llo_original>
